<compile_context>
chip_gen: v6e
topology: v6e:2x2x1
jax: 0.10.0
libtpu: 0.0.40
codegen_flags: <defaults>
</compile_context>

<pallas_src>
import jax
import jax.numpy as jnp
from jax.experimental import pallas as pl
from jax.experimental.pallas import tpu as pltpu

EMB_IN = 600            # cove output features (input to lin_0)
EMB = 300               # lin_0 output / conv kernel width
CO = 128                # conv output channels
KERNELS = (1, 2, 3, 5)
MAX_K = max(KERNELS)
NSLICE = sum(KERNELS)   # 11 packed conv weight slices
NCLASS = 6

_TARGET_ROWS = 2048                 # rows (tb * L_pad) folded into the MXU M dim per step
_VMEM_LIMIT = 48 * 1024 * 1024      # fits v7x's 64 MiB/TC with headroom; fine on v5e/v6e


def _round_up(a, m):
    return ((a + m - 1) // m) * m


def _shift_layout():
    """Column layout of the fused conv-weight matrix, grouped by time shift.

    Returns, per shift i, a list of (kernel_index_j, col_start) so that all
    slices sharing the same shift are lane-contiguous and the whole group can
    be aligned with ONE pltpu.roll (4 wide rolls total instead of 7 narrow).
    """
    layout, col = [], 0
    for i in range(MAX_K):
        members = []
        for j, k in enumerate(KERNELS):
            if i < k:
                members.append((j, col))
                col += CO
        layout.append(members)
    return layout


_LAYOUT = _shift_layout()


def _choose_tiling(B, L):
    """Pick (tb, L_pad, steps): batch rows per grid step, padded seq len, grid size."""
    L8 = _round_up(L, 8)
    if B * L8 <= _TARGET_ROWS:
        # Single grid step: every block equals the full array -> no tiling constraint,
        # and L_pad % 8 == 0 keeps the f32 max-pool reshape layout-trivial.
        return B, L8, 1
    # Multi-step: the bf16 x block is (tb*L_pad, 600); pad L to a multiple of 16 so
    # the block sublane dim is tile-aligned for ANY tb (no 8-row clamp on tb needed).
    L_pad = _round_up(L, 16)
    # TODO(synk): for L_pad > _TARGET_ROWS (very long sequences) a single batch row
    # already exceeds the row budget; tiling over time as well is not implemented.
    tb = max(1, min(B, _TARGET_ROWS // L_pad))
    steps = pl.cdiv(B, tb)
    if steps % 2:
        # v7x shards "parallel" grid steps over 2 TensorCores: prefer an even step
        # count.  Try shrinking tb first; otherwise pad the batch by a dummy step.
        tb_alt = pl.cdiv(B, steps + 1)
        if pl.cdiv(B, tb_alt) % 2 == 0:
            tb, steps = tb_alt, pl.cdiv(B, tb_alt)
        else:
            steps += 1
    return tb, L_pad, steps


# TODO(synk): the CoVe sentence encoder (self.cove_embedding.encode) is an external
# pretrained model with no Pallas equivalent; the kernel consumes its per-token
# embedding output (B, L, 600) directly.  dropout(p=0.1) is identity at inference.
def _make_kernel(L, L_pad, tb):
    rows = tb * L_pad

    def kernel(x_ref, w0_ref, b0_ref, wc_ref, bc_ref, wl_ref, bl_ref, out_ref):
        # lin_0 + ReLU: batch*time folded into the MXU M dimension (bf16 in, f32 acc).
        h = jnp.dot(x_ref[...], w0_ref[...],
                    preferred_element_type=jnp.float32) + b0_ref[...]
        h = jnp.maximum(h, 0.0).astype(jnp.bfloat16)                       # (rows, 300)

        # All 11 conv weight slices fused into one lane-dense matmul.
        s = jnp.dot(h, wc_ref[...], preferred_element_type=jnp.float32)   # (rows, 1408)

        # Shift-0 contributions need no alignment (128-lane-aligned views of s).
        accs = [None] * len(KERNELS)
        for j, c in _LAYOUT[0]:
            accs[j] = s[:, c:c + CO]
        # One wide sublane roll (XLU) per shift group aligns result[r] = blk[r + i].
        for i in range(1, MAX_K):
            members = _LAYOUT[i]
            if not members:
                continue
            g0 = members[0][1]
            g1 = members[-1][1] + CO
            rolled = pltpu.roll(s[:, g0:g1], shift=rows - i, axis=0)
            for j, c in members:
                accs[j] = accs[j] + rolled[:, c - g0:c - g0 + CO]

        # Time index of each row within its (padded) sequence.
        t = jax.lax.broadcasted_iota(jnp.int32, (rows, 1), 0) % L_pad

        logits = jnp.zeros((tb, NCLASS), jnp.float32)
        for j, k in enumerate(KERNELS):
            a = jnp.maximum(accs[j] + bc_ref[:, j * CO:(j + 1) * CO], 0.0)  # bias + ReLU
            # Mask windows past the ORIGINAL sequence end (closed over as a Python
            # constant): this also kills padded rows, roll wrap-around and
            # cross-batch rows.  Post-ReLU values are >= 0, so 0 is safe for max.
            a = jnp.where(t < (L - k + 1), a, 0.0)
            # L_pad % 8 == 0 -> layout-trivial reshape; max_pool1d over time.
            feat = jnp.max(a.reshape(tb, L_pad, CO), axis=1)
            # lin(512->6) as per-conv-block partial dots (no lane-axis concat).
            logits = logits + jnp.dot(feat, wl_ref[j],
                                      preferred_element_type=jnp.float32)

        out_ref[...] = jax.nn.sigmoid(logits + bl_ref[...])[None]

    return kernel


def textcnn_forward(x, params):
    """x: (B, L, 600) float32; returns (B, 6) float32."""
    w0, b0, wcs, bcs, wl, bl = params
    B, L, _ = x.shape
    assert L >= MAX_K, "sequence length must cover the largest conv kernel"

    tb, L_pad, steps = _choose_tiling(B, L)
    b_pad = tb * steps
    rows = tb * L_pad

    # Pre-pad / pre-flatten in the wrapper so in-kernel views are layout-trivial.
    xb = x.astype(jnp.bfloat16)
    if b_pad != B or L_pad != L:
        xb = jnp.pad(xb, ((0, b_pad - B), (0, L_pad - L), (0, 0)))
    xb = xb.reshape(b_pad * L_pad, EMB_IN)

    w0b = w0.astype(jnp.bfloat16)
    # Pack conv weight slices grouped by time shift (lane-contiguous per shift).
    w_wide = jnp.concatenate(
        [wcs[j][i] for i, members in enumerate(_LAYOUT) for (j, _) in members],
        axis=1).astype(jnp.bfloat16)                         # (300, 1408)
    b_conv = jnp.concatenate(list(bcs), axis=1)              # (1, 512) f32
    wl_split = wl.reshape(len(KERNELS), CO, NCLASS)          # (4, 128, 6) f32

    out = pl.pallas_call(
        _make_kernel(L, L_pad, tb),
        out_shape=jax.ShapeDtypeStruct((steps, tb, NCLASS), jnp.float32),
        grid_spec=pltpu.PrefetchScalarGridSpec(
            num_scalar_prefetch=0,
            grid=(steps,),
            in_specs=[
                pl.BlockSpec((rows, EMB_IN), lambda b: (b, 0)),              # x rows
                pl.BlockSpec((EMB_IN, EMB), lambda b: (0, 0)),               # lin_0 W
                pl.BlockSpec((1, EMB), lambda b: (0, 0)),                    # lin_0 b
                pl.BlockSpec((EMB, NSLICE * CO), lambda b: (0, 0)),          # fused conv W
                pl.BlockSpec((1, len(KERNELS) * CO), lambda b: (0, 0)),      # conv biases
                pl.BlockSpec((len(KERNELS), CO, NCLASS), lambda b: (0, 0, 0)),  # lin W
                pl.BlockSpec((1, NCLASS), lambda b: (0, 0)),                 # lin b
            ],
            out_specs=pl.BlockSpec((1, tb, NCLASS), lambda b: (b, 0, 0)),
        ),
        compiler_params=pltpu.CompilerParams(
            dimension_semantics=("parallel",),
            vmem_limit_bytes=_VMEM_LIMIT,
        ),
    )(xb, w0b, b0, w_wide, b_conv, wl_split, bl)
    return out.reshape(b_pad, NCLASS)[:B]


def _reference(x, params):
    w0, b0, wcs, bcs, wl, bl = params
    h = jax.nn.relu(jnp.einsum('bld,de->ble', x, w0) + b0)
    feats = []
    for k, wc, bc in zip(KERNELS, wcs, bcs):
        Lo = x.shape[1] - k + 1
        acc = jnp.zeros((x.shape[0], Lo, CO), jnp.float32)
        for i in range(k):
            acc = acc + jnp.einsum('bld,dc->blc', h[:, i:i + Lo, :], wc[i])
        acc = jax.nn.relu(acc + bc)
        feats.append(jnp.max(acc, axis=1))
    feat = jnp.concatenate(feats, axis=1)
    return jax.nn.sigmoid(feat @ wl + bl)


def _make_params(key):
    keys = jax.random.split(key, 2 + 2 * len(KERNELS) + 2)
    s = 0.05
    w0 = jax.random.normal(keys[0], (EMB_IN, EMB), jnp.float32) * s
    b0 = jax.random.normal(keys[1], (1, EMB), jnp.float32) * s
    wcs, bcs = [], []
    for i, k in enumerate(KERNELS):
        wcs.append(jax.random.normal(keys[2 + 2 * i], (k, EMB, CO), jnp.float32) * s)
        bcs.append(jax.random.normal(keys[3 + 2 * i], (1, CO), jnp.float32) * s)
    wl = jax.random.normal(keys[-2], (CO * len(KERNELS), NCLASS), jnp.float32) * s
    bl = jax.random.normal(keys[-1], (1, NCLASS), jnp.float32) * s
    return w0, b0, wcs, bcs, wl, bl


if __name__ == "__main__":
    key = jax.random.PRNGKey(0)
    kx, kx2, kp = jax.random.split(key, 3)
    params = _make_params(kp)

    # Small case (single grid step): batch=2, seq_len=8.
    B, L = 2, 8
    x = jax.random.normal(kx, (B, L, EMB_IN), jnp.float32)
    out = jax.block_until_ready(textcnn_forward(x, params))
    ref = _reference(x, params)
    assert out.shape == (B, NCLASS)
    # Kernel uses bf16 matmul operands (f32 accumulation) -> loose tolerance.
    assert jnp.allclose(out, ref, atol=2e-2, rtol=2e-2), "mismatch vs reference (small)"

    # Moderate case exercising the multi-step / padded (batch & time) tiling path.
    B2, L2 = 40, 60
    x2 = jax.random.normal(kx2, (B2, L2, EMB_IN), jnp.float32)
    out2 = jax.block_until_ready(textcnn_forward(x2, params))
    ref2 = _reference(x2, params)
    assert out2.shape == (B2, NCLASS)
    assert jnp.allclose(out2, ref2, atol=3e-2, rtol=3e-2), "mismatch vs reference (tiled)"

    print("KERNEL_OK")
</pallas_src>

<mosaic_0001>
module attributes {stable_mosaic.version = 11 : i64} {
  func.func @kernel(%arg0: i32, %arg1: memref<16x600xbf16, #tpu.memory_space<vmem>>, %arg2: memref<600x300xbf16, #tpu.memory_space<vmem>>, %arg3: memref<1x300xf32, #tpu.memory_space<vmem>>, %arg4: memref<300x1408xbf16, #tpu.memory_space<vmem>>, %arg5: memref<1x512xf32, #tpu.memory_space<vmem>>, %arg6: memref<4x128x6xf32, #tpu.memory_space<vmem>>, %arg7: memref<1x6xf32, #tpu.memory_space<vmem>>, %arg8: memref<1x2x6xf32, #tpu.memory_space<vmem>>) attributes {dimension_semantics = [#tpu.dimension_semantics<parallel>], iteration_bounds = array<i64: 1>, scalar_prefetch = 0 : i64, scratch_operands = 0 : i64, tpu.core_type = #tpu.core_type<tc>, window_params = [{transform_indices = @transform_0, window_bounds = array<i64: 16, 600>}, {pipeline_mode = #tpu.pipeline_mode<synchronous>, transform_indices = @transform_1, window_bounds = array<i64: 600, 300>}, {pipeline_mode = #tpu.pipeline_mode<synchronous>, transform_indices = @transform_2, window_bounds = array<i64: 1, 300>}, {pipeline_mode = #tpu.pipeline_mode<synchronous>, transform_indices = @transform_3, window_bounds = array<i64: 300, 1408>}, {pipeline_mode = #tpu.pipeline_mode<synchronous>, transform_indices = @transform_4, window_bounds = array<i64: 1, 512>}, {pipeline_mode = #tpu.pipeline_mode<synchronous>, transform_indices = @transform_5, window_bounds = array<i64: 4, 128, 6>}, {pipeline_mode = #tpu.pipeline_mode<synchronous>, transform_indices = @transform_6, window_bounds = array<i64: 1, 6>}, {transform_indices = @transform_7, window_bounds = array<i64: 1, 2, 6>}]} {
    %c0 = arith.constant 0 : index
    %c0_0 = arith.constant 0 : index
    %0 = vector.load %arg1[%c0, %c0_0] : memref<16x600xbf16, #tpu.memory_space<vmem>>, vector<16x600xbf16>
    %c0_1 = arith.constant 0 : index
    %c0_2 = arith.constant 0 : index
    %1 = vector.load %arg2[%c0_1, %c0_2] : memref<600x300xbf16, #tpu.memory_space<vmem>>, vector<600x300xbf16>
    %cst = arith.constant dense<0.000000e+00> : vector<16x300xf32>
    %2 = tpu.matmul %0, %1, %cst {dimension_numbers = #tpu.dot_dimension_numbers<[1], [0], [0], [1], [0, 0, 1, 1], [], []>} : vector<16x600xbf16>, vector<600x300xbf16>, vector<16x300xf32> -> vector<16x300xf32>
    %c0_3 = arith.constant 0 : index
    %c0_4 = arith.constant 0 : index
    %3 = vector.load %arg3[%c0_3, %c0_4] : memref<1x300xf32, #tpu.memory_space<vmem>>, vector<1x300xf32>
    %4 = vector.broadcast %3 : vector<1x300xf32> to vector<16x300xf32>
    %5 = arith.addf %2, %4 : vector<16x300xf32>
    %cst_5 = arith.constant 0.000000e+00 : f32
    %6 = vector.broadcast %cst_5 : f32 to vector<16x300xf32>
    %7 = arith.maximumf %5, %6 : vector<16x300xf32>
    %8 = arith.truncf %7 : vector<16x300xf32> to vector<16x300xbf16>
    %c0_6 = arith.constant 0 : index
    %c0_7 = arith.constant 0 : index
    %9 = vector.load %arg4[%c0_6, %c0_7] : memref<300x1408xbf16, #tpu.memory_space<vmem>>, vector<300x1408xbf16>
    %cst_8 = arith.constant dense<0.000000e+00> : vector<16x1408xf32>
    %10 = tpu.matmul %8, %9, %cst_8 {dimension_numbers = #tpu.dot_dimension_numbers<[1], [0], [0], [1], [0, 0, 1, 1], [], []>} : vector<16x300xbf16>, vector<300x1408xbf16>, vector<16x1408xf32> -> vector<16x1408xf32>
    %11 = vector.extract_strided_slice %10 {offsets = [0, 0], sizes = [16, 128], strides = [1, 1]} : vector<16x1408xf32> to vector<16x128xf32>
    %12 = vector.extract_strided_slice %10 {offsets = [0, 128], sizes = [16, 128], strides = [1, 1]} : vector<16x1408xf32> to vector<16x128xf32>
    %13 = vector.extract_strided_slice %10 {offsets = [0, 256], sizes = [16, 128], strides = [1, 1]} : vector<16x1408xf32> to vector<16x128xf32>
    %14 = vector.extract_strided_slice %10 {offsets = [0, 384], sizes = [16, 128], strides = [1, 1]} : vector<16x1408xf32> to vector<16x128xf32>
    %15 = vector.extract_strided_slice %10 {offsets = [0, 512], sizes = [16, 384], strides = [1, 1]} : vector<16x1408xf32> to vector<16x384xf32>
    %c15_i32 = arith.constant 15 : i32
    %16 = tpu.dynamic_rotate %15 by %c15_i32 dim 0 : vector<16x384xf32>, i32 -> vector<16x384xf32>
    %17 = vector.extract_strided_slice %16 {offsets = [0, 0], sizes = [16, 128], strides = [1, 1]} : vector<16x384xf32> to vector<16x128xf32>
    %18 = arith.addf %12, %17 : vector<16x128xf32>
    %19 = vector.extract_strided_slice %16 {offsets = [0, 128], sizes = [16, 128], strides = [1, 1]} : vector<16x384xf32> to vector<16x128xf32>
    %20 = arith.addf %13, %19 : vector<16x128xf32>
    %21 = vector.extract_strided_slice %16 {offsets = [0, 256], sizes = [16, 128], strides = [1, 1]} : vector<16x384xf32> to vector<16x128xf32>
    %22 = arith.addf %14, %21 : vector<16x128xf32>
    %23 = vector.extract_strided_slice %10 {offsets = [0, 896], sizes = [16, 256], strides = [1, 1]} : vector<16x1408xf32> to vector<16x256xf32>
    %c14_i32 = arith.constant 14 : i32
    %24 = tpu.dynamic_rotate %23 by %c14_i32 dim 0 : vector<16x256xf32>, i32 -> vector<16x256xf32>
    %25 = vector.extract_strided_slice %24 {offsets = [0, 0], sizes = [16, 128], strides = [1, 1]} : vector<16x256xf32> to vector<16x128xf32>
    %26 = arith.addf %20, %25 : vector<16x128xf32>
    %27 = vector.extract_strided_slice %24 {offsets = [0, 128], sizes = [16, 128], strides = [1, 1]} : vector<16x256xf32> to vector<16x128xf32>
    %28 = arith.addf %22, %27 : vector<16x128xf32>
    %29 = vector.extract_strided_slice %10 {offsets = [0, 1152], sizes = [16, 128], strides = [1, 1]} : vector<16x1408xf32> to vector<16x128xf32>
    %c13_i32 = arith.constant 13 : i32
    %30 = tpu.dynamic_rotate %29 by %c13_i32 dim 0 : vector<16x128xf32>, i32 -> vector<16x128xf32>
    %31 = arith.addf %28, %30 : vector<16x128xf32>
    %32 = vector.extract_strided_slice %10 {offsets = [0, 1280], sizes = [16, 128], strides = [1, 1]} : vector<16x1408xf32> to vector<16x128xf32>
    %c12_i32 = arith.constant 12 : i32
    %33 = tpu.dynamic_rotate %32 by %c12_i32 dim 0 : vector<16x128xf32>, i32 -> vector<16x128xf32>
    %34 = arith.addf %31, %33 : vector<16x128xf32>
    %35 = tpu.iota {dimensions = array<i32: 0>} : vector<16x1xi32>
    %c8_i32 = arith.constant 8 : i32
    %c0_i32 = arith.constant 0 : i32
    %36 = arith.cmpi eq, %c8_i32, %c0_i32 : i32
    %c1_i32 = arith.constant 1 : i32
    %37 = arith.select %36, %c1_i32, %c8_i32 : i32
    %38 = vector.broadcast %37 : i32 to vector<16x1xi32>
    %39 = arith.remsi %35, %38 : vector<16x1xi32>
    %c0_i32_9 = arith.constant 0 : i32
    %40 = vector.broadcast %c0_i32_9 : i32 to vector<16x1xi32>
    %41 = arith.cmpi ne, %39, %40 : vector<16x1xi32>
    %c0_i32_10 = arith.constant 0 : i32
    %42 = vector.broadcast %c0_i32_10 : i32 to vector<16x1xi32>
    %43 = arith.cmpi slt, %39, %42 : vector<16x1xi32>
    %c0_i32_11 = arith.constant 0 : i32
    %44 = arith.cmpi slt, %37, %c0_i32_11 : i32
    %45 = vector.broadcast %44 : i1 to vector<16x1xi1>
    %46 = vector.broadcast %45 : vector<16x1xi1> to vector<16x1xi1>
    %47 = arith.xori %43, %46 : vector<16x1xi1>
    %48 = arith.andi %47, %41 : vector<16x1xi1>
    %49 = vector.broadcast %37 : i32 to vector<16x1xi32>
    %50 = arith.addi %39, %49 : vector<16x1xi32>
    %51 = arith.select %48, %50, %39 : vector<16x1xi1>, vector<16x1xi32>
    %cst_12 = arith.constant 0.000000e+00 : f32
    %52 = vector.broadcast %cst_12 : f32 to vector<2x6xf32>
    %c0_13 = arith.constant 0 : index
    %c0_14 = arith.constant 0 : index
    %53 = vector.load %arg5[%c0_13, %c0_14] : memref<1x512xf32, #tpu.memory_space<vmem>>, vector<1x128xf32>
    %54 = vector.broadcast %53 : vector<1x128xf32> to vector<16x128xf32>
    %55 = arith.addf %11, %54 : vector<16x128xf32>
    %cst_15 = arith.constant 0.000000e+00 : f32
    %56 = vector.broadcast %cst_15 : f32 to vector<16x128xf32>
    %57 = arith.maximumf %55, %56 : vector<16x128xf32>
    %c8_i32_16 = arith.constant 8 : i32
    %58 = vector.broadcast %c8_i32_16 : i32 to vector<16x1xi32>
    %59 = arith.cmpi slt, %51, %58 : vector<16x1xi32>
    %cst_17 = arith.constant 0.000000e+00 : f32
    %60 = vector.shape_cast %59 : vector<16x1xi1> to vector<16x1xi1>
    %61 = vector.broadcast %60 : vector<16x1xi1> to vector<16x128xi1>
    %62 = vector.broadcast %cst_17 : f32 to vector<16x128xf32>
    %63 = arith.select %61, %57, %62 : vector<16x128xi1>, vector<16x128xf32>
    %64 = vector.shape_cast %63 : vector<16x128xf32> to vector<2x8x128xf32>
    %cst_18 = arith.constant dense<0xFF800000> : vector<2x128xf32>
    %65 = vector.multi_reduction <maximumf>, %64, %cst_18 [1] : vector<2x8x128xf32> to vector<2x128xf32>
    %c0_19 = arith.constant 0 : index
    %c0_20 = arith.constant 0 : index
    %c0_21 = arith.constant 0 : index
    %66 = vector.load %arg6[%c0_19, %c0_20, %c0_21] : memref<4x128x6xf32, #tpu.memory_space<vmem>>, vector<1x128x6xf32>
    %67 = vector.shape_cast %66 : vector<1x128x6xf32> to vector<128x6xf32>
    %cst_22 = arith.constant dense<0.000000e+00> : vector<2x6xf32>
    %68 = tpu.matmul %65, %67, %cst_22 {dimension_numbers = #tpu.dot_dimension_numbers<[1], [0], [0], [1], [0, 0, 1, 1], [], []>} : vector<2x128xf32>, vector<128x6xf32>, vector<2x6xf32> -> vector<2x6xf32>
    %69 = arith.addf %52, %68 : vector<2x6xf32>
    %c0_23 = arith.constant 0 : index
    %c128 = arith.constant 128 : index
    %70 = vector.load %arg5[%c0_23, %c128] : memref<1x512xf32, #tpu.memory_space<vmem>>, vector<1x128xf32>
    %71 = vector.broadcast %70 : vector<1x128xf32> to vector<16x128xf32>
    %72 = arith.addf %18, %71 : vector<16x128xf32>
    %cst_24 = arith.constant 0.000000e+00 : f32
    %73 = vector.broadcast %cst_24 : f32 to vector<16x128xf32>
    %74 = arith.maximumf %72, %73 : vector<16x128xf32>
    %c7_i32 = arith.constant 7 : i32
    %75 = vector.broadcast %c7_i32 : i32 to vector<16x1xi32>
    %76 = arith.cmpi slt, %51, %75 : vector<16x1xi32>
    %cst_25 = arith.constant 0.000000e+00 : f32
    %77 = vector.shape_cast %76 : vector<16x1xi1> to vector<16x1xi1>
    %78 = vector.broadcast %77 : vector<16x1xi1> to vector<16x128xi1>
    %79 = vector.broadcast %cst_25 : f32 to vector<16x128xf32>
    %80 = arith.select %78, %74, %79 : vector<16x128xi1>, vector<16x128xf32>
    %81 = vector.shape_cast %80 : vector<16x128xf32> to vector<2x8x128xf32>
    %cst_26 = arith.constant dense<0xFF800000> : vector<2x128xf32>
    %82 = vector.multi_reduction <maximumf>, %81, %cst_26 [1] : vector<2x8x128xf32> to vector<2x128xf32>
    %c1 = arith.constant 1 : index
    %c0_27 = arith.constant 0 : index
    %c0_28 = arith.constant 0 : index
    %83 = vector.load %arg6[%c1, %c0_27, %c0_28] : memref<4x128x6xf32, #tpu.memory_space<vmem>>, vector<1x128x6xf32>
    %84 = vector.shape_cast %83 : vector<1x128x6xf32> to vector<128x6xf32>
    %cst_29 = arith.constant dense<0.000000e+00> : vector<2x6xf32>
    %85 = tpu.matmul %82, %84, %cst_29 {dimension_numbers = #tpu.dot_dimension_numbers<[1], [0], [0], [1], [0, 0, 1, 1], [], []>} : vector<2x128xf32>, vector<128x6xf32>, vector<2x6xf32> -> vector<2x6xf32>
    %86 = arith.addf %69, %85 : vector<2x6xf32>
    %c0_30 = arith.constant 0 : index
    %c256 = arith.constant 256 : index
    %87 = vector.load %arg5[%c0_30, %c256] : memref<1x512xf32, #tpu.memory_space<vmem>>, vector<1x128xf32>
    %88 = vector.broadcast %87 : vector<1x128xf32> to vector<16x128xf32>
    %89 = arith.addf %26, %88 : vector<16x128xf32>
    %cst_31 = arith.constant 0.000000e+00 : f32
    %90 = vector.broadcast %cst_31 : f32 to vector<16x128xf32>
    %91 = arith.maximumf %89, %90 : vector<16x128xf32>
    %c6_i32 = arith.constant 6 : i32
    %92 = vector.broadcast %c6_i32 : i32 to vector<16x1xi32>
    %93 = arith.cmpi slt, %51, %92 : vector<16x1xi32>
    %cst_32 = arith.constant 0.000000e+00 : f32
    %94 = vector.shape_cast %93 : vector<16x1xi1> to vector<16x1xi1>
    %95 = vector.broadcast %94 : vector<16x1xi1> to vector<16x128xi1>
    %96 = vector.broadcast %cst_32 : f32 to vector<16x128xf32>
    %97 = arith.select %95, %91, %96 : vector<16x128xi1>, vector<16x128xf32>
    %98 = vector.shape_cast %97 : vector<16x128xf32> to vector<2x8x128xf32>
    %cst_33 = arith.constant dense<0xFF800000> : vector<2x128xf32>
    %99 = vector.multi_reduction <maximumf>, %98, %cst_33 [1] : vector<2x8x128xf32> to vector<2x128xf32>
    %c2 = arith.constant 2 : index
    %c0_34 = arith.constant 0 : index
    %c0_35 = arith.constant 0 : index
    %100 = vector.load %arg6[%c2, %c0_34, %c0_35] : memref<4x128x6xf32, #tpu.memory_space<vmem>>, vector<1x128x6xf32>
    %101 = vector.shape_cast %100 : vector<1x128x6xf32> to vector<128x6xf32>
    %cst_36 = arith.constant dense<0.000000e+00> : vector<2x6xf32>
    %102 = tpu.matmul %99, %101, %cst_36 {dimension_numbers = #tpu.dot_dimension_numbers<[1], [0], [0], [1], [0, 0, 1, 1], [], []>} : vector<2x128xf32>, vector<128x6xf32>, vector<2x6xf32> -> vector<2x6xf32>
    %103 = arith.addf %86, %102 : vector<2x6xf32>
    %c0_37 = arith.constant 0 : index
    %c384 = arith.constant 384 : index
    %104 = vector.load %arg5[%c0_37, %c384] : memref<1x512xf32, #tpu.memory_space<vmem>>, vector<1x128xf32>
    %105 = vector.broadcast %104 : vector<1x128xf32> to vector<16x128xf32>
    %106 = arith.addf %34, %105 : vector<16x128xf32>
    %cst_38 = arith.constant 0.000000e+00 : f32
    %107 = vector.broadcast %cst_38 : f32 to vector<16x128xf32>
    %108 = arith.maximumf %106, %107 : vector<16x128xf32>
    %c4_i32 = arith.constant 4 : i32
    %109 = vector.broadcast %c4_i32 : i32 to vector<16x1xi32>
    %110 = arith.cmpi slt, %51, %109 : vector<16x1xi32>
    %cst_39 = arith.constant 0.000000e+00 : f32
    %111 = vector.shape_cast %110 : vector<16x1xi1> to vector<16x1xi1>
    %112 = vector.broadcast %111 : vector<16x1xi1> to vector<16x128xi1>
    %113 = vector.broadcast %cst_39 : f32 to vector<16x128xf32>
    %114 = arith.select %112, %108, %113 : vector<16x128xi1>, vector<16x128xf32>
    %115 = vector.shape_cast %114 : vector<16x128xf32> to vector<2x8x128xf32>
    %cst_40 = arith.constant dense<0xFF800000> : vector<2x128xf32>
    %116 = vector.multi_reduction <maximumf>, %115, %cst_40 [1] : vector<2x8x128xf32> to vector<2x128xf32>
    %c3 = arith.constant 3 : index
    %c0_41 = arith.constant 0 : index
    %c0_42 = arith.constant 0 : index
    %117 = vector.load %arg6[%c3, %c0_41, %c0_42] : memref<4x128x6xf32, #tpu.memory_space<vmem>>, vector<1x128x6xf32>
    %118 = vector.shape_cast %117 : vector<1x128x6xf32> to vector<128x6xf32>
    %cst_43 = arith.constant dense<0.000000e+00> : vector<2x6xf32>
    %119 = tpu.matmul %116, %118, %cst_43 {dimension_numbers = #tpu.dot_dimension_numbers<[1], [0], [0], [1], [0, 0, 1, 1], [], []>} : vector<2x128xf32>, vector<128x6xf32>, vector<2x6xf32> -> vector<2x6xf32>
    %120 = arith.addf %103, %119 : vector<2x6xf32>
    %c0_44 = arith.constant 0 : index
    %c0_45 = arith.constant 0 : index
    %121 = vector.load %arg7[%c0_44, %c0_45] : memref<1x6xf32, #tpu.memory_space<vmem>>, vector<1x6xf32>
    %122 = vector.broadcast %121 : vector<1x6xf32> to vector<2x6xf32>
    %123 = arith.addf %120, %122 : vector<2x6xf32>
    %124 = arith.negf %123 : vector<2x6xf32>
    %125 = math.exp %124 : vector<2x6xf32>
    %cst_46 = arith.constant 1.000000e+00 : f32
    %126 = vector.broadcast %cst_46 : f32 to vector<2x6xf32>
    %127 = arith.addf %126, %125 : vector<2x6xf32>
    %128 = arith.divf %126, %127 : vector<2x6xf32>
    %129 = vector.shape_cast %128 : vector<2x6xf32> to vector<1x2x6xf32>
    %c0_47 = arith.constant 0 : index
    %c0_48 = arith.constant 0 : index
    %c0_49 = arith.constant 0 : index
    %130 = vector.load %arg8[%c0_47, %c0_48, %c0_49] : memref<1x2x6xf32, #tpu.memory_space<vmem>>, vector<1x2x6xf32>
    tpu.vector_store %arg8[%c0_47, %c0_48, %c0_49], %129 {strides = array<i32>} : memref<1x2x6xf32, #tpu.memory_space<vmem>>, vector<1x2x6xf32>,
    return
  }
  func.func @transform_0(%arg0: i32) -> (i32, i32) {
    %c0_i32 = arith.constant 0 : i32
    %c0_i32_0 = arith.constant 0 : i32
    return %arg0, %c0_i32 : i32, i32
  }
  func.func @transform_1(%arg0: i32) -> (i32, i32) {
    %c0_i32 = arith.constant 0 : i32
    %c0_i32_0 = arith.constant 0 : i32
    %c0_i32_1 = arith.constant 0 : i32
    return %c0_i32, %c0_i32_0 : i32, i32
  }
  func.func @transform_2(%arg0: i32) -> (i32, i32) {
    %c0_i32 = arith.constant 0 : i32
    %c0_i32_0 = arith.constant 0 : i32
    %c0_i32_1 = arith.constant 0 : i32
    return %c0_i32, %c0_i32_0 : i32, i32
  }
  func.func @transform_3(%arg0: i32) -> (i32, i32) {
    %c0_i32 = arith.constant 0 : i32
    %c0_i32_0 = arith.constant 0 : i32
    %c0_i32_1 = arith.constant 0 : i32
    return %c0_i32, %c0_i32_0 : i32, i32
  }
  func.func @transform_4(%arg0: i32) -> (i32, i32) {
    %c0_i32 = arith.constant 0 : i32
    %c0_i32_0 = arith.constant 0 : i32
    %c0_i32_1 = arith.constant 0 : i32
    return %c0_i32, %c0_i32_0 : i32, i32
  }
  func.func @transform_5(%arg0: i32) -> (i32, i32, i32) {
    %c0_i32 = arith.constant 0 : i32
    %c0_i32_0 = arith.constant 0 : i32
    %c0_i32_1 = arith.constant 0 : i32
    %c0_i32_2 = arith.constant 0 : i32
    return %c0_i32, %c0_i32_0, %c0_i32_1 : i32, i32, i32
  }
  func.func @transform_6(%arg0: i32) -> (i32, i32) {
    %c0_i32 = arith.constant 0 : i32
    %c0_i32_0 = arith.constant 0 : i32
    %c0_i32_1 = arith.constant 0 : i32
    return %c0_i32, %c0_i32_0 : i32, i32
  }
  func.func @transform_7(%arg0: i32) -> (i32, i32, i32) {
    %c0_i32 = arith.constant 0 : i32
    %c0_i32_0 = arith.constant 0 : i32
    %c0_i32_1 = arith.constant 0 : i32
    return %arg0, %c0_i32, %c0_i32_0 : i32, i32, i32
  }
}

</mosaic_0001>

<llo_original>
// kernel: tpu_custom_call.1
$region0: #{tpu_custom_call.1}
  #allocation0 [shape = 'u32[]', space=smem, size = 0x4, offset = 0x4, fixed_abs, tag = 'smem constant byte address 0x4 - core index']
  #allocation1 [shape = 'u32[144,128]{1,0:T(1,128)}', space=vmem, size = 0x12000, scoped, tag = 'internal scratch']
  %s0 = inlined_call_operand.vmem [shape: bf16[16,600], index: 0, kind: input, shape index: {}]
  %s1 = inlined_call_operand.vmem [shape: bf16[600,300], index: 1, kind: input, shape index: {}]
  %s2 = inlined_call_operand.vmem [shape: f32[1,300], index: 2, kind: input, shape index: {}]
  %s3 = inlined_call_operand.vmem [shape: bf16[300,1408], index: 3, kind: input, shape index: {}]
  %s4 = inlined_call_operand.vmem [shape: f32[1,512], index: 4, kind: input, shape index: {}]
  %s5 = inlined_call_operand.vmem [shape: f32[4,128,6], index: 5, kind: input, shape index: {}]
  %s6 = inlined_call_operand.vmem [shape: f32[1,6], index: 6, kind: input, shape index: {}]
  %s7 = inlined_call_operand.hbm [shape: f32[1,2,6], index: 7, kind: output, shape index: {}]
  %s8 = sld [smem:[#allocation0]]
  $region38: #{tpu_custom_call.1} parent=0
    _
  %s10 = ssub.s32 1, %s8
  %s11 = scalar_select 0, %s10, %s8
  $region1: #{tpu_custom_call.1} parent=0
    #allocation2 [shape = 'u8[1024]{0}', space=vmem, size = 0x400, scoped, tag = 'output window, operand 0, single buffered']
    #allocation3 [shape = 's32[1]{0}', space=sflag, size = 0x4, scoped, tag = 'scoped memory for tpu_custom_call.1']
    %12 = vsyncpa [#allocation3], 0
    // Predicated region
    $region2: #{tpu_custom_call.1} parent=1 // pred_check
      _
    $region3: #{tpu_custom_call.1} parent=1 // pred_check_branch
      %14 = sbr.rel (0) target = $region5
    $region4: #{tpu_custom_call.1} parent=1 // pred_region
      _
    $region5: #{tpu_custom_call.1} parent=1 // pred_fallthru
      _
    // Predicated region
    $region6: #{tpu_custom_call.1} parent=1 // pred_check
      _
    $region7: #{tpu_custom_call.1} parent=1 // pred_check_branch
      %16 = sbr.rel (0) target = $region9
    $region8: #{tpu_custom_call.1} parent=1 // pred_region
      _
    $region9: #{tpu_custom_call.1} parent=1 // pred_fallthru
      _
    // Predicated region
    $region10: #{tpu_custom_call.1} parent=1 // pred_check
      _
    $region11: #{tpu_custom_call.1} parent=1 // pred_check_branch
      %18 = sbr.rel (0) target = $region13
    $region12: #{tpu_custom_call.1} parent=1 // pred_region
      _
    $region13: #{tpu_custom_call.1} parent=1 // pred_fallthru
      _
    // Predicated region
    $region14: #{tpu_custom_call.1} parent=1 // pred_check
      _
    $region15: #{tpu_custom_call.1} parent=1 // pred_check_branch
      %20 = sbr.rel (0) target = $region17
    $region16: #{tpu_custom_call.1} parent=1 // pred_region
      _
    $region17: #{tpu_custom_call.1} parent=1 // pred_fallthru
      _
    // Predicated region
    $region18: #{tpu_custom_call.1} parent=1 // pred_check
      _
    $region19: #{tpu_custom_call.1} parent=1 // pred_check_branch
      %22 = sbr.rel (0) target = $region21
    $region20: #{tpu_custom_call.1} parent=1 // pred_region
      _
    $region21: #{tpu_custom_call.1} parent=1 // pred_fallthru
      _
    // Predicated region
    $region22: #{tpu_custom_call.1} parent=1 // pred_check
      _
    $region23: #{tpu_custom_call.1} parent=1 // pred_check_branch
      %24 = sbr.rel (0) target = $region25
    $region24: #{tpu_custom_call.1} parent=1 // pred_region
      _
    $region25: #{tpu_custom_call.1} parent=1 // pred_fallthru
      _
    // Predicated region
    $region26: #{tpu_custom_call.1} parent=1 // pred_check
      _
    $region27: #{tpu_custom_call.1} parent=1 // pred_check_branch
      %26 = sbr.rel (0) target = $region29
    $region28: #{tpu_custom_call.1} parent=1 // pred_region
      _
    $region29: #{tpu_custom_call.1} parent=1 // pred_fallthru
      _
    %v28 = vld [vmem:[%s0] sm:$0xff]
    %v29 = vld [vmem:[%s0 + $0x8] sm:$0xff]
    %v30 = vld [vmem:[%s0 + $0x10] sm:$0xf]
    %v31 = vld [vmem:[%s0 + $0x14] sm:$0xff]
    %v32 = vld [vmem:[%s0 + $0x1c] sm:$0xff]
    %v33 = vld [vmem:[%s0 + $0x24] sm:$0xf]
    %v34 = vld [vmem:[%s1] sm:$0xff]
    %v35 = vld [vmem:[%s1 + $0x8] sm:$0xf]
    %v36 = vld [vmem:[%s1 + $0xc] sm:$0xff]
    %v37 = vld [vmem:[%s1 + $0x14] sm:$0xf]
    %v38 = vld [vmem:[%s1 + $0x18] sm:$0xff]
    %v39 = vld [vmem:[%s1 + $0x20] sm:$0xf]
    %v40 = vld [vmem:[%s1 + $0x24] sm:$0xff]
    %v41 = vld [vmem:[%s1 + $0x2c] sm:$0xf]
    %v42 = vld [vmem:[%s1 + $0x30] sm:$0xff]
    %v43 = vld [vmem:[%s1 + $0x38] sm:$0xf]
    %v44 = vld [vmem:[%s1 + $0x3c] sm:$0xff]
    %v45 = vld [vmem:[%s1 + $0x44] sm:$0xf]
    %v46 = vld [vmem:[%s1 + $0x48] sm:$0xff]
    %v47 = vld [vmem:[%s1 + $0x50] sm:$0xf]
    %v48 = vld [vmem:[%s1 + $0x54] sm:$0xff]
    %v49 = vld [vmem:[%s1 + $0x5c] sm:$0xf]
    %v50 = vld [vmem:[%s1 + $0x60] sm:$0xff]
    %v51 = vld [vmem:[%s1 + $0x68] sm:$0xf]
    %v52 = vld [vmem:[%s1 + $0x6c] sm:$0xff]
    %v53 = vld [vmem:[%s1 + $0x74] sm:$0xf]
    %v54 = vld [vmem:[%s1 + $0x78] sm:$0xff]
    %v55 = vld [vmem:[%s1 + $0x80] sm:$0xf]
    %v56 = vld [vmem:[%s1 + $0x84] sm:$0xff]
    %v57 = vld [vmem:[%s1 + $0x8c] sm:$0xf]
    %v58 = vld [vmem:[%s1 + $0x90] sm:$0xff]
    %v59 = vld [vmem:[%s1 + $0x98] sm:$0xf]
    %v60 = vld [vmem:[%s1 + $0x9c] sm:$0xff]
    %v61 = vld [vmem:[%s1 + $0xa4] sm:$0xf]
    %v62 = vld [vmem:[%s1 + $0xa8] sm:$0xff]
    %v63 = vld [vmem:[%s1 + $0xb0] sm:$0xf]
    %v64 = vld [vmem:[%s1 + $0xb4] sm:$0xff]
    %v65 = vld [vmem:[%s1 + $0xbc] sm:$0xf]
    %v66 = vld [vmem:[%s1 + $0xc0] sm:$0xff]
    %v67 = vld [vmem:[%s1 + $0xc8] sm:$0xf]
    %v68 = vld [vmem:[%s1 + $0xcc] sm:$0xff]
    %v69 = vld [vmem:[%s1 + $0xd4] sm:$0xf]
    %v70 = vld [vmem:[%s1 + $0xd8] sm:$0xff]
    %v71 = vld [vmem:[%s1 + $0xe0] sm:$0xf]
    %v72 = vld [vmem:[%s1 + $0xe4] sm:$0xff]
    %v73 = vld [vmem:[%s1 + $0xec] sm:$0xf]
    %v74 = vld [vmem:[%s1 + $0xf0] sm:$0xff]
    %v75 = vld [vmem:[%s1 + $0xf8] sm:$0xf]
    %v76 = vld [vmem:[%s1 + $0xfc] sm:$0xff]
    %v77 = vld [vmem:[%s1 + $0x104] sm:$0xf]
    %v78 = vld [vmem:[%s1 + $0x108] sm:$0xff]
    %v79 = vld [vmem:[%s1 + $0x110] sm:$0xf]
    %v80 = vld [vmem:[%s1 + $0x114] sm:$0xff]
    %v81 = vld [vmem:[%s1 + $0x11c] sm:$0xf]
    %v82 = vld [vmem:[%s1 + $0x120] sm:$0xff]
    %v83 = vld [vmem:[%s1 + $0x128] sm:$0xf]
    %v84 = vld [vmem:[%s1 + $0x12c] sm:$0xff]
    %v85 = vld [vmem:[%s1 + $0x134] sm:$0xf]
    %v86 = vld [vmem:[%s1 + $0x138] sm:$0xff]
    %v87 = vld [vmem:[%s1 + $0x140] sm:$0xf]
    %v88 = vld [vmem:[%s1 + $0x144] sm:$0xff]
    %v89 = vld [vmem:[%s1 + $0x14c] sm:$0xf]
    %v90 = vld [vmem:[%s1 + $0x150] sm:$0xff]
    %v91 = vld [vmem:[%s1 + $0x158] sm:$0xf]
    %v92 = vld [vmem:[%s1 + $0x15c] sm:$0xff]
    %v93 = vld [vmem:[%s1 + $0x164] sm:$0xf]
    %v94 = vld [vmem:[%s1 + $0x168] sm:$0xff]
    %v95 = vld [vmem:[%s1 + $0x170] sm:$0xf]
    %v96 = vld [vmem:[%s1 + $0x174] sm:$0xff]
    %v97 = vld [vmem:[%s1 + $0x17c] sm:$0xf]
    %v98 = vld [vmem:[%s1 + $0x180] sm:$0xff]
    %v99 = vld [vmem:[%s1 + $0x188] sm:$0xf]
    %v100 = vld [vmem:[%s1 + $0x18c] sm:$0xff]
    %v101 = vld [vmem:[%s1 + $0x194] sm:$0xf]
    %v102 = vld [vmem:[%s1 + $0x198] sm:$0xff]
    %v103 = vld [vmem:[%s1 + $0x1a0] sm:$0xf]
    %v104 = vld [vmem:[%s1 + $0x1a4] sm:$0xff]
    %v105 = vld [vmem:[%s1 + $0x1ac] sm:$0xf]
    %v106 = vld [vmem:[%s1 + $0x1b0] sm:$0xff]
    %v107 = vld [vmem:[%s1 + $0x1b8] sm:$0xf]
    %v108 = vld [vmem:[%s1 + $0x1bc] sm:$0xff]
    %v109 = vld [vmem:[%s1 + $0x1c4] sm:$0xf]
    %v110 = vld [vmem:[%s1 + $0x1c8] sm:$0xff]
    %v111 = vld [vmem:[%s1 + $0x1d0] sm:$0xf]
    %v112 = vld [vmem:[%s1 + $0x1d4] sm:$0xff]
    %v113 = vld [vmem:[%s1 + $0x1dc] sm:$0xf]
    %v114 = vld [vmem:[%s1 + $0x1e0] sm:$0xff]
    %v115 = vld [vmem:[%s1 + $0x1e8] sm:$0xf]
    %v116 = vld [vmem:[%s1 + $0x1ec] sm:$0xff]
    %v117 = vld [vmem:[%s1 + $0x1f4] sm:$0xf]
    %v118 = vld [vmem:[%s1 + $0x1f8] sm:$0xff]
    %v119 = vld [vmem:[%s1 + $0x200] sm:$0xf]
    %v120 = vld [vmem:[%s1 + $0x204] sm:$0xff]
    %v121 = vld [vmem:[%s1 + $0x20c] sm:$0xf]
    %v122 = vld [vmem:[%s1 + $0x210] sm:$0xff]
    %v123 = vld [vmem:[%s1 + $0x218] sm:$0xf]
    %v124 = vld [vmem:[%s1 + $0x21c] sm:$0xff]
    %v125 = vld [vmem:[%s1 + $0x224] sm:$0xf]
    %v126 = vld [vmem:[%s1 + $0x228] sm:$0xff]
    %v127 = vld [vmem:[%s1 + $0x230] sm:$0xf]
    %v128 = vld [vmem:[%s1 + $0x234] sm:$0xff]
    %v129 = vld [vmem:[%s1 + $0x23c] sm:$0xf]
    %v130 = vld [vmem:[%s1 + $0x240] sm:$0xff]
    %v131 = vld [vmem:[%s1 + $0x248] sm:$0xf]
    %v132 = vld [vmem:[%s1 + $0x24c] sm:$0xff]
    %v133 = vld [vmem:[%s1 + $0x254] sm:$0xf]
    %v134 = vld [vmem:[%s1 + $0x258] sm:$0xff]
    %v135 = vld [vmem:[%s1 + $0x260] sm:$0xf]
    %v136 = vld [vmem:[%s1 + $0x264] sm:$0xff]
    %v137 = vld [vmem:[%s1 + $0x26c] sm:$0xf]
    %v138 = vld [vmem:[%s1 + $0x270] sm:$0xff]
    %v139 = vld [vmem:[%s1 + $0x278] sm:$0xf]
    %v140 = vld [vmem:[%s1 + $0x27c] sm:$0xff]
    %v141 = vld [vmem:[%s1 + $0x284] sm:$0xf]
    %v142 = vld [vmem:[%s1 + $0x288] sm:$0xff]
    %v143 = vld [vmem:[%s1 + $0x290] sm:$0xf]
    %v144 = vld [vmem:[%s1 + $0x294] sm:$0xff]
    %v145 = vld [vmem:[%s1 + $0x29c] sm:$0xf]
    %v146 = vld [vmem:[%s1 + $0x2a0] sm:$0xff]
    %v147 = vld [vmem:[%s1 + $0x2a8] sm:$0xf]
    %v148 = vld [vmem:[%s1 + $0x2ac] sm:$0xff]
    %v149 = vld [vmem:[%s1 + $0x2b4] sm:$0xf]
    %v150 = vld [vmem:[%s1 + $0x2b8] sm:$0xff]
    %v151 = vld [vmem:[%s1 + $0x2c0] sm:$0xf]
    %v152 = vld [vmem:[%s1 + $0x2c4] sm:$0xff]
    %v153 = vld [vmem:[%s1 + $0x2cc] sm:$0xf]
    %v154 = vld [vmem:[%s1 + $0x2d0] sm:$0xff]
    %v155 = vld [vmem:[%s1 + $0x2d8] sm:$0xf]
    %v156 = vld [vmem:[%s1 + $0x2dc] sm:$0xff]
    %v157 = vld [vmem:[%s1 + $0x2e4] sm:$0xf]
    %v158 = vld [vmem:[%s1 + $0x2e8] sm:$0xff]
    %v159 = vld [vmem:[%s1 + $0x2f0] sm:$0xf]
    %v160 = vld [vmem:[%s1 + $0x2f4] sm:$0xff]
    %v161 = vld [vmem:[%s1 + $0x2fc] sm:$0xf]
    %v162 = vld [vmem:[%s1 + $0x300] sm:$0xff]
    %v163 = vld [vmem:[%s1 + $0x308] sm:$0xf]
    %v164 = vld [vmem:[%s1 + $0x30c] sm:$0xff]
    %v165 = vld [vmem:[%s1 + $0x314] sm:$0xf]
    %v166 = vld [vmem:[%s1 + $0x318] sm:$0xff]
    %v167 = vld [vmem:[%s1 + $0x320] sm:$0xf]
    %v168 = vld [vmem:[%s1 + $0x324] sm:$0xff]
    %v169 = vld [vmem:[%s1 + $0x32c] sm:$0xf]
    %v170 = vld [vmem:[%s1 + $0x330] sm:$0xff]
    %v171 = vld [vmem:[%s1 + $0x338] sm:$0xf]
    %v172 = vld [vmem:[%s1 + $0x33c] sm:$0xff]
    %v173 = vld [vmem:[%s1 + $0x344] sm:$0xf]
    %v174 = vld [vmem:[%s1 + $0x348] sm:$0xff]
    %v175 = vld [vmem:[%s1 + $0x350] sm:$0xf]
    %v176 = vld [vmem:[%s1 + $0x354] sm:$0xff]
    %v177 = vld [vmem:[%s1 + $0x35c] sm:$0xf]
    %v178 = vld [vmem:[%s1 + $0x360] sm:$0xff]
    %v179 = vld [vmem:[%s1 + $0x368] sm:$0xf]
    %v180 = vld [vmem:[%s1 + $0x36c] sm:$0xff]
    %v181 = vld [vmem:[%s1 + $0x374] sm:$0xf]
    %v182 = vld [vmem:[%s1 + $0x378] sm:$0xff]
    %v183 = vld [vmem:[%s1 + $0x380] sm:$0xf]
    %v184 = vld [vmem:[%s2] sm:$0x7]
    %v186 = vlaneseq
    %v187 = vshrl.u32 %v186, 7
    %v188 = vsub.s32 0, %v187
    %v189 = vrot.slane %v184, %v188
    %v190 = vlaneseq
    %v191 = vshrl.u32 %v190, 7
    %v192 = vsub.s32 1, %v191
    %v193 = vrot.slane %v184, %v192
    %v194 = vlaneseq
    %v195 = vshrl.u32 %v194, 7
    %v196 = vsub.s32 2, %v195
    %v197 = vrot.slane %v184, %v196
    %v207 = vunpack.c.l.b16 %v28
    %v208 = vunpack.c.h.b16 %v28
    %v209 = vunpack.c.l.b16 %v29
    %v210 = vunpack.c.h.b16 %v29
    %v211 = vunpack.c.l.b16 %v30
    %v212 = vunpack.c.l.b16 %v31
    %v213 = vunpack.c.h.b16 %v31
    %v214 = vunpack.c.l.b16 %v32
    %v215 = vunpack.c.h.b16 %v32
    %v216 = vunpack.c.l.b16 %v33
    %v217 = vpack.c.b16 %v212, %v207
    %v218 = vpack.c.b16 %v213, %v208
    %v219 = vpack.c.b16 %v214, %v209
    %v220 = vpack.c.b16 %v215, %v210
    %v221 = vpack.c.b16 %v216, %v211
    %v376 = vunpack.c.l.b16 %v34
    %v377 = vunpack.c.h.b16 %v34
    %v378 = vunpack.c.l.b16 %v35
    %v379 = vunpack.c.l.b16 %v36
    %v380 = vunpack.c.h.b16 %v36
    %v381 = vunpack.c.l.b16 %v37
    %v382 = vunpack.c.l.b16 %v38
    %v383 = vunpack.c.h.b16 %v38
    %v384 = vunpack.c.l.b16 %v39
    %v385 = vunpack.c.l.b16 %v40
    %v386 = vunpack.c.h.b16 %v40
    %v387 = vunpack.c.l.b16 %v41
    %v388 = vunpack.c.l.b16 %v42
    %v389 = vunpack.c.h.b16 %v42
    %v390 = vunpack.c.l.b16 %v43
    %v391 = vunpack.c.l.b16 %v44
    %v392 = vunpack.c.h.b16 %v44
    %v393 = vunpack.c.l.b16 %v45
    %v394 = vunpack.c.l.b16 %v46
    %v395 = vunpack.c.h.b16 %v46
    %v396 = vunpack.c.l.b16 %v47
    %v397 = vunpack.c.l.b16 %v48
    %v398 = vunpack.c.h.b16 %v48
    %v399 = vunpack.c.l.b16 %v49
    %v400 = vunpack.c.l.b16 %v50
    %v401 = vunpack.c.h.b16 %v50
    %v402 = vunpack.c.l.b16 %v51
    %v403 = vunpack.c.l.b16 %v52
    %v404 = vunpack.c.h.b16 %v52
    %v405 = vunpack.c.l.b16 %v53
    %v406 = vunpack.c.l.b16 %v54
    %v407 = vunpack.c.h.b16 %v54
    %v408 = vunpack.c.l.b16 %v55
    %v409 = vunpack.c.l.b16 %v56
    %v410 = vunpack.c.h.b16 %v56
    %v411 = vunpack.c.l.b16 %v57
    %v412 = vunpack.c.l.b16 %v58
    %v413 = vunpack.c.h.b16 %v58
    %v414 = vunpack.c.l.b16 %v59
    %v415 = vunpack.c.l.b16 %v60
    %v416 = vunpack.c.h.b16 %v60
    %v417 = vunpack.c.l.b16 %v61
    %v418 = vunpack.c.l.b16 %v62
    %v419 = vunpack.c.h.b16 %v62
    %v420 = vunpack.c.l.b16 %v63
    %v421 = vunpack.c.l.b16 %v64
    %v422 = vunpack.c.h.b16 %v64
    %v423 = vunpack.c.l.b16 %v65
    %v424 = vunpack.c.l.b16 %v66
    %v425 = vunpack.c.h.b16 %v66
    %v426 = vunpack.c.l.b16 %v67
    %v427 = vunpack.c.l.b16 %v68
    %v428 = vunpack.c.h.b16 %v68
    %v429 = vunpack.c.l.b16 %v69
    %v430 = vunpack.c.l.b16 %v70
    %v431 = vunpack.c.h.b16 %v70
    %v432 = vunpack.c.l.b16 %v71
    %v433 = vunpack.c.l.b16 %v72
    %v434 = vunpack.c.h.b16 %v72
    %v435 = vunpack.c.l.b16 %v73
    %v436 = vunpack.c.l.b16 %v74
    %v437 = vunpack.c.h.b16 %v74
    %v438 = vunpack.c.l.b16 %v75
    %v439 = vunpack.c.l.b16 %v76
    %v440 = vunpack.c.h.b16 %v76
    %v441 = vunpack.c.l.b16 %v77
    %v442 = vunpack.c.l.b16 %v78
    %v443 = vunpack.c.h.b16 %v78
    %v444 = vunpack.c.l.b16 %v79
    %v445 = vunpack.c.l.b16 %v80
    %v446 = vunpack.c.h.b16 %v80
    %v447 = vunpack.c.l.b16 %v81
    %v448 = vunpack.c.l.b16 %v82
    %v449 = vunpack.c.h.b16 %v82
    %v450 = vunpack.c.l.b16 %v83
    %v451 = vunpack.c.l.b16 %v84
    %v452 = vunpack.c.h.b16 %v84
    %v453 = vunpack.c.l.b16 %v85
    %v454 = vunpack.c.l.b16 %v86
    %v455 = vunpack.c.h.b16 %v86
    %v456 = vunpack.c.l.b16 %v87
    %v457 = vunpack.c.l.b16 %v88
    %v458 = vunpack.c.h.b16 %v88
    %v459 = vunpack.c.l.b16 %v89
    %v460 = vunpack.c.l.b16 %v90
    %v461 = vunpack.c.h.b16 %v90
    %v462 = vunpack.c.l.b16 %v91
    %v463 = vunpack.c.l.b16 %v92
    %v464 = vunpack.c.h.b16 %v92
    %v465 = vunpack.c.l.b16 %v93
    %v466 = vunpack.c.l.b16 %v94
    %v467 = vunpack.c.h.b16 %v94
    %v468 = vunpack.c.l.b16 %v95
    %v469 = vunpack.c.l.b16 %v96
    %v470 = vunpack.c.h.b16 %v96
    %v471 = vunpack.c.l.b16 %v97
    %v472 = vunpack.c.l.b16 %v98
    %v473 = vunpack.c.h.b16 %v98
    %v474 = vunpack.c.l.b16 %v99
    %v475 = vunpack.c.l.b16 %v100
    %v476 = vunpack.c.h.b16 %v100
    %v477 = vunpack.c.l.b16 %v101
    %v478 = vunpack.c.l.b16 %v102
    %v479 = vunpack.c.h.b16 %v102
    %v480 = vunpack.c.l.b16 %v103
    %v481 = vunpack.c.l.b16 %v104
    %v482 = vunpack.c.h.b16 %v104
    %v483 = vunpack.c.l.b16 %v105
    %v484 = vunpack.c.l.b16 %v106
    %v485 = vunpack.c.h.b16 %v106
    %v486 = vunpack.c.l.b16 %v107
    %v487 = vunpack.c.l.b16 %v108
    %v488 = vunpack.c.h.b16 %v108
    %v489 = vunpack.c.l.b16 %v109
    %v490 = vunpack.c.l.b16 %v110
    %v491 = vunpack.c.h.b16 %v110
    %v492 = vunpack.c.l.b16 %v111
    %v493 = vunpack.c.l.b16 %v112
    %v494 = vunpack.c.h.b16 %v112
    %v495 = vunpack.c.l.b16 %v113
    %v496 = vunpack.c.l.b16 %v114
    %v497 = vunpack.c.h.b16 %v114
    %v498 = vunpack.c.l.b16 %v115
    %v499 = vunpack.c.l.b16 %v116
    %v500 = vunpack.c.h.b16 %v116
    %v501 = vunpack.c.l.b16 %v117
    %v502 = vunpack.c.l.b16 %v118
    %v503 = vunpack.c.h.b16 %v118
    %v504 = vunpack.c.l.b16 %v119
    %v505 = vunpack.c.l.b16 %v120
    %v506 = vunpack.c.h.b16 %v120
    %v507 = vunpack.c.l.b16 %v121
    %v508 = vunpack.c.l.b16 %v122
    %v509 = vunpack.c.h.b16 %v122
    %v510 = vunpack.c.l.b16 %v123
    %v511 = vunpack.c.l.b16 %v124
    %v512 = vunpack.c.h.b16 %v124
    %v513 = vunpack.c.l.b16 %v125
    %v514 = vunpack.c.l.b16 %v126
    %v515 = vunpack.c.h.b16 %v126
    %v516 = vunpack.c.l.b16 %v127
    %v517 = vunpack.c.l.b16 %v128
    %v518 = vunpack.c.h.b16 %v128
    %v519 = vunpack.c.l.b16 %v129
    %v520 = vunpack.c.l.b16 %v130
    %v521 = vunpack.c.h.b16 %v130
    %v522 = vunpack.c.l.b16 %v131
    %v523 = vunpack.c.l.b16 %v132
    %v524 = vunpack.c.h.b16 %v132
    %v525 = vunpack.c.l.b16 %v133
    %v526 = vunpack.c.l.b16 %v134
    %v527 = vunpack.c.h.b16 %v134
    %v528 = vunpack.c.l.b16 %v135
    %v529 = vunpack.c.l.b16 %v136
    %v530 = vunpack.c.h.b16 %v136
    %v531 = vunpack.c.l.b16 %v137
    %v532 = vunpack.c.l.b16 %v138
    %v533 = vunpack.c.h.b16 %v138
    %v534 = vunpack.c.l.b16 %v139
    %v535 = vunpack.c.l.b16 %v140
    %v536 = vunpack.c.h.b16 %v140
    %v537 = vunpack.c.l.b16 %v141
    %v538 = vunpack.c.l.b16 %v142
    %v539 = vunpack.c.h.b16 %v142
    %v540 = vunpack.c.l.b16 %v143
    %v541 = vunpack.c.l.b16 %v144
    %v542 = vunpack.c.h.b16 %v144
    %v543 = vunpack.c.l.b16 %v145
    %v544 = vunpack.c.l.b16 %v146
    %v545 = vunpack.c.h.b16 %v146
    %v546 = vunpack.c.l.b16 %v147
    %v547 = vunpack.c.l.b16 %v148
    %v548 = vunpack.c.h.b16 %v148
    %v549 = vunpack.c.l.b16 %v149
    %v550 = vunpack.c.l.b16 %v150
    %v551 = vunpack.c.h.b16 %v150
    %v552 = vunpack.c.l.b16 %v151
    %v553 = vunpack.c.l.b16 %v152
    %v554 = vunpack.c.h.b16 %v152
    %v555 = vunpack.c.l.b16 %v153
    %v556 = vunpack.c.l.b16 %v154
    %v557 = vunpack.c.h.b16 %v154
    %v558 = vunpack.c.l.b16 %v155
    %v559 = vunpack.c.l.b16 %v156
    %v560 = vunpack.c.h.b16 %v156
    %v561 = vunpack.c.l.b16 %v157
    %v562 = vunpack.c.l.b16 %v158
    %v563 = vunpack.c.h.b16 %v158
    %v564 = vunpack.c.l.b16 %v159
    %v565 = vunpack.c.l.b16 %v160
    %v566 = vunpack.c.h.b16 %v160
    %v567 = vunpack.c.l.b16 %v161
    %v568 = vunpack.c.l.b16 %v162
    %v569 = vunpack.c.h.b16 %v162
    %v570 = vunpack.c.l.b16 %v163
    %v571 = vunpack.c.l.b16 %v164
    %v572 = vunpack.c.h.b16 %v164
    %v573 = vunpack.c.l.b16 %v165
    %v574 = vunpack.c.l.b16 %v166
    %v575 = vunpack.c.h.b16 %v166
    %v576 = vunpack.c.l.b16 %v167
    %v577 = vunpack.c.l.b16 %v168
    %v578 = vunpack.c.h.b16 %v168
    %v579 = vunpack.c.l.b16 %v169
    %v580 = vunpack.c.l.b16 %v170
    %v581 = vunpack.c.h.b16 %v170
    %v582 = vunpack.c.l.b16 %v171
    %v583 = vunpack.c.l.b16 %v172
    %v584 = vunpack.c.h.b16 %v172
    %v585 = vunpack.c.l.b16 %v173
    %v586 = vunpack.c.l.b16 %v174
    %v587 = vunpack.c.h.b16 %v174
    %v588 = vunpack.c.l.b16 %v175
    %v589 = vunpack.c.l.b16 %v176
    %v590 = vunpack.c.h.b16 %v176
    %v591 = vunpack.c.l.b16 %v177
    %v592 = vunpack.c.l.b16 %v178
    %v593 = vunpack.c.h.b16 %v178
    %v594 = vunpack.c.l.b16 %v179
    %v595 = vunpack.c.l.b16 %v180
    %v596 = vunpack.c.h.b16 %v180
    %v597 = vunpack.c.l.b16 %v181
    %v598 = vunpack.c.l.b16 %v182
    %v599 = vunpack.c.h.b16 %v182
    %v600 = vunpack.c.l.b16 %v183
    %v601 = vpack.c.b16 %v379, %v376
    %v602 = vpack.c.b16 %v380, %v377
    %v603 = vpack.c.b16 %v381, %v378
    %v604 = vpack.c.b16 %v385, %v382
    %v605 = vpack.c.b16 %v386, %v383
    %v606 = vpack.c.b16 %v387, %v384
    %v607 = vpack.c.b16 %v391, %v388
    %v608 = vpack.c.b16 %v392, %v389
    %v609 = vpack.c.b16 %v393, %v390
    %v610 = vpack.c.b16 %v397, %v394
    %v611 = vpack.c.b16 %v398, %v395
    %v612 = vpack.c.b16 %v399, %v396
    %v613 = vpack.c.b16 %v403, %v400
    %v614 = vpack.c.b16 %v404, %v401
    %v615 = vpack.c.b16 %v405, %v402
    %v616 = vpack.c.b16 %v409, %v406
    %v617 = vpack.c.b16 %v410, %v407
    %v618 = vpack.c.b16 %v411, %v408
    %v619 = vpack.c.b16 %v415, %v412
    %v620 = vpack.c.b16 %v416, %v413
    %v621 = vpack.c.b16 %v417, %v414
    %v622 = vpack.c.b16 %v421, %v418
    %v623 = vpack.c.b16 %v422, %v419
    %v624 = vpack.c.b16 %v423, %v420
    %v625 = vpack.c.b16 %v427, %v424
    %v626 = vpack.c.b16 %v428, %v425
    %v627 = vpack.c.b16 %v429, %v426
    %v628 = vpack.c.b16 %v433, %v430
    %v629 = vpack.c.b16 %v434, %v431
    %v630 = vpack.c.b16 %v435, %v432
    %v631 = vpack.c.b16 %v439, %v436
    %v632 = vpack.c.b16 %v440, %v437
    %v633 = vpack.c.b16 %v441, %v438
    %v634 = vpack.c.b16 %v445, %v442
    %v635 = vpack.c.b16 %v446, %v443
    %v636 = vpack.c.b16 %v447, %v444
    %v637 = vpack.c.b16 %v451, %v448
    %v638 = vpack.c.b16 %v452, %v449
    %v639 = vpack.c.b16 %v453, %v450
    %v640 = vpack.c.b16 %v457, %v454
    %v641 = vpack.c.b16 %v458, %v455
    %v642 = vpack.c.b16 %v459, %v456
    %v643 = vpack.c.b16 %v463, %v460
    %v644 = vpack.c.b16 %v464, %v461
    %v645 = vpack.c.b16 %v465, %v462
    %v646 = vpack.c.b16 %v469, %v466
    %v647 = vpack.c.b16 %v470, %v467
    %v648 = vpack.c.b16 %v471, %v468
    %v649 = vpack.c.b16 %v475, %v472
    %v650 = vpack.c.b16 %v476, %v473
    %v651 = vpack.c.b16 %v477, %v474
    %v652 = vpack.c.b16 %v481, %v478
    %v653 = vpack.c.b16 %v482, %v479
    %v654 = vpack.c.b16 %v483, %v480
    %v655 = vpack.c.b16 %v487, %v484
    %v656 = vpack.c.b16 %v488, %v485
    %v657 = vpack.c.b16 %v489, %v486
    %v658 = vpack.c.b16 %v493, %v490
    %v659 = vpack.c.b16 %v494, %v491
    %v660 = vpack.c.b16 %v495, %v492
    %v661 = vpack.c.b16 %v499, %v496
    %v662 = vpack.c.b16 %v500, %v497
    %v663 = vpack.c.b16 %v501, %v498
    %v664 = vpack.c.b16 %v505, %v502
    %v665 = vpack.c.b16 %v506, %v503
    %v666 = vpack.c.b16 %v507, %v504
    %v667 = vpack.c.b16 %v511, %v508
    %v668 = vpack.c.b16 %v512, %v509
    %v669 = vpack.c.b16 %v513, %v510
    %v670 = vpack.c.b16 %v517, %v514
    %v671 = vpack.c.b16 %v518, %v515
    %v672 = vpack.c.b16 %v519, %v516
    %v673 = vpack.c.b16 %v523, %v520
    %v674 = vpack.c.b16 %v524, %v521
    %v675 = vpack.c.b16 %v525, %v522
    %v676 = vpack.c.b16 %v529, %v526
    %v677 = vpack.c.b16 %v530, %v527
    %v678 = vpack.c.b16 %v531, %v528
    %v679 = vpack.c.b16 %v535, %v532
    %v680 = vpack.c.b16 %v536, %v533
    %v681 = vpack.c.b16 %v537, %v534
    %v682 = vpack.c.b16 %v541, %v538
    %v683 = vpack.c.b16 %v542, %v539
    %v684 = vpack.c.b16 %v543, %v540
    %v685 = vpack.c.b16 %v547, %v544
    %v686 = vpack.c.b16 %v548, %v545
    %v687 = vpack.c.b16 %v549, %v546
    %v688 = vpack.c.b16 %v553, %v550
    %v689 = vpack.c.b16 %v554, %v551
    %v690 = vpack.c.b16 %v555, %v552
    %v691 = vpack.c.b16 %v559, %v556
    %v692 = vpack.c.b16 %v560, %v557
    %v693 = vpack.c.b16 %v561, %v558
    %v694 = vpack.c.b16 %v565, %v562
    %v695 = vpack.c.b16 %v566, %v563
    %v696 = vpack.c.b16 %v567, %v564
    %v697 = vpack.c.b16 %v571, %v568
    %v698 = vpack.c.b16 %v572, %v569
    %v699 = vpack.c.b16 %v573, %v570
    %v700 = vpack.c.b16 %v577, %v574
    %v701 = vpack.c.b16 %v578, %v575
    %v702 = vpack.c.b16 %v579, %v576
    %v703 = vpack.c.b16 %v583, %v580
    %v704 = vpack.c.b16 %v584, %v581
    %v705 = vpack.c.b16 %v585, %v582
    %v706 = vpack.c.b16 %v589, %v586
    %v707 = vpack.c.b16 %v590, %v587
    %v708 = vpack.c.b16 %v591, %v588
    %v709 = vpack.c.b16 %v595, %v592
    %v710 = vpack.c.b16 %v596, %v593
    %v711 = vpack.c.b16 %v597, %v594
    %v712 = vpack.c.b16 %v598, %v598
    %v713 = vpack.c.b16 %v599, %v599
    %v714 = vpack.c.b16 %v600, %v600
    %vm826 = vcmask 719872
    %v828 = vsel %vm826, %v221, 0
    %vm830 = vcmask 1043456
    %v832 = vsel %vm830, %v712, 0
    %v835 = vsel %vm830, %v713, 0
    %v838 = vsel %vm830, %v714, 0
    %840 = vmatprep.subr.bf16.mxu0 %v623
    %841 = vmatpush1.bf16.msra.mxu0 %v622
    %842 = vmatprep.subr.bf16.mxu0 %v620
    %843 = vmatpush1.bf16.msra.mxu0 %v619
    %844 = vmatprep.subr.bf16.mxu0 %v617
    %845 = vmatpush1.bf16.msra.mxu0 %v616
    %846 = vmatprep.subr.bf16.mxu0 %v614
    %847 = vmatpush1.bf16.msra.mxu0 %v613
    %848 = vmatprep.subr.bf16.mxu0 %v611
    %849 = vmatpush1.bf16.msra.mxu0 %v610
    %850 = vmatprep.subr.bf16.mxu0 %v608
    %851 = vmatpush1.bf16.msra.mxu0 %v607
    %852 = vmatprep.subr.bf16.mxu0 %v605
    %853 = vmatpush1.bf16.msra.mxu0 %v604
    %854 = vmatprep.subr.bf16.mxu0 %v602
    %855 = vmatpush1.bf16.msra.mxu0 %v601
    %856 = vmatprep.subr.bf16.mxu0 %v647
    %857 = vmatpush2.bf16.msra.mxu0 %v646
    %858 = vmatprep.subr.bf16.mxu0 %v644
    %859 = vmatpush2.bf16.msra.mxu0 %v643
    %860 = vmatprep.subr.bf16.mxu0 %v641
    %861 = vmatpush2.bf16.msra.mxu0 %v640
    %862 = vmatprep.subr.bf16.mxu0 %v638
    %863 = vmatpush2.bf16.msra.mxu0 %v637
    %864 = vmatprep.subr.bf16.mxu0 %v635
    %865 = vmatpush2.bf16.msra.mxu0 %v634
    %866 = vmatprep.subr.bf16.mxu0 %v632
    %867 = vmatpush2.bf16.msra.mxu0 %v631
    %868 = vmatprep.subr.bf16.mxu0 %v629
    %869 = vmatpush2.bf16.msra.mxu0 %v628
    %870 = vmatprep.subr.bf16.mxu0 %v626
    %871 = vmatpush2.bf16.msra.mxu0 %v625
    %872 = vmatprep.mubr.bf16.mxu0 %v218
    %873 = vmatmul.mubr.bf16.gmra.mxu0 %v217
    %v874 = vpop.f32.mrf.mxu0
    %v875 = vadd.f32 %v189, %v874
    %v876 = vpop.f32.mrf.mxu0
    %v877 = vadd.f32 %v193, %v876
    %v878 = vpop.f32.mrf.mxu0
    %v879 = vadd.f32 %v189, %v878
    %v880 = vpop.f32.mrf.mxu0
    %v881 = vadd.f32 %v193, %v880
    %882 = vdwg.mxu0
    %883 = vmatprep.subr.bf16.mxu0 %v671
    %884 = vmatpush1.bf16.msra.mxu0 %v670
    %885 = vmatprep.subr.bf16.mxu0 %v668
    %886 = vmatpush1.bf16.msra.mxu0 %v667
    %887 = vmatprep.subr.bf16.mxu0 %v665
    %888 = vmatpush1.bf16.msra.mxu0 %v664
    %889 = vmatprep.subr.bf16.mxu0 %v662
    %890 = vmatpush1.bf16.msra.mxu0 %v661
    %891 = vmatprep.subr.bf16.mxu0 %v659
    %892 = vmatpush1.bf16.msra.mxu0 %v658
    %893 = vmatprep.subr.bf16.mxu0 %v656
    %894 = vmatpush1.bf16.msra.mxu0 %v655
    %895 = vmatprep.subr.bf16.mxu0 %v653
    %896 = vmatpush1.bf16.msra.mxu0 %v652
    %897 = vmatprep.subr.bf16.mxu0 %v650
    %898 = vmatpush1.bf16.msra.mxu0 %v649
    %899 = vmatprep.subr.bf16.mxu0 %v695
    %900 = vmatpush2.bf16.msra.mxu0 %v694
    %901 = vmatprep.subr.bf16.mxu0 %v692
    %902 = vmatpush2.bf16.msra.mxu0 %v691
    %903 = vmatprep.subr.bf16.mxu0 %v689
    %904 = vmatpush2.bf16.msra.mxu0 %v688
    %905 = vmatprep.subr.bf16.mxu0 %v686
    %906 = vmatpush2.bf16.msra.mxu0 %v685
    %907 = vmatprep.subr.bf16.mxu0 %v683
    %908 = vmatpush2.bf16.msra.mxu0 %v682
    %909 = vmatprep.subr.bf16.mxu0 %v680
    %910 = vmatpush2.bf16.msra.mxu0 %v679
    %911 = vmatprep.subr.bf16.mxu0 %v677
    %912 = vmatpush2.bf16.msra.mxu0 %v676
    %913 = vmatprep.subr.bf16.mxu0 %v674
    %914 = vmatpush2.bf16.msra.mxu0 %v673
    %915 = vmatprep.mubr.bf16.mxu0 %v220
    %916 = vmatmul.mubr.bf16.gmra.mxu0 %v219
    %v917 = vpop.f32.mrf.mxu0
    %v918 = vadd.f32 %v875, %v917
    %v919 = vpop.f32.mrf.mxu0
    %v920 = vadd.f32 %v877, %v919
    %v921 = vpop.f32.mrf.mxu0
    %v922 = vadd.f32 %v879, %v921
    %v923 = vpop.f32.mrf.mxu0
    %v924 = vadd.f32 %v881, %v923
    %925 = vdwg.mxu0
    %926 = vmatprep.subr.bf16.mxu0 0
    %927 = vmatpush1.bf16.msra.mxu0 0
    %928 = vmatprep.subr.bf16.mxu0 0
    %929 = vmatpush1.bf16.msra.mxu0 0
    %930 = vmatprep.subr.bf16.mxu0 %v835
    %931 = vmatpush1.bf16.msra.mxu0 %v832
    %932 = vmatprep.subr.bf16.mxu0 %v710
    %933 = vmatpush1.bf16.msra.mxu0 %v709
    %934 = vmatprep.subr.bf16.mxu0 %v707
    %935 = vmatpush1.bf16.msra.mxu0 %v706
    %936 = vmatprep.subr.bf16.mxu0 %v704
    %937 = vmatpush1.bf16.msra.mxu0 %v703
    %938 = vmatprep.subr.bf16.mxu0 %v701
    %939 = vmatpush1.bf16.msra.mxu0 %v700
    %940 = vmatprep.subr.bf16.mxu0 %v698
    %941 = vmatpush1.bf16.msra.mxu0 %v697
    %942 = vmatprep.subr.bf16.mxu0 0
    %943 = vmatpush2.bf16.msra.mxu0 0
    %944 = vmatprep.subr.bf16.mxu0 0
    %945 = vmatpush2.bf16.msra.mxu0 0
    %946 = vmatprep.subr.bf16.mxu0 0
    %947 = vmatpush2.bf16.msra.mxu0 0
    %948 = vmatprep.subr.bf16.mxu0 0
    %949 = vmatpush2.bf16.msra.mxu0 0
    %950 = vmatprep.subr.bf16.mxu0 0
    %951 = vmatpush2.bf16.msra.mxu0 0
    %952 = vmatprep.subr.bf16.mxu0 0
    %953 = vmatpush2.bf16.msra.mxu0 0
    %954 = vmatprep.subr.bf16.mxu0 0
    %955 = vmatpush2.bf16.msra.mxu0 0
    %956 = vmatprep.subr.bf16.mxu0 0
    %957 = vmatpush2.bf16.msra.mxu0 0
    %958 = vmatprep.mubr.bf16.mxu0 0
    %959 = vmatmul.mubr.bf16.gmra.mxu0 %v828
    %v960 = vpop.f32.mrf.mxu0
    %v961 = vadd.f32 %v918, %v960
    %v962 = vpop.f32.mrf.mxu0
    %v963 = vadd.f32 %v920, %v962
    %v964 = vpop.f32.mrf.mxu0
    %v965 = vadd.f32 %v922, %v964
    %v966 = vpop.f32.mrf.mxu0
    %v967 = vadd.f32 %v924, %v966
    %968 = vdwg.mxu0
    %969 = vmatprep.subr.bf16.mxu0 0
    %970 = vmatpush1.bf16.msra.mxu0 %v624
    %971 = vmatprep.subr.bf16.mxu0 0
    %972 = vmatpush1.bf16.msra.mxu0 %v621
    %973 = vmatprep.subr.bf16.mxu0 0
    %974 = vmatpush1.bf16.msra.mxu0 %v618
    %975 = vmatprep.subr.bf16.mxu0 0
    %976 = vmatpush1.bf16.msra.mxu0 %v615
    %977 = vmatprep.subr.bf16.mxu0 0
    %978 = vmatpush1.bf16.msra.mxu0 %v612
    %979 = vmatprep.subr.bf16.mxu0 0
    %980 = vmatpush1.bf16.msra.mxu0 %v609
    %981 = vmatprep.subr.bf16.mxu0 0
    %982 = vmatpush1.bf16.msra.mxu0 %v606
    %983 = vmatprep.subr.bf16.mxu0 0
    %984 = vmatpush1.bf16.msra.mxu0 %v603
    %985 = vmatprep.subr.bf16.mxu0 0
    %986 = vmatpush2.bf16.msra.mxu0 %v648
    %987 = vmatprep.subr.bf16.mxu0 0
    %988 = vmatpush2.bf16.msra.mxu0 %v645
    %989 = vmatprep.subr.bf16.mxu0 0
    %990 = vmatpush2.bf16.msra.mxu0 %v642
    %991 = vmatprep.subr.bf16.mxu0 0
    %992 = vmatpush2.bf16.msra.mxu0 %v639
    %993 = vmatprep.subr.bf16.mxu0 0
    %994 = vmatpush2.bf16.msra.mxu0 %v636
    %995 = vmatprep.subr.bf16.mxu0 0
    %996 = vmatpush2.bf16.msra.mxu0 %v633
    %997 = vmatprep.subr.bf16.mxu0 0
    %998 = vmatpush2.bf16.msra.mxu0 %v630
    %999 = vmatprep.subr.bf16.mxu0 0
    %1000 = vmatpush2.bf16.msra.mxu0 %v627
    %1001 = vmatprep.mubr.bf16.mxu0 %v218
    %1002 = vmatmul.mubr.bf16.gmra.mxu0 %v217
    %v1003 = vpop.f32.mrf.mxu0
    %v1004 = vadd.f32 %v197, %v1003
    %v1005 = vpop.f32.mrf.mxu0
    %v1006 = vpop.f32.mrf.mxu0
    %v1007 = vadd.f32 %v197, %v1006
    %v1008 = vpop.f32.mrf.mxu0
    %1009 = vdwg.mxu0
    %1010 = vmatprep.subr.bf16.mxu0 0
    %1011 = vmatpush1.bf16.msra.mxu0 %v672
    %1012 = vmatprep.subr.bf16.mxu0 0
    %1013 = vmatpush1.bf16.msra.mxu0 %v669
    %1014 = vmatprep.subr.bf16.mxu0 0
    %1015 = vmatpush1.bf16.msra.mxu0 %v666
    %1016 = vmatprep.subr.bf16.mxu0 0
    %1017 = vmatpush1.bf16.msra.mxu0 %v663
    %1018 = vmatprep.subr.bf16.mxu0 0
    %1019 = vmatpush1.bf16.msra.mxu0 %v660
    %1020 = vmatprep.subr.bf16.mxu0 0
    %1021 = vmatpush1.bf16.msra.mxu0 %v657
    %1022 = vmatprep.subr.bf16.mxu0 0
    %1023 = vmatpush1.bf16.msra.mxu0 %v654
    %1024 = vmatprep.subr.bf16.mxu0 0
    %1025 = vmatpush1.bf16.msra.mxu0 %v651
    %1026 = vmatprep.subr.bf16.mxu0 0
    %1027 = vmatpush2.bf16.msra.mxu0 %v696
    %1028 = vmatprep.subr.bf16.mxu0 0
    %1029 = vmatpush2.bf16.msra.mxu0 %v693
    %1030 = vmatprep.subr.bf16.mxu0 0
    %1031 = vmatpush2.bf16.msra.mxu0 %v690
    %1032 = vmatprep.subr.bf16.mxu0 0
    %1033 = vmatpush2.bf16.msra.mxu0 %v687
    %1034 = vmatprep.subr.bf16.mxu0 0
    %1035 = vmatpush2.bf16.msra.mxu0 %v684
    %1036 = vmatprep.subr.bf16.mxu0 0
    %1037 = vmatpush2.bf16.msra.mxu0 %v681
    %1038 = vmatprep.subr.bf16.mxu0 0
    %1039 = vmatpush2.bf16.msra.mxu0 %v678
    %1040 = vmatprep.subr.bf16.mxu0 0
    %1041 = vmatpush2.bf16.msra.mxu0 %v675
    %1042 = vmatprep.mubr.bf16.mxu0 %v220
    %1043 = vmatmul.mubr.bf16.gmra.mxu0 %v219
    %v1044 = vpop.f32.mrf.mxu0
    %v1045 = vadd.f32 %v1004, %v1044
    %v1046 = vpop.f32.mrf.mxu0
    %v1047 = vpop.f32.mrf.mxu0
    %v1048 = vadd.f32 %v1007, %v1047
    %v1049 = vpop.f32.mrf.mxu0
    %1050 = vdwg.mxu0
    %1051 = vmatprep.subr.bf16.mxu0 0
    %1052 = vmatpush1.bf16.msra.mxu0 0
    %1053 = vmatprep.subr.bf16.mxu0 0
    %1054 = vmatpush1.bf16.msra.mxu0 0
    %1055 = vmatprep.subr.bf16.mxu0 0
    %1056 = vmatpush1.bf16.msra.mxu0 %v838
    %1057 = vmatprep.subr.bf16.mxu0 0
    %1058 = vmatpush1.bf16.msra.mxu0 %v711
    %1059 = vmatprep.subr.bf16.mxu0 0
    %1060 = vmatpush1.bf16.msra.mxu0 %v708
    %1061 = vmatprep.subr.bf16.mxu0 0
    %1062 = vmatpush1.bf16.msra.mxu0 %v705
    %1063 = vmatprep.subr.bf16.mxu0 0
    %1064 = vmatpush1.bf16.msra.mxu0 %v702
    %1065 = vmatprep.subr.bf16.mxu0 0
    %1066 = vmatpush1.bf16.msra.mxu0 %v699
    %1067 = vmatprep.subr.bf16.mxu0 0
    %1068 = vmatpush2.bf16.msra.mxu0 0
    %1069 = vmatprep.subr.bf16.mxu0 0
    %1070 = vmatpush2.bf16.msra.mxu0 0
    %1071 = vmatprep.subr.bf16.mxu0 0
    %1072 = vmatpush2.bf16.msra.mxu0 0
    %1073 = vmatprep.subr.bf16.mxu0 0
    %1074 = vmatpush2.bf16.msra.mxu0 0
    %1075 = vmatprep.subr.bf16.mxu0 0
    %1076 = vmatpush2.bf16.msra.mxu0 0
    %1077 = vmatprep.subr.bf16.mxu0 0
    %1078 = vmatpush2.bf16.msra.mxu0 0
    %1079 = vmatprep.subr.bf16.mxu0 0
    %1080 = vmatpush2.bf16.msra.mxu0 0
    %1081 = vmatprep.subr.bf16.mxu0 0
    %1082 = vmatpush2.bf16.msra.mxu0 0
    %1083 = vmatprep.mubr.bf16.mxu0 0
    %1084 = vmatmul.mubr.bf16.gmra.mxu0 %v828
    %v1085 = vpop.f32.mrf.mxu0
    %v1086 = vadd.f32 %v1045, %v1085
    %v1087 = vpop.f32.mrf.mxu0
    %v1088 = vpop.f32.mrf.mxu0
    %v1089 = vadd.f32 %v1048, %v1088
    %v1090 = vpop.f32.mrf.mxu0
    %1091 = vdwg.mxu0
    %v1092 = vmax.f32 %v961, 0.0
    %v1093 = vmax.f32 %v963, 0.0
    %v1094 = vmax.f32 %v1086, 0.0
    %v1095 = vmax.f32 %v965, 0.0
    %v1096 = vmax.f32 %v967, 0.0
    %v1097 = vmax.f32 %v1089, 0.0
    %v1098 = vpack.c.bf16 %v1095, %v1092
    %v1099 = vpack.c.bf16 %v1096, %v1093
    %v1100 = vpack.c.bf16 %v1097, %v1094
    %v1101 = vld [vmem:[%s3] sm:$0xff]
    %v1102 = vld [vmem:[%s3 + $0x8] sm:$0xff]
    %v1103 = vld [vmem:[%s3 + $0x10] sm:$0xff]
    %v1104 = vld [vmem:[%s3 + $0x18] sm:$0xff]
    %v1105 = vld [vmem:[%s3 + $0x20] sm:$0xff]
    %v1106 = vld [vmem:[%s3 + $0x28] sm:$0xf]
    %v1107 = vld [vmem:[%s3 + $0x2c] sm:$0xff]
    %v1108 = vld [vmem:[%s3 + $0x34] sm:$0xff]
    %v1109 = vld [vmem:[%s3 + $0x3c] sm:$0xff]
    %v1110 = vld [vmem:[%s3 + $0x44] sm:$0xff]
    %v1111 = vld [vmem:[%s3 + $0x4c] sm:$0xff]
    %v1112 = vld [vmem:[%s3 + $0x54] sm:$0xf]
    %v1113 = vld [vmem:[%s3 + $0x58] sm:$0xff]
    %v1114 = vld [vmem:[%s3 + $0x60] sm:$0xff]
    %v1115 = vld [vmem:[%s3 + $0x68] sm:$0xff]
    %v1116 = vld [vmem:[%s3 + $0x70] sm:$0xff]
    %v1117 = vld [vmem:[%s3 + $0x78] sm:$0xff]
    %v1118 = vld [vmem:[%s3 + $0x80] sm:$0xf]
    %v1119 = vld [vmem:[%s3 + $0x84] sm:$0xff]
    %v1120 = vld [vmem:[%s3 + $0x8c] sm:$0xff]
    %v1121 = vld [vmem:[%s3 + $0x94] sm:$0xff]
    %v1122 = vld [vmem:[%s3 + $0x9c] sm:$0xff]
    %v1123 = vld [vmem:[%s3 + $0xa4] sm:$0xff]
    %v1124 = vld [vmem:[%s3 + $0xac] sm:$0xf]
    %v1125 = vld [vmem:[%s3 + $0xb0] sm:$0xff]
    %v1126 = vld [vmem:[%s3 + $0xb8] sm:$0xff]
    %v1127 = vld [vmem:[%s3 + $0xc0] sm:$0xff]
    %v1128 = vld [vmem:[%s3 + $0xc8] sm:$0xff]
    %v1129 = vld [vmem:[%s3 + $0xd0] sm:$0xff]
    %v1130 = vld [vmem:[%s3 + $0xd8] sm:$0xf]
    %v1131 = vld [vmem:[%s3 + $0xdc] sm:$0xff]
    %v1132 = vld [vmem:[%s3 + $0xe4] sm:$0xff]
    %v1133 = vld [vmem:[%s3 + $0xec] sm:$0xff]
    %v1134 = vld [vmem:[%s3 + $0xf4] sm:$0xff]
    %v1135 = vld [vmem:[%s3 + $0xfc] sm:$0xff]
    %v1136 = vld [vmem:[%s3 + $0x104] sm:$0xf]
    %v1137 = vld [vmem:[%s3 + $0x108] sm:$0xff]
    %v1138 = vld [vmem:[%s3 + $0x110] sm:$0xff]
    %v1139 = vld [vmem:[%s3 + $0x118] sm:$0xff]
    %v1140 = vld [vmem:[%s3 + $0x120] sm:$0xff]
    %v1141 = vld [vmem:[%s3 + $0x128] sm:$0xff]
    %v1142 = vld [vmem:[%s3 + $0x130] sm:$0xf]
    %v1143 = vld [vmem:[%s3 + $0x134] sm:$0xff]
    %v1144 = vld [vmem:[%s3 + $0x13c] sm:$0xff]
    %v1145 = vld [vmem:[%s3 + $0x144] sm:$0xff]
    %v1146 = vld [vmem:[%s3 + $0x14c] sm:$0xff]
    %v1147 = vld [vmem:[%s3 + $0x154] sm:$0xff]
    %v1148 = vld [vmem:[%s3 + $0x15c] sm:$0xf]
    %v1149 = vld [vmem:[%s3 + $0x160] sm:$0xff]
    %v1150 = vld [vmem:[%s3 + $0x168] sm:$0xff]
    %v1151 = vld [vmem:[%s3 + $0x170] sm:$0xff]
    %v1152 = vld [vmem:[%s3 + $0x178] sm:$0xff]
    %v1153 = vld [vmem:[%s3 + $0x180] sm:$0xff]
    %v1154 = vld [vmem:[%s3 + $0x188] sm:$0xf]
    %v1155 = vld [vmem:[%s3 + $0x18c] sm:$0xff]
    %v1156 = vld [vmem:[%s3 + $0x194] sm:$0xff]
    %v1157 = vld [vmem:[%s3 + $0x19c] sm:$0xff]
    %v1158 = vld [vmem:[%s3 + $0x1a4] sm:$0xff]
    %v1159 = vld [vmem:[%s3 + $0x1ac] sm:$0xff]
    %v1160 = vld [vmem:[%s3 + $0x1b4] sm:$0xf]
    %v1161 = vld [vmem:[%s3 + $0x1b8] sm:$0xff]
    %v1162 = vld [vmem:[%s3 + $0x1c0] sm:$0xff]
    %v1163 = vld [vmem:[%s3 + $0x1c8] sm:$0xff]
    %v1164 = vld [vmem:[%s3 + $0x1d0] sm:$0xff]
    %v1165 = vld [vmem:[%s3 + $0x1d8] sm:$0xff]
    %v1166 = vld [vmem:[%s3 + $0x1e0] sm:$0xf]
    %v1167 = vld [vmem:[%s3 + $0x1e4] sm:$0xff]
    %v1168 = vld [vmem:[%s3 + $0x1ec] sm:$0xff]
    %v1169 = vld [vmem:[%s3 + $0x1f4] sm:$0xff]
    %v1170 = vld [vmem:[%s3 + $0x1fc] sm:$0xff]
    %v1171 = vld [vmem:[%s3 + $0x204] sm:$0xff]
    %v1172 = vld [vmem:[%s3 + $0x20c] sm:$0xf]
    %v1173 = vld [vmem:[%s3 + $0x210] sm:$0xff]
    %v1174 = vld [vmem:[%s3 + $0x218] sm:$0xff]
    %v1175 = vld [vmem:[%s3 + $0x220] sm:$0xff]
    %v1176 = vld [vmem:[%s3 + $0x228] sm:$0xff]
    %v1177 = vld [vmem:[%s3 + $0x230] sm:$0xff]
    %v1178 = vld [vmem:[%s3 + $0x238] sm:$0xf]
    %v1179 = vld [vmem:[%s3 + $0x23c] sm:$0xff]
    %v1180 = vld [vmem:[%s3 + $0x244] sm:$0xff]
    %v1181 = vld [vmem:[%s3 + $0x24c] sm:$0xff]
    %v1182 = vld [vmem:[%s3 + $0x254] sm:$0xff]
    %v1183 = vld [vmem:[%s3 + $0x25c] sm:$0xff]
    %v1184 = vld [vmem:[%s3 + $0x264] sm:$0xf]
    %v1185 = vld [vmem:[%s3 + $0x268] sm:$0xff]
    %v1186 = vld [vmem:[%s3 + $0x270] sm:$0xff]
    %v1187 = vld [vmem:[%s3 + $0x278] sm:$0xff]
    %v1188 = vld [vmem:[%s3 + $0x280] sm:$0xff]
    %v1189 = vld [vmem:[%s3 + $0x288] sm:$0xff]
    %v1190 = vld [vmem:[%s3 + $0x290] sm:$0xf]
    %v1191 = vld [vmem:[%s3 + $0x294] sm:$0xff]
    %v1192 = vld [vmem:[%s3 + $0x29c] sm:$0xff]
    %v1193 = vld [vmem:[%s3 + $0x2a4] sm:$0xff]
    %v1194 = vld [vmem:[%s3 + $0x2ac] sm:$0xff]
    %v1195 = vld [vmem:[%s3 + $0x2b4] sm:$0xff]
    %v1196 = vld [vmem:[%s3 + $0x2bc] sm:$0xf]
    %v1197 = vld [vmem:[%s3 + $0x2c0] sm:$0xff]
    %v1198 = vld [vmem:[%s3 + $0x2c8] sm:$0xff]
    %v1199 = vld [vmem:[%s3 + $0x2d0] sm:$0xff]
    %v1200 = vld [vmem:[%s3 + $0x2d8] sm:$0xff]
    %v1201 = vld [vmem:[%s3 + $0x2e0] sm:$0xff]
    %v1202 = vld [vmem:[%s3 + $0x2e8] sm:$0xf]
    %v1203 = vld [vmem:[%s3 + $0x2ec] sm:$0xff]
    %v1204 = vld [vmem:[%s3 + $0x2f4] sm:$0xff]
    %v1205 = vld [vmem:[%s3 + $0x2fc] sm:$0xff]
    %v1206 = vld [vmem:[%s3 + $0x304] sm:$0xff]
    %v1207 = vld [vmem:[%s3 + $0x30c] sm:$0xff]
    %v1208 = vld [vmem:[%s3 + $0x314] sm:$0xf]
    %v1209 = vld [vmem:[%s3 + $0x318] sm:$0xff]
    %v1210 = vld [vmem:[%s3 + $0x320] sm:$0xff]
    %v1211 = vld [vmem:[%s3 + $0x328] sm:$0xff]
    %v1212 = vld [vmem:[%s3 + $0x330] sm:$0xff]
    %v1213 = vld [vmem:[%s3 + $0x338] sm:$0xff]
    %v1214 = vld [vmem:[%s3 + $0x340] sm:$0xf]
    %v1215 = vld [vmem:[%s3 + $0x344] sm:$0xff]
    %v1216 = vld [vmem:[%s3 + $0x34c] sm:$0xff]
    %v1217 = vld [vmem:[%s3 + $0x354] sm:$0xff]
    %v1218 = vld [vmem:[%s3 + $0x35c] sm:$0xff]
    %v1219 = vld [vmem:[%s3 + $0x364] sm:$0xff]
    %v1220 = vld [vmem:[%s3 + $0x36c] sm:$0xf]
    %v1221 = vld [vmem:[%s3 + $0x370] sm:$0xff]
    %v1222 = vld [vmem:[%s3 + $0x378] sm:$0xff]
    %v1223 = vld [vmem:[%s3 + $0x380] sm:$0xff]
    %v1224 = vld [vmem:[%s3 + $0x388] sm:$0xff]
    %v1225 = vld [vmem:[%s3 + $0x390] sm:$0xff]
    %v1226 = vld [vmem:[%s3 + $0x398] sm:$0xf]
    %v1227 = vld [vmem:[%s3 + $0x39c] sm:$0xff]
    %v1228 = vld [vmem:[%s3 + $0x3a4] sm:$0xff]
    %v1229 = vld [vmem:[%s3 + $0x3ac] sm:$0xff]
    %v1230 = vld [vmem:[%s3 + $0x3b4] sm:$0xff]
    %v1231 = vld [vmem:[%s3 + $0x3bc] sm:$0xff]
    %v1232 = vld [vmem:[%s3 + $0x3c4] sm:$0xf]
    %v1233 = vld [vmem:[%s3 + $0x3c8] sm:$0xff]
    %v1234 = vld [vmem:[%s3 + $0x3d0] sm:$0xff]
    %v1235 = vld [vmem:[%s3 + $0x3d8] sm:$0xff]
    %v1236 = vld [vmem:[%s3 + $0x3e0] sm:$0xff]
    %v1237 = vld [vmem:[%s3 + $0x3e8] sm:$0xff]
    %v1238 = vld [vmem:[%s3 + $0x3f0] sm:$0xf]
    %v1239 = vld [vmem:[%s3 + $0x3f4] sm:$0xff]
    %v1240 = vld [vmem:[%s3 + $0x3fc] sm:$0xff]
    %v1241 = vld [vmem:[%s3 + $0x404] sm:$0xff]
    %v1242 = vld [vmem:[%s3 + $0x40c] sm:$0xff]
    %v1243 = vld [vmem:[%s3 + $0x414] sm:$0xff]
    %v1244 = vld [vmem:[%s3 + $0x41c] sm:$0xf]
    %v1245 = vld [vmem:[%s3 + $0x420] sm:$0xff]
    %v1246 = vld [vmem:[%s3 + $0x428] sm:$0xff]
    %v1247 = vld [vmem:[%s3 + $0x430] sm:$0xff]
    %v1248 = vld [vmem:[%s3 + $0x438] sm:$0xff]
    %v1249 = vld [vmem:[%s3 + $0x440] sm:$0xff]
    %v1250 = vld [vmem:[%s3 + $0x448] sm:$0xf]
    %v1251 = vld [vmem:[%s3 + $0x44c] sm:$0xff]
    %v1252 = vld [vmem:[%s3 + $0x454] sm:$0xff]
    %v1253 = vld [vmem:[%s3 + $0x45c] sm:$0xff]
    %v1254 = vld [vmem:[%s3 + $0x464] sm:$0xff]
    %v1255 = vld [vmem:[%s3 + $0x46c] sm:$0xff]
    %v1256 = vld [vmem:[%s3 + $0x474] sm:$0xf]
    %v1257 = vld [vmem:[%s3 + $0x478] sm:$0xff]
    %v1258 = vld [vmem:[%s3 + $0x480] sm:$0xff]
    %v1259 = vld [vmem:[%s3 + $0x488] sm:$0xff]
    %v1260 = vld [vmem:[%s3 + $0x490] sm:$0xff]
    %v1261 = vld [vmem:[%s3 + $0x498] sm:$0xff]
    %v1262 = vld [vmem:[%s3 + $0x4a0] sm:$0xf]
    %v1263 = vld [vmem:[%s3 + $0x4a4] sm:$0xff]
    %v1264 = vld [vmem:[%s3 + $0x4ac] sm:$0xff]
    %v1265 = vld [vmem:[%s3 + $0x4b4] sm:$0xff]
    %v1266 = vld [vmem:[%s3 + $0x4bc] sm:$0xff]
    %v1267 = vld [vmem:[%s3 + $0x4c4] sm:$0xff]
    %v1268 = vld [vmem:[%s3 + $0x4cc] sm:$0xf]
    %v1269 = vld [vmem:[%s3 + $0x4d0] sm:$0xff]
    %v1270 = vld [vmem:[%s3 + $0x4d8] sm:$0xff]
    %v1271 = vld [vmem:[%s3 + $0x4e0] sm:$0xff]
    %v1272 = vld [vmem:[%s3 + $0x4e8] sm:$0xff]
    %v1273 = vld [vmem:[%s3 + $0x4f0] sm:$0xff]
    %v1274 = vld [vmem:[%s3 + $0x4f8] sm:$0xf]
    %v1275 = vld [vmem:[%s3 + $0x4fc] sm:$0xff]
    %v1276 = vld [vmem:[%s3 + $0x504] sm:$0xff]
    %v1277 = vld [vmem:[%s3 + $0x50c] sm:$0xff]
    %v1278 = vld [vmem:[%s3 + $0x514] sm:$0xff]
    %v1279 = vld [vmem:[%s3 + $0x51c] sm:$0xff]
    %v1280 = vld [vmem:[%s3 + $0x524] sm:$0xf]
    %v1281 = vld [vmem:[%s3 + $0x528] sm:$0xff]
    %v1282 = vld [vmem:[%s3 + $0x530] sm:$0xff]
    %v1283 = vld [vmem:[%s3 + $0x538] sm:$0xff]
    %v1284 = vld [vmem:[%s3 + $0x540] sm:$0xff]
    %v1285 = vld [vmem:[%s3 + $0x548] sm:$0xff]
    %v1286 = vld [vmem:[%s3 + $0x550] sm:$0xf]
    %v1287 = vld [vmem:[%s3 + $0x554] sm:$0xff]
    %v1288 = vld [vmem:[%s3 + $0x55c] sm:$0xff]
    %v1289 = vld [vmem:[%s3 + $0x564] sm:$0xff]
    %v1290 = vld [vmem:[%s3 + $0x56c] sm:$0xff]
    %v1291 = vld [vmem:[%s3 + $0x574] sm:$0xff]
    %v1292 = vld [vmem:[%s3 + $0x57c] sm:$0xf]
    %v1293 = vld [vmem:[%s3 + $0x580] sm:$0xff]
    %v1294 = vld [vmem:[%s3 + $0x588] sm:$0xff]
    %v1295 = vld [vmem:[%s3 + $0x590] sm:$0xff]
    %v1296 = vld [vmem:[%s3 + $0x598] sm:$0xff]
    %v1297 = vld [vmem:[%s3 + $0x5a0] sm:$0xff]
    %v1298 = vld [vmem:[%s3 + $0x5a8] sm:$0xf]
    %v1299 = vld [vmem:[%s3 + $0x5ac] sm:$0xff]
    %v1300 = vld [vmem:[%s3 + $0x5b4] sm:$0xff]
    %v1301 = vld [vmem:[%s3 + $0x5bc] sm:$0xff]
    %v1302 = vld [vmem:[%s3 + $0x5c4] sm:$0xff]
    %v1303 = vld [vmem:[%s3 + $0x5cc] sm:$0xff]
    %v1304 = vld [vmem:[%s3 + $0x5d4] sm:$0xf]
    %v1305 = vld [vmem:[%s3 + $0x5d8] sm:$0xff]
    %v1306 = vld [vmem:[%s3 + $0x5e0] sm:$0xff]
    %v1307 = vld [vmem:[%s3 + $0x5e8] sm:$0xff]
    %v1308 = vld [vmem:[%s3 + $0x5f0] sm:$0xff]
    %v1309 = vld [vmem:[%s3 + $0x5f8] sm:$0xff]
    %v1310 = vld [vmem:[%s3 + $0x600] sm:$0xf]
    %v1311 = vld [vmem:[%s3 + $0x604] sm:$0xff]
    %v1312 = vld [vmem:[%s3 + $0x60c] sm:$0xff]
    %v1313 = vld [vmem:[%s3 + $0x614] sm:$0xff]
    %v1314 = vld [vmem:[%s3 + $0x61c] sm:$0xff]
    %v1315 = vld [vmem:[%s3 + $0x624] sm:$0xff]
    %v1316 = vld [vmem:[%s3 + $0x62c] sm:$0xf]
    %v1317 = vld [vmem:[%s3 + $0x630] sm:$0xff]
    %v1318 = vld [vmem:[%s3 + $0x638] sm:$0xff]
    %v1319 = vld [vmem:[%s3 + $0x640] sm:$0xff]
    %v1320 = vld [vmem:[%s3 + $0x648] sm:$0xff]
    %v1321 = vld [vmem:[%s3 + $0x650] sm:$0xff]
    %v1322 = vld [vmem:[%s3 + $0x658] sm:$0xf]
    %v1323 = vld [vmem:[%s3 + $0x65c] sm:$0x33]
    %v1324 = vld [vmem:[%s3 + $0x664] sm:$0x33]
    %v1325 = vld [vmem:[%s3 + $0x66c] sm:$0x33]
    %v1326 = vld [vmem:[%s3 + $0x674] sm:$0x33]
    %v1327 = vld [vmem:[%s3 + $0x67c] sm:$0x33]
    %v1328 = vld [vmem:[%s3 + $0x684] sm:$0x3]
    %v1557 = vunpack.c.l.b16 %v1101
    %v1558 = vunpack.c.h.b16 %v1101
    %v1559 = vunpack.c.l.b16 %v1102
    %v1560 = vunpack.c.h.b16 %v1102
    %v1561 = vunpack.c.l.b16 %v1103
    %v1562 = vunpack.c.h.b16 %v1103
    %v1563 = vunpack.c.l.b16 %v1104
    %v1564 = vunpack.c.h.b16 %v1104
    %v1565 = vunpack.c.l.b16 %v1105
    %v1566 = vunpack.c.h.b16 %v1105
    %v1567 = vunpack.c.l.b16 %v1106
    %v1568 = vunpack.c.l.b16 %v1107
    %v1569 = vunpack.c.h.b16 %v1107
    %v1570 = vunpack.c.l.b16 %v1108
    %v1571 = vunpack.c.h.b16 %v1108
    %v1572 = vunpack.c.l.b16 %v1109
    %v1573 = vunpack.c.h.b16 %v1109
    %v1574 = vunpack.c.l.b16 %v1110
    %v1575 = vunpack.c.h.b16 %v1110
    %v1576 = vunpack.c.l.b16 %v1111
    %v1577 = vunpack.c.h.b16 %v1111
    %v1578 = vunpack.c.l.b16 %v1112
    %v1579 = vunpack.c.l.b16 %v1113
    %v1580 = vunpack.c.h.b16 %v1113
    %v1581 = vunpack.c.l.b16 %v1114
    %v1582 = vunpack.c.h.b16 %v1114
    %v1583 = vunpack.c.l.b16 %v1115
    %v1584 = vunpack.c.h.b16 %v1115
    %v1585 = vunpack.c.l.b16 %v1116
    %v1586 = vunpack.c.h.b16 %v1116
    %v1587 = vunpack.c.l.b16 %v1117
    %v1588 = vunpack.c.h.b16 %v1117
    %v1589 = vunpack.c.l.b16 %v1118
    %v1590 = vunpack.c.l.b16 %v1119
    %v1591 = vunpack.c.h.b16 %v1119
    %v1592 = vunpack.c.l.b16 %v1120
    %v1593 = vunpack.c.h.b16 %v1120
    %v1594 = vunpack.c.l.b16 %v1121
    %v1595 = vunpack.c.h.b16 %v1121
    %v1596 = vunpack.c.l.b16 %v1122
    %v1597 = vunpack.c.h.b16 %v1122
    %v1598 = vunpack.c.l.b16 %v1123
    %v1599 = vunpack.c.h.b16 %v1123
    %v1600 = vunpack.c.l.b16 %v1124
    %v1601 = vunpack.c.l.b16 %v1125
    %v1602 = vunpack.c.h.b16 %v1125
    %v1603 = vunpack.c.l.b16 %v1126
    %v1604 = vunpack.c.h.b16 %v1126
    %v1605 = vunpack.c.l.b16 %v1127
    %v1606 = vunpack.c.h.b16 %v1127
    %v1607 = vunpack.c.l.b16 %v1128
    %v1608 = vunpack.c.h.b16 %v1128
    %v1609 = vunpack.c.l.b16 %v1129
    %v1610 = vunpack.c.h.b16 %v1129
    %v1611 = vunpack.c.l.b16 %v1130
    %v1612 = vunpack.c.l.b16 %v1131
    %v1613 = vunpack.c.h.b16 %v1131
    %v1614 = vunpack.c.l.b16 %v1132
    %v1615 = vunpack.c.h.b16 %v1132
    %v1616 = vunpack.c.l.b16 %v1133
    %v1617 = vunpack.c.h.b16 %v1133
    %v1618 = vunpack.c.l.b16 %v1134
    %v1619 = vunpack.c.h.b16 %v1134
    %v1620 = vunpack.c.l.b16 %v1135
    %v1621 = vunpack.c.h.b16 %v1135
    %v1622 = vunpack.c.l.b16 %v1136
    %v1623 = vunpack.c.l.b16 %v1137
    %v1624 = vunpack.c.h.b16 %v1137
    %v1625 = vunpack.c.l.b16 %v1138
    %v1626 = vunpack.c.h.b16 %v1138
    %v1627 = vunpack.c.l.b16 %v1139
    %v1628 = vunpack.c.h.b16 %v1139
    %v1629 = vunpack.c.l.b16 %v1140
    %v1630 = vunpack.c.h.b16 %v1140
    %v1631 = vunpack.c.l.b16 %v1141
    %v1632 = vunpack.c.h.b16 %v1141
    %v1633 = vunpack.c.l.b16 %v1142
    %v1634 = vunpack.c.l.b16 %v1143
    %v1635 = vunpack.c.h.b16 %v1143
    %v1636 = vunpack.c.l.b16 %v1144
    %v1637 = vunpack.c.h.b16 %v1144
    %v1638 = vunpack.c.l.b16 %v1145
    %v1639 = vunpack.c.h.b16 %v1145
    %v1640 = vunpack.c.l.b16 %v1146
    %v1641 = vunpack.c.h.b16 %v1146
    %v1642 = vunpack.c.l.b16 %v1147
    %v1643 = vunpack.c.h.b16 %v1147
    %v1644 = vunpack.c.l.b16 %v1148
    %v1645 = vunpack.c.l.b16 %v1149
    %v1646 = vunpack.c.h.b16 %v1149
    %v1647 = vunpack.c.l.b16 %v1150
    %v1648 = vunpack.c.h.b16 %v1150
    %v1649 = vunpack.c.l.b16 %v1151
    %v1650 = vunpack.c.h.b16 %v1151
    %v1651 = vunpack.c.l.b16 %v1152
    %v1652 = vunpack.c.h.b16 %v1152
    %v1653 = vunpack.c.l.b16 %v1153
    %v1654 = vunpack.c.h.b16 %v1153
    %v1655 = vunpack.c.l.b16 %v1154
    %v1656 = vunpack.c.l.b16 %v1155
    %v1657 = vunpack.c.h.b16 %v1155
    %v1658 = vunpack.c.l.b16 %v1156
    %v1659 = vunpack.c.h.b16 %v1156
    %v1660 = vunpack.c.l.b16 %v1157
    %v1661 = vunpack.c.h.b16 %v1157
    %v1662 = vunpack.c.l.b16 %v1158
    %v1663 = vunpack.c.h.b16 %v1158
    %v1664 = vunpack.c.l.b16 %v1159
    %v1665 = vunpack.c.h.b16 %v1159
    %v1666 = vunpack.c.l.b16 %v1160
    %v1667 = vunpack.c.l.b16 %v1161
    %v1668 = vunpack.c.h.b16 %v1161
    %v1669 = vunpack.c.l.b16 %v1162
    %v1670 = vunpack.c.h.b16 %v1162
    %v1671 = vunpack.c.l.b16 %v1163
    %v1672 = vunpack.c.h.b16 %v1163
    %v1673 = vunpack.c.l.b16 %v1164
    %v1674 = vunpack.c.h.b16 %v1164
    %v1675 = vunpack.c.l.b16 %v1165
    %v1676 = vunpack.c.h.b16 %v1165
    %v1677 = vunpack.c.l.b16 %v1166
    %v1678 = vunpack.c.l.b16 %v1167
    %v1679 = vunpack.c.h.b16 %v1167
    %v1680 = vunpack.c.l.b16 %v1168
    %v1681 = vunpack.c.h.b16 %v1168
    %v1682 = vunpack.c.l.b16 %v1169
    %v1683 = vunpack.c.h.b16 %v1169
    %v1684 = vunpack.c.l.b16 %v1170
    %v1685 = vunpack.c.h.b16 %v1170
    %v1686 = vunpack.c.l.b16 %v1171
    %v1687 = vunpack.c.h.b16 %v1171
    %v1688 = vunpack.c.l.b16 %v1172
    %v1689 = vunpack.c.l.b16 %v1173
    %v1690 = vunpack.c.h.b16 %v1173
    %v1691 = vunpack.c.l.b16 %v1174
    %v1692 = vunpack.c.h.b16 %v1174
    %v1693 = vunpack.c.l.b16 %v1175
    %v1694 = vunpack.c.h.b16 %v1175
    %v1695 = vunpack.c.l.b16 %v1176
    %v1696 = vunpack.c.h.b16 %v1176
    %v1697 = vunpack.c.l.b16 %v1177
    %v1698 = vunpack.c.h.b16 %v1177
    %v1699 = vunpack.c.l.b16 %v1178
    %v1700 = vunpack.c.l.b16 %v1179
    %v1701 = vunpack.c.h.b16 %v1179
    %v1702 = vunpack.c.l.b16 %v1180
    %v1703 = vunpack.c.h.b16 %v1180
    %v1704 = vunpack.c.l.b16 %v1181
    %v1705 = vunpack.c.h.b16 %v1181
    %v1706 = vunpack.c.l.b16 %v1182
    %v1707 = vunpack.c.h.b16 %v1182
    %v1708 = vunpack.c.l.b16 %v1183
    %v1709 = vunpack.c.h.b16 %v1183
    %v1710 = vunpack.c.l.b16 %v1184
    %v1711 = vunpack.c.l.b16 %v1185
    %v1712 = vunpack.c.h.b16 %v1185
    %v1713 = vunpack.c.l.b16 %v1186
    %v1714 = vunpack.c.h.b16 %v1186
    %v1715 = vunpack.c.l.b16 %v1187
    %v1716 = vunpack.c.h.b16 %v1187
    %v1717 = vunpack.c.l.b16 %v1188
    %v1718 = vunpack.c.h.b16 %v1188
    %v1719 = vunpack.c.l.b16 %v1189
    %v1720 = vunpack.c.h.b16 %v1189
    %v1721 = vunpack.c.l.b16 %v1190
    %v1722 = vunpack.c.l.b16 %v1191
    %v1723 = vunpack.c.h.b16 %v1191
    %v1724 = vunpack.c.l.b16 %v1192
    %v1725 = vunpack.c.h.b16 %v1192
    %v1726 = vunpack.c.l.b16 %v1193
    %v1727 = vunpack.c.h.b16 %v1193
    %v1728 = vunpack.c.l.b16 %v1194
    %v1729 = vunpack.c.h.b16 %v1194
    %v1730 = vunpack.c.l.b16 %v1195
    %v1731 = vunpack.c.h.b16 %v1195
    %v1732 = vunpack.c.l.b16 %v1196
    %v1733 = vunpack.c.l.b16 %v1197
    %v1734 = vunpack.c.h.b16 %v1197
    %v1735 = vunpack.c.l.b16 %v1198
    %v1736 = vunpack.c.h.b16 %v1198
    %v1737 = vunpack.c.l.b16 %v1199
    %v1738 = vunpack.c.h.b16 %v1199
    %v1739 = vunpack.c.l.b16 %v1200
    %v1740 = vunpack.c.h.b16 %v1200
    %v1741 = vunpack.c.l.b16 %v1201
    %v1742 = vunpack.c.h.b16 %v1201
    %v1743 = vunpack.c.l.b16 %v1202
    %v1744 = vunpack.c.l.b16 %v1203
    %v1745 = vunpack.c.h.b16 %v1203
    %v1746 = vunpack.c.l.b16 %v1204
    %v1747 = vunpack.c.h.b16 %v1204
    %v1748 = vunpack.c.l.b16 %v1205
    %v1749 = vunpack.c.h.b16 %v1205
    %v1750 = vunpack.c.l.b16 %v1206
    %v1751 = vunpack.c.h.b16 %v1206
    %v1752 = vunpack.c.l.b16 %v1207
    %v1753 = vunpack.c.h.b16 %v1207
    %v1754 = vunpack.c.l.b16 %v1208
    %v1755 = vunpack.c.l.b16 %v1209
    %v1756 = vunpack.c.h.b16 %v1209
    %v1757 = vunpack.c.l.b16 %v1210
    %v1758 = vunpack.c.h.b16 %v1210
    %v1759 = vunpack.c.l.b16 %v1211
    %v1760 = vunpack.c.h.b16 %v1211
    %v1761 = vunpack.c.l.b16 %v1212
    %v1762 = vunpack.c.h.b16 %v1212
    %v1763 = vunpack.c.l.b16 %v1213
    %v1764 = vunpack.c.h.b16 %v1213
    %v1765 = vunpack.c.l.b16 %v1214
    %v1766 = vunpack.c.l.b16 %v1215
    %v1767 = vunpack.c.h.b16 %v1215
    %v1768 = vunpack.c.l.b16 %v1216
    %v1769 = vunpack.c.h.b16 %v1216
    %v1770 = vunpack.c.l.b16 %v1217
    %v1771 = vunpack.c.h.b16 %v1217
    %v1772 = vunpack.c.l.b16 %v1218
    %v1773 = vunpack.c.h.b16 %v1218
    %v1774 = vunpack.c.l.b16 %v1219
    %v1775 = vunpack.c.h.b16 %v1219
    %v1776 = vunpack.c.l.b16 %v1220
    %v1777 = vunpack.c.l.b16 %v1221
    %v1778 = vunpack.c.h.b16 %v1221
    %v1779 = vunpack.c.l.b16 %v1222
    %v1780 = vunpack.c.h.b16 %v1222
    %v1781 = vunpack.c.l.b16 %v1223
    %v1782 = vunpack.c.h.b16 %v1223
    %v1783 = vunpack.c.l.b16 %v1224
    %v1784 = vunpack.c.h.b16 %v1224
    %v1785 = vunpack.c.l.b16 %v1225
    %v1786 = vunpack.c.h.b16 %v1225
    %v1787 = vunpack.c.l.b16 %v1226
    %v1788 = vunpack.c.l.b16 %v1227
    %v1789 = vunpack.c.h.b16 %v1227
    %v1790 = vunpack.c.l.b16 %v1228
    %v1791 = vunpack.c.h.b16 %v1228
    %v1792 = vunpack.c.l.b16 %v1229
    %v1793 = vunpack.c.h.b16 %v1229
    %v1794 = vunpack.c.l.b16 %v1230
    %v1795 = vunpack.c.h.b16 %v1230
    %v1796 = vunpack.c.l.b16 %v1231
    %v1797 = vunpack.c.h.b16 %v1231
    %v1798 = vunpack.c.l.b16 %v1232
    %v1799 = vunpack.c.l.b16 %v1233
    %v1800 = vunpack.c.h.b16 %v1233
    %v1801 = vunpack.c.l.b16 %v1234
    %v1802 = vunpack.c.h.b16 %v1234
    %v1803 = vunpack.c.l.b16 %v1235
    %v1804 = vunpack.c.h.b16 %v1235
    %v1805 = vunpack.c.l.b16 %v1236
    %v1806 = vunpack.c.h.b16 %v1236
    %v1807 = vunpack.c.l.b16 %v1237
    %v1808 = vunpack.c.h.b16 %v1237
    %v1809 = vunpack.c.l.b16 %v1238
    %v1810 = vunpack.c.l.b16 %v1239
    %v1811 = vunpack.c.h.b16 %v1239
    %v1812 = vunpack.c.l.b16 %v1240
    %v1813 = vunpack.c.h.b16 %v1240
    %v1814 = vunpack.c.l.b16 %v1241
    %v1815 = vunpack.c.h.b16 %v1241
    %v1816 = vunpack.c.l.b16 %v1242
    %v1817 = vunpack.c.h.b16 %v1242
    %v1818 = vunpack.c.l.b16 %v1243
    %v1819 = vunpack.c.h.b16 %v1243
    %v1820 = vunpack.c.l.b16 %v1244
    %v1821 = vunpack.c.l.b16 %v1245
    %v1822 = vunpack.c.h.b16 %v1245
    %v1823 = vunpack.c.l.b16 %v1246
    %v1824 = vunpack.c.h.b16 %v1246
    %v1825 = vunpack.c.l.b16 %v1247
    %v1826 = vunpack.c.h.b16 %v1247
    %v1827 = vunpack.c.l.b16 %v1248
    %v1828 = vunpack.c.h.b16 %v1248
    %v1829 = vunpack.c.l.b16 %v1249
    %v1830 = vunpack.c.h.b16 %v1249
    %v1831 = vunpack.c.l.b16 %v1250
    %v1832 = vunpack.c.l.b16 %v1251
    %v1833 = vunpack.c.h.b16 %v1251
    %v1834 = vunpack.c.l.b16 %v1252
    %v1835 = vunpack.c.h.b16 %v1252
    %v1836 = vunpack.c.l.b16 %v1253
    %v1837 = vunpack.c.h.b16 %v1253
    %v1838 = vunpack.c.l.b16 %v1254
    %v1839 = vunpack.c.h.b16 %v1254
    %v1840 = vunpack.c.l.b16 %v1255
    %v1841 = vunpack.c.h.b16 %v1255
    %v1842 = vunpack.c.l.b16 %v1256
    %v1843 = vunpack.c.l.b16 %v1257
    %v1844 = vunpack.c.h.b16 %v1257
    %v1845 = vunpack.c.l.b16 %v1258
    %v1846 = vunpack.c.h.b16 %v1258
    %v1847 = vunpack.c.l.b16 %v1259
    %v1848 = vunpack.c.h.b16 %v1259
    %v1849 = vunpack.c.l.b16 %v1260
    %v1850 = vunpack.c.h.b16 %v1260
    %v1851 = vunpack.c.l.b16 %v1261
    %v1852 = vunpack.c.h.b16 %v1261
    %v1853 = vunpack.c.l.b16 %v1262
    %v1854 = vunpack.c.l.b16 %v1263
    %v1855 = vunpack.c.h.b16 %v1263
    %v1856 = vunpack.c.l.b16 %v1264
    %v1857 = vunpack.c.h.b16 %v1264
    %v1858 = vunpack.c.l.b16 %v1265
    %v1859 = vunpack.c.h.b16 %v1265
    %v1860 = vunpack.c.l.b16 %v1266
    %v1861 = vunpack.c.h.b16 %v1266
    %v1862 = vunpack.c.l.b16 %v1267
    %v1863 = vunpack.c.h.b16 %v1267
    %v1864 = vunpack.c.l.b16 %v1268
    %v1865 = vunpack.c.l.b16 %v1269
    %v1866 = vunpack.c.h.b16 %v1269
    %v1867 = vunpack.c.l.b16 %v1270
    %v1868 = vunpack.c.h.b16 %v1270
    %v1869 = vunpack.c.l.b16 %v1271
    %v1870 = vunpack.c.h.b16 %v1271
    %v1871 = vunpack.c.l.b16 %v1272
    %v1872 = vunpack.c.h.b16 %v1272
    %v1873 = vunpack.c.l.b16 %v1273
    %v1874 = vunpack.c.h.b16 %v1273
    %v1875 = vunpack.c.l.b16 %v1274
    %v1876 = vunpack.c.l.b16 %v1275
    %v1877 = vunpack.c.h.b16 %v1275
    %v1878 = vunpack.c.l.b16 %v1276
    %v1879 = vunpack.c.h.b16 %v1276
    %v1880 = vunpack.c.l.b16 %v1277
    %v1881 = vunpack.c.h.b16 %v1277
    %v1882 = vunpack.c.l.b16 %v1278
    %v1883 = vunpack.c.h.b16 %v1278
    %v1884 = vunpack.c.l.b16 %v1279
    %v1885 = vunpack.c.h.b16 %v1279
    %v1886 = vunpack.c.l.b16 %v1280
    %v1887 = vunpack.c.l.b16 %v1281
    %v1888 = vunpack.c.h.b16 %v1281
    %v1889 = vunpack.c.l.b16 %v1282
    %v1890 = vunpack.c.h.b16 %v1282
    %v1891 = vunpack.c.l.b16 %v1283
    %v1892 = vunpack.c.h.b16 %v1283
    %v1893 = vunpack.c.l.b16 %v1284
    %v1894 = vunpack.c.h.b16 %v1284
    %v1895 = vunpack.c.l.b16 %v1285
    %v1896 = vunpack.c.h.b16 %v1285
    %v1897 = vunpack.c.l.b16 %v1286
    %v1898 = vunpack.c.l.b16 %v1287
    %v1899 = vunpack.c.h.b16 %v1287
    %v1900 = vunpack.c.l.b16 %v1288
    %v1901 = vunpack.c.h.b16 %v1288
    %v1902 = vunpack.c.l.b16 %v1289
    %v1903 = vunpack.c.h.b16 %v1289
    %v1904 = vunpack.c.l.b16 %v1290
    %v1905 = vunpack.c.h.b16 %v1290
    %v1906 = vunpack.c.l.b16 %v1291
    %v1907 = vunpack.c.h.b16 %v1291
    %v1908 = vunpack.c.l.b16 %v1292
    %v1909 = vunpack.c.l.b16 %v1293
    %v1910 = vunpack.c.h.b16 %v1293
    %v1911 = vunpack.c.l.b16 %v1294
    %v1912 = vunpack.c.h.b16 %v1294
    %v1913 = vunpack.c.l.b16 %v1295
    %v1914 = vunpack.c.h.b16 %v1295
    %v1915 = vunpack.c.l.b16 %v1296
    %v1916 = vunpack.c.h.b16 %v1296
    %v1917 = vunpack.c.l.b16 %v1297
    %v1918 = vunpack.c.h.b16 %v1297
    %v1919 = vunpack.c.l.b16 %v1298
    %v1920 = vunpack.c.l.b16 %v1299
    %v1921 = vunpack.c.h.b16 %v1299
    %v1922 = vunpack.c.l.b16 %v1300
    %v1923 = vunpack.c.h.b16 %v1300
    %v1924 = vunpack.c.l.b16 %v1301
    %v1925 = vunpack.c.h.b16 %v1301
    %v1926 = vunpack.c.l.b16 %v1302
    %v1927 = vunpack.c.h.b16 %v1302
    %v1928 = vunpack.c.l.b16 %v1303
    %v1929 = vunpack.c.h.b16 %v1303
    %v1930 = vunpack.c.l.b16 %v1304
    %v1931 = vunpack.c.l.b16 %v1305
    %v1932 = vunpack.c.h.b16 %v1305
    %v1933 = vunpack.c.l.b16 %v1306
    %v1934 = vunpack.c.h.b16 %v1306
    %v1935 = vunpack.c.l.b16 %v1307
    %v1936 = vunpack.c.h.b16 %v1307
    %v1937 = vunpack.c.l.b16 %v1308
    %v1938 = vunpack.c.h.b16 %v1308
    %v1939 = vunpack.c.l.b16 %v1309
    %v1940 = vunpack.c.h.b16 %v1309
    %v1941 = vunpack.c.l.b16 %v1310
    %v1942 = vunpack.c.l.b16 %v1311
    %v1943 = vunpack.c.h.b16 %v1311
    %v1944 = vunpack.c.l.b16 %v1312
    %v1945 = vunpack.c.h.b16 %v1312
    %v1946 = vunpack.c.l.b16 %v1313
    %v1947 = vunpack.c.h.b16 %v1313
    %v1948 = vunpack.c.l.b16 %v1314
    %v1949 = vunpack.c.h.b16 %v1314
    %v1950 = vunpack.c.l.b16 %v1315
    %v1951 = vunpack.c.h.b16 %v1315
    %v1952 = vunpack.c.l.b16 %v1316
    %v1953 = vunpack.c.l.b16 %v1317
    %v1954 = vunpack.c.h.b16 %v1317
    %v1955 = vunpack.c.l.b16 %v1318
    %v1956 = vunpack.c.h.b16 %v1318
    %v1957 = vunpack.c.l.b16 %v1319
    %v1958 = vunpack.c.h.b16 %v1319
    %v1959 = vunpack.c.l.b16 %v1320
    %v1960 = vunpack.c.h.b16 %v1320
    %v1961 = vunpack.c.l.b16 %v1321
    %v1962 = vunpack.c.h.b16 %v1321
    %v1963 = vunpack.c.l.b16 %v1322
    %v1964 = vunpack.c.l.b16 %v1323
    %v1965 = vunpack.c.h.b16 %v1323
    %v1966 = vunpack.c.l.b16 %v1324
    %v1967 = vunpack.c.h.b16 %v1324
    %v1968 = vunpack.c.l.b16 %v1325
    %v1969 = vunpack.c.h.b16 %v1325
    %v1970 = vunpack.c.l.b16 %v1326
    %v1971 = vunpack.c.h.b16 %v1326
    %v1972 = vunpack.c.l.b16 %v1327
    %v1973 = vunpack.c.h.b16 %v1327
    %v1974 = vunpack.c.l.b16 %v1328
    %v1975 = vpack.c.b16 %v1568, %v1557
    %v1976 = vpack.c.b16 %v1569, %v1558
    %v1977 = vpack.c.b16 %v1570, %v1559
    %v1978 = vpack.c.b16 %v1571, %v1560
    %v1979 = vpack.c.b16 %v1572, %v1561
    %v1980 = vpack.c.b16 %v1573, %v1562
    %v1981 = vpack.c.b16 %v1574, %v1563
    %v1982 = vpack.c.b16 %v1575, %v1564
    %v1983 = vpack.c.b16 %v1576, %v1565
    %v1984 = vpack.c.b16 %v1577, %v1566
    %v1985 = vpack.c.b16 %v1578, %v1567
    %v1986 = vpack.c.b16 %v1590, %v1579
    %v1987 = vpack.c.b16 %v1591, %v1580
    %v1988 = vpack.c.b16 %v1592, %v1581
    %v1989 = vpack.c.b16 %v1593, %v1582
    %v1990 = vpack.c.b16 %v1594, %v1583
    %v1991 = vpack.c.b16 %v1595, %v1584
    %v1992 = vpack.c.b16 %v1596, %v1585
    %v1993 = vpack.c.b16 %v1597, %v1586
    %v1994 = vpack.c.b16 %v1598, %v1587
    %v1995 = vpack.c.b16 %v1599, %v1588
    %v1996 = vpack.c.b16 %v1600, %v1589
    %v1997 = vpack.c.b16 %v1612, %v1601
    %v1998 = vpack.c.b16 %v1613, %v1602
    %v1999 = vpack.c.b16 %v1614, %v1603
    %v2000 = vpack.c.b16 %v1615, %v1604
    %v2001 = vpack.c.b16 %v1616, %v1605
    %v2002 = vpack.c.b16 %v1617, %v1606
    %v2003 = vpack.c.b16 %v1618, %v1607
    %v2004 = vpack.c.b16 %v1619, %v1608
    %v2005 = vpack.c.b16 %v1620, %v1609
    %v2006 = vpack.c.b16 %v1621, %v1610
    %v2007 = vpack.c.b16 %v1622, %v1611
    %v2008 = vpack.c.b16 %v1634, %v1623
    %v2009 = vpack.c.b16 %v1635, %v1624
    %v2010 = vpack.c.b16 %v1636, %v1625
    %v2011 = vpack.c.b16 %v1637, %v1626
    %v2012 = vpack.c.b16 %v1638, %v1627
    %v2013 = vpack.c.b16 %v1639, %v1628
    %v2014 = vpack.c.b16 %v1640, %v1629
    %v2015 = vpack.c.b16 %v1641, %v1630
    %v2016 = vpack.c.b16 %v1642, %v1631
    %v2017 = vpack.c.b16 %v1643, %v1632
    %v2018 = vpack.c.b16 %v1644, %v1633
    %v2019 = vpack.c.b16 %v1656, %v1645
    %v2020 = vpack.c.b16 %v1657, %v1646
    %v2021 = vpack.c.b16 %v1658, %v1647
    %v2022 = vpack.c.b16 %v1659, %v1648
    %v2023 = vpack.c.b16 %v1660, %v1649
    %v2024 = vpack.c.b16 %v1661, %v1650
    %v2025 = vpack.c.b16 %v1662, %v1651
    %v2026 = vpack.c.b16 %v1663, %v1652
    %v2027 = vpack.c.b16 %v1664, %v1653
    %v2028 = vpack.c.b16 %v1665, %v1654
    %v2029 = vpack.c.b16 %v1666, %v1655
    %v2030 = vpack.c.b16 %v1678, %v1667
    %v2031 = vpack.c.b16 %v1679, %v1668
    %v2032 = vpack.c.b16 %v1680, %v1669
    %v2033 = vpack.c.b16 %v1681, %v1670
    %v2034 = vpack.c.b16 %v1682, %v1671
    %v2035 = vpack.c.b16 %v1683, %v1672
    %v2036 = vpack.c.b16 %v1684, %v1673
    %v2037 = vpack.c.b16 %v1685, %v1674
    %v2038 = vpack.c.b16 %v1686, %v1675
    %v2039 = vpack.c.b16 %v1687, %v1676
    %v2040 = vpack.c.b16 %v1688, %v1677
    %v2041 = vpack.c.b16 %v1700, %v1689
    %v2042 = vpack.c.b16 %v1701, %v1690
    %v2043 = vpack.c.b16 %v1702, %v1691
    %v2044 = vpack.c.b16 %v1703, %v1692
    %v2045 = vpack.c.b16 %v1704, %v1693
    %v2046 = vpack.c.b16 %v1705, %v1694
    %v2047 = vpack.c.b16 %v1706, %v1695
    %v2048 = vpack.c.b16 %v1707, %v1696
    %v2049 = vpack.c.b16 %v1708, %v1697
    %v2050 = vpack.c.b16 %v1709, %v1698
    %v2051 = vpack.c.b16 %v1710, %v1699
    %v2052 = vpack.c.b16 %v1722, %v1711
    %v2053 = vpack.c.b16 %v1723, %v1712
    %v2054 = vpack.c.b16 %v1724, %v1713
    %v2055 = vpack.c.b16 %v1725, %v1714
    %v2056 = vpack.c.b16 %v1726, %v1715
    %v2057 = vpack.c.b16 %v1727, %v1716
    %v2058 = vpack.c.b16 %v1728, %v1717
    %v2059 = vpack.c.b16 %v1729, %v1718
    %v2060 = vpack.c.b16 %v1730, %v1719
    %v2061 = vpack.c.b16 %v1731, %v1720
    %v2062 = vpack.c.b16 %v1732, %v1721
    %v2063 = vpack.c.b16 %v1744, %v1733
    %v2064 = vpack.c.b16 %v1745, %v1734
    %v2065 = vpack.c.b16 %v1746, %v1735
    %v2066 = vpack.c.b16 %v1747, %v1736
    %v2067 = vpack.c.b16 %v1748, %v1737
    %v2068 = vpack.c.b16 %v1749, %v1738
    %v2069 = vpack.c.b16 %v1750, %v1739
    %v2070 = vpack.c.b16 %v1751, %v1740
    %v2071 = vpack.c.b16 %v1752, %v1741
    %v2072 = vpack.c.b16 %v1753, %v1742
    %v2073 = vpack.c.b16 %v1754, %v1743
    %v2074 = vpack.c.b16 %v1766, %v1755
    %v2075 = vpack.c.b16 %v1767, %v1756
    %v2076 = vpack.c.b16 %v1768, %v1757
    %v2077 = vpack.c.b16 %v1769, %v1758
    %v2078 = vpack.c.b16 %v1770, %v1759
    %v2079 = vpack.c.b16 %v1771, %v1760
    %v2080 = vpack.c.b16 %v1772, %v1761
    %v2081 = vpack.c.b16 %v1773, %v1762
    %v2082 = vpack.c.b16 %v1774, %v1763
    %v2083 = vpack.c.b16 %v1775, %v1764
    %v2084 = vpack.c.b16 %v1776, %v1765
    %v2085 = vpack.c.b16 %v1788, %v1777
    %v2086 = vpack.c.b16 %v1789, %v1778
    %v2087 = vpack.c.b16 %v1790, %v1779
    %v2088 = vpack.c.b16 %v1791, %v1780
    %v2089 = vpack.c.b16 %v1792, %v1781
    %v2090 = vpack.c.b16 %v1793, %v1782
    %v2091 = vpack.c.b16 %v1794, %v1783
    %v2092 = vpack.c.b16 %v1795, %v1784
    %v2093 = vpack.c.b16 %v1796, %v1785
    %v2094 = vpack.c.b16 %v1797, %v1786
    %v2095 = vpack.c.b16 %v1798, %v1787
    %v2096 = vpack.c.b16 %v1810, %v1799
    %v2097 = vpack.c.b16 %v1811, %v1800
    %v2098 = vpack.c.b16 %v1812, %v1801
    %v2099 = vpack.c.b16 %v1813, %v1802
    %v2100 = vpack.c.b16 %v1814, %v1803
    %v2101 = vpack.c.b16 %v1815, %v1804
    %v2102 = vpack.c.b16 %v1816, %v1805
    %v2103 = vpack.c.b16 %v1817, %v1806
    %v2104 = vpack.c.b16 %v1818, %v1807
    %v2105 = vpack.c.b16 %v1819, %v1808
    %v2106 = vpack.c.b16 %v1820, %v1809
    %v2107 = vpack.c.b16 %v1832, %v1821
    %v2108 = vpack.c.b16 %v1833, %v1822
    %v2109 = vpack.c.b16 %v1834, %v1823
    %v2110 = vpack.c.b16 %v1835, %v1824
    %v2111 = vpack.c.b16 %v1836, %v1825
    %v2112 = vpack.c.b16 %v1837, %v1826
    %v2113 = vpack.c.b16 %v1838, %v1827
    %v2114 = vpack.c.b16 %v1839, %v1828
    %v2115 = vpack.c.b16 %v1840, %v1829
    %v2116 = vpack.c.b16 %v1841, %v1830
    %v2117 = vpack.c.b16 %v1842, %v1831
    %v2118 = vpack.c.b16 %v1854, %v1843
    %v2119 = vpack.c.b16 %v1855, %v1844
    %v2120 = vpack.c.b16 %v1856, %v1845
    %v2121 = vpack.c.b16 %v1857, %v1846
    %v2122 = vpack.c.b16 %v1858, %v1847
    %v2123 = vpack.c.b16 %v1859, %v1848
    %v2124 = vpack.c.b16 %v1860, %v1849
    %v2125 = vpack.c.b16 %v1861, %v1850
    %v2126 = vpack.c.b16 %v1862, %v1851
    %v2127 = vpack.c.b16 %v1863, %v1852
    %v2128 = vpack.c.b16 %v1864, %v1853
    %v2129 = vpack.c.b16 %v1876, %v1865
    %v2130 = vpack.c.b16 %v1877, %v1866
    %v2131 = vpack.c.b16 %v1878, %v1867
    %v2132 = vpack.c.b16 %v1879, %v1868
    %v2133 = vpack.c.b16 %v1880, %v1869
    %v2134 = vpack.c.b16 %v1881, %v1870
    %v2135 = vpack.c.b16 %v1882, %v1871
    %v2136 = vpack.c.b16 %v1883, %v1872
    %v2137 = vpack.c.b16 %v1884, %v1873
    %v2138 = vpack.c.b16 %v1885, %v1874
    %v2139 = vpack.c.b16 %v1886, %v1875
    %v2140 = vpack.c.b16 %v1898, %v1887
    %v2141 = vpack.c.b16 %v1899, %v1888
    %v2142 = vpack.c.b16 %v1900, %v1889
    %v2143 = vpack.c.b16 %v1901, %v1890
    %v2144 = vpack.c.b16 %v1902, %v1891
    %v2145 = vpack.c.b16 %v1903, %v1892
    %v2146 = vpack.c.b16 %v1904, %v1893
    %v2147 = vpack.c.b16 %v1905, %v1894
    %v2148 = vpack.c.b16 %v1906, %v1895
    %v2149 = vpack.c.b16 %v1907, %v1896
    %v2150 = vpack.c.b16 %v1908, %v1897
    %v2151 = vpack.c.b16 %v1920, %v1909
    %v2152 = vpack.c.b16 %v1921, %v1910
    %v2153 = vpack.c.b16 %v1922, %v1911
    %v2154 = vpack.c.b16 %v1923, %v1912
    %v2155 = vpack.c.b16 %v1924, %v1913
    %v2156 = vpack.c.b16 %v1925, %v1914
    %v2157 = vpack.c.b16 %v1926, %v1915
    %v2158 = vpack.c.b16 %v1927, %v1916
    %v2159 = vpack.c.b16 %v1928, %v1917
    %v2160 = vpack.c.b16 %v1929, %v1918
    %v2161 = vpack.c.b16 %v1930, %v1919
    %v2162 = vpack.c.b16 %v1942, %v1931
    %v2163 = vpack.c.b16 %v1943, %v1932
    %v2164 = vpack.c.b16 %v1944, %v1933
    %v2165 = vpack.c.b16 %v1945, %v1934
    %v2166 = vpack.c.b16 %v1946, %v1935
    %v2167 = vpack.c.b16 %v1947, %v1936
    %v2168 = vpack.c.b16 %v1948, %v1937
    %v2169 = vpack.c.b16 %v1949, %v1938
    %v2170 = vpack.c.b16 %v1950, %v1939
    %v2171 = vpack.c.b16 %v1951, %v1940
    %v2172 = vpack.c.b16 %v1952, %v1941
    %v2173 = vpack.c.b16 %v1964, %v1953
    %v2174 = vpack.c.b16 %v1965, %v1954
    %v2175 = vpack.c.b16 %v1966, %v1955
    %v2176 = vpack.c.b16 %v1967, %v1956
    %v2177 = vpack.c.b16 %v1968, %v1957
    %v2178 = vpack.c.b16 %v1969, %v1958
    %v2179 = vpack.c.b16 %v1970, %v1959
    %v2180 = vpack.c.b16 %v1971, %v1960
    %v2181 = vpack.c.b16 %v1972, %v1961
    %v2182 = vpack.c.b16 %v1973, %v1962
    %v2183 = vpack.c.b16 %v1974, %v1963
    %vm2382 = vcmask 359424
    %v2384 = vsel %vm2382, %v1100, 0
    %vm2386 = vcmask 1045504
    %v2388 = vsel %vm2386, %v2173, 0
    %v2391 = vsel %vm2386, %v2174, 0
    %v2394 = vsel %vm2386, %v2175, 0
    %v2397 = vsel %vm2386, %v2176, 0
    %v2400 = vsel %vm2386, %v2177, 0
    %v2403 = vsel %vm2386, %v2178, 0
    %v2406 = vsel %vm2386, %v2179, 0
    %v2409 = vsel %vm2386, %v2180, 0
    %v2412 = vsel %vm2386, %v2181, 0
    %v2415 = vsel %vm2386, %v2182, 0
    %v2418 = vsel %vm2386, %v2183, 0
    %2420 = vmatprep.subr.bf16.mxu0 %v2053
    %2421 = vmatpush1.bf16.msra.mxu0 %v2052
    %2422 = vmatprep.subr.bf16.mxu0 %v2042
    %2423 = vmatpush1.bf16.msra.mxu0 %v2041
    %2424 = vmatprep.subr.bf16.mxu0 %v2031
    %2425 = vmatpush1.bf16.msra.mxu0 %v2030
    %2426 = vmatprep.subr.bf16.mxu0 %v2020
    %2427 = vmatpush1.bf16.msra.mxu0 %v2019
    %2428 = vmatprep.subr.bf16.mxu0 %v2009
    %2429 = vmatpush1.bf16.msra.mxu0 %v2008
    %2430 = vmatprep.subr.bf16.mxu0 %v1998
    %2431 = vmatpush1.bf16.msra.mxu0 %v1997
    %2432 = vmatprep.subr.bf16.mxu0 %v1987
    %2433 = vmatpush1.bf16.msra.mxu0 %v1986
    %2434 = vmatprep.subr.bf16.mxu0 %v1976
    %2435 = vmatpush1.bf16.msra.mxu0 %v1975
    %2436 = vmatprep.subr.bf16.mxu0 %v2141
    %2437 = vmatpush2.bf16.msra.mxu0 %v2140
    %2438 = vmatprep.subr.bf16.mxu0 %v2130
    %2439 = vmatpush2.bf16.msra.mxu0 %v2129
    %2440 = vmatprep.subr.bf16.mxu0 %v2119
    %2441 = vmatpush2.bf16.msra.mxu0 %v2118
    %2442 = vmatprep.subr.bf16.mxu0 %v2108
    %2443 = vmatpush2.bf16.msra.mxu0 %v2107
    %2444 = vmatprep.subr.bf16.mxu0 %v2097
    %2445 = vmatpush2.bf16.msra.mxu0 %v2096
    %2446 = vmatprep.subr.bf16.mxu0 %v2086
    %2447 = vmatpush2.bf16.msra.mxu0 %v2085
    %2448 = vmatprep.subr.bf16.mxu0 %v2075
    %2449 = vmatpush2.bf16.msra.mxu0 %v2074
    %2450 = vmatprep.subr.bf16.mxu0 %v2064
    %2451 = vmatpush2.bf16.msra.mxu0 %v2063
    %2452 = vmatprep.mubr.bf16.mxu0 %v1099
    %2453 = vmatmul.mubr.bf16.gmra.mxu0 %v1098
    %v2454 = vpop.f32.mrf.mxu0
    %v2455 = vadd.f32 0.0, %v2454
    %v2456 = vpop.f32.mrf.mxu0
    %v2457 = vadd.f32 0.0, %v2456
    %v2458 = vpop.f32.mrf.mxu0
    %v2459 = vadd.f32 0.0, %v2458
    %v2460 = vpop.f32.mrf.mxu0
    %v2461 = vadd.f32 0.0, %v2460
    %2462 = vdwg.mxu0
    %2463 = vmatprep.subr.bf16.mxu0 0
    %2464 = vmatpush1.bf16.msra.mxu0 0
    %2465 = vmatprep.subr.bf16.mxu0 0
    %2466 = vmatpush1.bf16.msra.mxu0 0
    %2467 = vmatprep.subr.bf16.mxu0 0
    %2468 = vmatpush1.bf16.msra.mxu0 0
    %2469 = vmatprep.subr.bf16.mxu0 0
    %2470 = vmatpush1.bf16.msra.mxu0 0
    %2471 = vmatprep.subr.bf16.mxu0 0
    %2472 = vmatpush1.bf16.msra.mxu0 0
    %2473 = vmatprep.subr.bf16.mxu0 %v2391
    %2474 = vmatpush1.bf16.msra.mxu0 %v2388
    %2475 = vmatprep.subr.bf16.mxu0 %v2163
    %2476 = vmatpush1.bf16.msra.mxu0 %v2162
    %2477 = vmatprep.subr.bf16.mxu0 %v2152
    %2478 = vmatpush1.bf16.msra.mxu0 %v2151
    %2479 = vmatprep.subr.bf16.mxu0 0
    %2480 = vmatpush2.bf16.msra.mxu0 0
    %2481 = vmatprep.subr.bf16.mxu0 0
    %2482 = vmatpush2.bf16.msra.mxu0 0
    %2483 = vmatprep.subr.bf16.mxu0 0
    %2484 = vmatpush2.bf16.msra.mxu0 0
    %2485 = vmatprep.subr.bf16.mxu0 0
    %2486 = vmatpush2.bf16.msra.mxu0 0
    %2487 = vmatprep.subr.bf16.mxu0 0
    %2488 = vmatpush2.bf16.msra.mxu0 0
    %2489 = vmatprep.subr.bf16.mxu0 0
    %2490 = vmatpush2.bf16.msra.mxu0 0
    %2491 = vmatprep.subr.bf16.mxu0 0
    %2492 = vmatpush2.bf16.msra.mxu0 0
    %2493 = vmatprep.subr.bf16.mxu0 0
    %2494 = vmatpush2.bf16.msra.mxu0 0
    %2495 = vmatprep.mubr.bf16.mxu0 0
    %2496 = vmatmul.mubr.bf16.gmra.mxu0 %v2384
    %v2497 = vpop.f32.mrf.mxu0
    %v2498 = vadd.f32 %v2455, %v2497
    %v2499 = vpop.f32.mrf.mxu0
    %v2500 = vadd.f32 %v2457, %v2499
    %v2501 = vpop.f32.mrf.mxu0
    %v2502 = vadd.f32 %v2459, %v2501
    %v2503 = vpop.f32.mrf.mxu0
    %v2504 = vadd.f32 %v2461, %v2503
    %2505 = vdwg.mxu0
    %2506 = vmatprep.subr.bf16.mxu0 %v2055
    %2507 = vmatpush1.bf16.msra.mxu0 %v2054
    %2508 = vmatprep.subr.bf16.mxu0 %v2044
    %2509 = vmatpush1.bf16.msra.mxu0 %v2043
    %2510 = vmatprep.subr.bf16.mxu0 %v2033
    %2511 = vmatpush1.bf16.msra.mxu0 %v2032
    %2512 = vmatprep.subr.bf16.mxu0 %v2022
    %2513 = vmatpush1.bf16.msra.mxu0 %v2021
    %2514 = vmatprep.subr.bf16.mxu0 %v2011
    %2515 = vmatpush1.bf16.msra.mxu0 %v2010
    %2516 = vmatprep.subr.bf16.mxu0 %v2000
    %2517 = vmatpush1.bf16.msra.mxu0 %v1999
    %2518 = vmatprep.subr.bf16.mxu0 %v1989
    %2519 = vmatpush1.bf16.msra.mxu0 %v1988
    %2520 = vmatprep.subr.bf16.mxu0 %v1978
    %2521 = vmatpush1.bf16.msra.mxu0 %v1977
    %2522 = vmatprep.subr.bf16.mxu0 %v2143
    %2523 = vmatpush2.bf16.msra.mxu0 %v2142
    %2524 = vmatprep.subr.bf16.mxu0 %v2132
    %2525 = vmatpush2.bf16.msra.mxu0 %v2131
    %2526 = vmatprep.subr.bf16.mxu0 %v2121
    %2527 = vmatpush2.bf16.msra.mxu0 %v2120
    %2528 = vmatprep.subr.bf16.mxu0 %v2110
    %2529 = vmatpush2.bf16.msra.mxu0 %v2109
    %2530 = vmatprep.subr.bf16.mxu0 %v2099
    %2531 = vmatpush2.bf16.msra.mxu0 %v2098
    %2532 = vmatprep.subr.bf16.mxu0 %v2088
    %2533 = vmatpush2.bf16.msra.mxu0 %v2087
    %2534 = vmatprep.subr.bf16.mxu0 %v2077
    %2535 = vmatpush2.bf16.msra.mxu0 %v2076
    %2536 = vmatprep.subr.bf16.mxu0 %v2066
    %2537 = vmatpush2.bf16.msra.mxu0 %v2065
    %2538 = vmatprep.mubr.bf16.mxu0 %v1099
    %2539 = vmatmul.mubr.bf16.gmra.mxu0 %v1098
    %v2540 = vpop.f32.mrf.mxu0
    %v2541 = vadd.f32 0.0, %v2540
    %v2542 = vpop.f32.mrf.mxu0
    %v2543 = vadd.f32 0.0, %v2542
    %v2544 = vpop.f32.mrf.mxu0
    %v2545 = vadd.f32 0.0, %v2544
    %v2546 = vpop.f32.mrf.mxu0
    %v2547 = vadd.f32 0.0, %v2546
    %2548 = vdwg.mxu0
    %2549 = vmatprep.subr.bf16.mxu0 0
    %2550 = vmatpush1.bf16.msra.mxu0 0
    %2551 = vmatprep.subr.bf16.mxu0 0
    %2552 = vmatpush1.bf16.msra.mxu0 0
    %2553 = vmatprep.subr.bf16.mxu0 0
    %2554 = vmatpush1.bf16.msra.mxu0 0
    %2555 = vmatprep.subr.bf16.mxu0 0
    %2556 = vmatpush1.bf16.msra.mxu0 0
    %2557 = vmatprep.subr.bf16.mxu0 0
    %2558 = vmatpush1.bf16.msra.mxu0 0
    %2559 = vmatprep.subr.bf16.mxu0 %v2397
    %2560 = vmatpush1.bf16.msra.mxu0 %v2394
    %2561 = vmatprep.subr.bf16.mxu0 %v2165
    %2562 = vmatpush1.bf16.msra.mxu0 %v2164
    %2563 = vmatprep.subr.bf16.mxu0 %v2154
    %2564 = vmatpush1.bf16.msra.mxu0 %v2153
    %2565 = vmatprep.subr.bf16.mxu0 0
    %2566 = vmatpush2.bf16.msra.mxu0 0
    %2567 = vmatprep.subr.bf16.mxu0 0
    %2568 = vmatpush2.bf16.msra.mxu0 0
    %2569 = vmatprep.subr.bf16.mxu0 0
    %2570 = vmatpush2.bf16.msra.mxu0 0
    %2571 = vmatprep.subr.bf16.mxu0 0
    %2572 = vmatpush2.bf16.msra.mxu0 0
    %2573 = vmatprep.subr.bf16.mxu0 0
    %2574 = vmatpush2.bf16.msra.mxu0 0
    %2575 = vmatprep.subr.bf16.mxu0 0
    %2576 = vmatpush2.bf16.msra.mxu0 0
    %2577 = vmatprep.subr.bf16.mxu0 0
    %2578 = vmatpush2.bf16.msra.mxu0 0
    %2579 = vmatprep.subr.bf16.mxu0 0
    %2580 = vmatpush2.bf16.msra.mxu0 0
    %2581 = vmatprep.mubr.bf16.mxu0 0
    %2582 = vmatmul.mubr.bf16.gmra.mxu0 %v2384
    %v2583 = vpop.f32.mrf.mxu0
    %v2584 = vadd.f32 %v2541, %v2583
    %v2585 = vpop.f32.mrf.mxu0
    %v2586 = vadd.f32 %v2543, %v2585
    %v2587 = vpop.f32.mrf.mxu0
    %v2588 = vadd.f32 %v2545, %v2587
    %v2589 = vpop.f32.mrf.mxu0
    %v2590 = vadd.f32 %v2547, %v2589
    %2591 = vdwg.mxu0
    %2592 = vmatprep.subr.bf16.mxu0 %v2057
    %2593 = vmatpush1.bf16.msra.mxu0 %v2056
    %2594 = vmatprep.subr.bf16.mxu0 %v2046
    %2595 = vmatpush1.bf16.msra.mxu0 %v2045
    %2596 = vmatprep.subr.bf16.mxu0 %v2035
    %2597 = vmatpush1.bf16.msra.mxu0 %v2034
    %2598 = vmatprep.subr.bf16.mxu0 %v2024
    %2599 = vmatpush1.bf16.msra.mxu0 %v2023
    %2600 = vmatprep.subr.bf16.mxu0 %v2013
    %2601 = vmatpush1.bf16.msra.mxu0 %v2012
    %2602 = vmatprep.subr.bf16.mxu0 %v2002
    %2603 = vmatpush1.bf16.msra.mxu0 %v2001
    %2604 = vmatprep.subr.bf16.mxu0 %v1991
    %2605 = vmatpush1.bf16.msra.mxu0 %v1990
    %2606 = vmatprep.subr.bf16.mxu0 %v1980
    %2607 = vmatpush1.bf16.msra.mxu0 %v1979
    %2608 = vmatprep.subr.bf16.mxu0 %v2145
    %2609 = vmatpush2.bf16.msra.mxu0 %v2144
    %2610 = vmatprep.subr.bf16.mxu0 %v2134
    %2611 = vmatpush2.bf16.msra.mxu0 %v2133
    %2612 = vmatprep.subr.bf16.mxu0 %v2123
    %2613 = vmatpush2.bf16.msra.mxu0 %v2122
    %2614 = vmatprep.subr.bf16.mxu0 %v2112
    %2615 = vmatpush2.bf16.msra.mxu0 %v2111
    %2616 = vmatprep.subr.bf16.mxu0 %v2101
    %2617 = vmatpush2.bf16.msra.mxu0 %v2100
    %2618 = vmatprep.subr.bf16.mxu0 %v2090
    %2619 = vmatpush2.bf16.msra.mxu0 %v2089
    %2620 = vmatprep.subr.bf16.mxu0 %v2079
    %2621 = vmatpush2.bf16.msra.mxu0 %v2078
    %2622 = vmatprep.subr.bf16.mxu0 %v2068
    %2623 = vmatpush2.bf16.msra.mxu0 %v2067
    %2624 = vmatprep.mubr.bf16.mxu0 %v1099
    %2625 = vmatmul.mubr.bf16.gmra.mxu0 %v1098
    %v2626 = vpop.f32.mrf.mxu0
    %v2627 = vadd.f32 0.0, %v2626
    %v2628 = vpop.f32.mrf.mxu0
    %v2629 = vadd.f32 0.0, %v2628
    %v2630 = vpop.f32.mrf.mxu0
    %v2631 = vadd.f32 0.0, %v2630
    %v2632 = vpop.f32.mrf.mxu0
    %v2633 = vadd.f32 0.0, %v2632
    %2634 = vdwg.mxu0
    %2635 = vmatprep.subr.bf16.mxu0 0
    %2636 = vmatpush1.bf16.msra.mxu0 0
    %2637 = vmatprep.subr.bf16.mxu0 0
    %2638 = vmatpush1.bf16.msra.mxu0 0
    %2639 = vmatprep.subr.bf16.mxu0 0
    %2640 = vmatpush1.bf16.msra.mxu0 0
    %2641 = vmatprep.subr.bf16.mxu0 0
    %2642 = vmatpush1.bf16.msra.mxu0 0
    %2643 = vmatprep.subr.bf16.mxu0 0
    %2644 = vmatpush1.bf16.msra.mxu0 0
    %2645 = vmatprep.subr.bf16.mxu0 %v2403
    %2646 = vmatpush1.bf16.msra.mxu0 %v2400
    %2647 = vmatprep.subr.bf16.mxu0 %v2167
    %2648 = vmatpush1.bf16.msra.mxu0 %v2166
    %2649 = vmatprep.subr.bf16.mxu0 %v2156
    %2650 = vmatpush1.bf16.msra.mxu0 %v2155
    %2651 = vmatprep.subr.bf16.mxu0 0
    %2652 = vmatpush2.bf16.msra.mxu0 0
    %2653 = vmatprep.subr.bf16.mxu0 0
    %2654 = vmatpush2.bf16.msra.mxu0 0
    %2655 = vmatprep.subr.bf16.mxu0 0
    %2656 = vmatpush2.bf16.msra.mxu0 0
    %2657 = vmatprep.subr.bf16.mxu0 0
    %2658 = vmatpush2.bf16.msra.mxu0 0
    %2659 = vmatprep.subr.bf16.mxu0 0
    %2660 = vmatpush2.bf16.msra.mxu0 0
    %2661 = vmatprep.subr.bf16.mxu0 0
    %2662 = vmatpush2.bf16.msra.mxu0 0
    %2663 = vmatprep.subr.bf16.mxu0 0
    %2664 = vmatpush2.bf16.msra.mxu0 0
    %2665 = vmatprep.subr.bf16.mxu0 0
    %2666 = vmatpush2.bf16.msra.mxu0 0
    %2667 = vmatprep.mubr.bf16.mxu0 0
    %2668 = vmatmul.mubr.bf16.gmra.mxu0 %v2384
    %v2669 = vpop.f32.mrf.mxu0
    %v2670 = vadd.f32 %v2627, %v2669
    %v2671 = vpop.f32.mrf.mxu0
    %v2672 = vadd.f32 %v2629, %v2671
    %v2673 = vpop.f32.mrf.mxu0
    %v2674 = vadd.f32 %v2631, %v2673
    %v2675 = vpop.f32.mrf.mxu0
    %v2676 = vadd.f32 %v2633, %v2675
    %2677 = vdwg.mxu0
    %2678 = vmatprep.subr.bf16.mxu0 %v2059
    %2679 = vmatpush1.bf16.msra.mxu0 %v2058
    %2680 = vmatprep.subr.bf16.mxu0 %v2048
    %2681 = vmatpush1.bf16.msra.mxu0 %v2047
    %2682 = vmatprep.subr.bf16.mxu0 %v2037
    %2683 = vmatpush1.bf16.msra.mxu0 %v2036
    %2684 = vmatprep.subr.bf16.mxu0 %v2026
    %2685 = vmatpush1.bf16.msra.mxu0 %v2025
    %2686 = vmatprep.subr.bf16.mxu0 %v2015
    %2687 = vmatpush1.bf16.msra.mxu0 %v2014
    %2688 = vmatprep.subr.bf16.mxu0 %v2004
    %2689 = vmatpush1.bf16.msra.mxu0 %v2003
    %2690 = vmatprep.subr.bf16.mxu0 %v1993
    %2691 = vmatpush1.bf16.msra.mxu0 %v1992
    %2692 = vmatprep.subr.bf16.mxu0 %v1982
    %2693 = vmatpush1.bf16.msra.mxu0 %v1981
    %2694 = vmatprep.subr.bf16.mxu0 %v2147
    %2695 = vmatpush2.bf16.msra.mxu0 %v2146
    %2696 = vmatprep.subr.bf16.mxu0 %v2136
    %2697 = vmatpush2.bf16.msra.mxu0 %v2135
    %2698 = vmatprep.subr.bf16.mxu0 %v2125
    %2699 = vmatpush2.bf16.msra.mxu0 %v2124
    %2700 = vmatprep.subr.bf16.mxu0 %v2114
    %2701 = vmatpush2.bf16.msra.mxu0 %v2113
    %2702 = vmatprep.subr.bf16.mxu0 %v2103
    %2703 = vmatpush2.bf16.msra.mxu0 %v2102
    %2704 = vmatprep.subr.bf16.mxu0 %v2092
    %2705 = vmatpush2.bf16.msra.mxu0 %v2091
    %2706 = vmatprep.subr.bf16.mxu0 %v2081
    %2707 = vmatpush2.bf16.msra.mxu0 %v2080
    %2708 = vmatprep.subr.bf16.mxu0 %v2070
    %2709 = vmatpush2.bf16.msra.mxu0 %v2069
    %2710 = vmatprep.mubr.bf16.mxu0 %v1099
    %2711 = vmatmul.mubr.bf16.gmra.mxu0 %v1098
    %v2712 = vpop.f32.mrf.mxu0
    %v2713 = vadd.f32 0.0, %v2712
    %v2714 = vpop.f32.mrf.mxu0
    %v2715 = vadd.f32 0.0, %v2714
    %v2716 = vpop.f32.mrf.mxu0
    %v2717 = vadd.f32 0.0, %v2716
    %v2718 = vpop.f32.mrf.mxu0
    %v2719 = vadd.f32 0.0, %v2718
    %2720 = vdwg.mxu0
    %2721 = vmatprep.subr.bf16.mxu0 0
    %2722 = vmatpush1.bf16.msra.mxu0 0
    %2723 = vmatprep.subr.bf16.mxu0 0
    %2724 = vmatpush1.bf16.msra.mxu0 0
    %2725 = vmatprep.subr.bf16.mxu0 0
    %2726 = vmatpush1.bf16.msra.mxu0 0
    %2727 = vmatprep.subr.bf16.mxu0 0
    %2728 = vmatpush1.bf16.msra.mxu0 0
    %2729 = vmatprep.subr.bf16.mxu0 0
    %2730 = vmatpush1.bf16.msra.mxu0 0
    %2731 = vmatprep.subr.bf16.mxu0 %v2409
    %2732 = vmatpush1.bf16.msra.mxu0 %v2406
    %2733 = vmatprep.subr.bf16.mxu0 %v2169
    %2734 = vmatpush1.bf16.msra.mxu0 %v2168
    %2735 = vmatprep.subr.bf16.mxu0 %v2158
    %2736 = vmatpush1.bf16.msra.mxu0 %v2157
    %2737 = vmatprep.subr.bf16.mxu0 0
    %2738 = vmatpush2.bf16.msra.mxu0 0
    %2739 = vmatprep.subr.bf16.mxu0 0
    %2740 = vmatpush2.bf16.msra.mxu0 0
    %2741 = vmatprep.subr.bf16.mxu0 0
    %2742 = vmatpush2.bf16.msra.mxu0 0
    %2743 = vmatprep.subr.bf16.mxu0 0
    %2744 = vmatpush2.bf16.msra.mxu0 0
    %2745 = vmatprep.subr.bf16.mxu0 0
    %2746 = vmatpush2.bf16.msra.mxu0 0
    %2747 = vmatprep.subr.bf16.mxu0 0
    %2748 = vmatpush2.bf16.msra.mxu0 0
    %2749 = vmatprep.subr.bf16.mxu0 0
    %2750 = vmatpush2.bf16.msra.mxu0 0
    %2751 = vmatprep.subr.bf16.mxu0 0
    %2752 = vmatpush2.bf16.msra.mxu0 0
    %2753 = vmatprep.mubr.bf16.mxu0 0
    %2754 = vmatmul.mubr.bf16.gmra.mxu0 %v2384
    %v2755 = vpop.f32.mrf.mxu0
    %v2756 = vadd.f32 %v2713, %v2755
    %v2757 = vpop.f32.mrf.mxu0
    %v2758 = vadd.f32 %v2715, %v2757
    %v2759 = vpop.f32.mrf.mxu0
    %v2760 = vadd.f32 %v2717, %v2759
    %v2761 = vpop.f32.mrf.mxu0
    %v2762 = vadd.f32 %v2719, %v2761
    %2763 = vdwg.mxu0
    %2764 = vmatprep.subr.bf16.mxu0 %v2061
    %2765 = vmatpush1.bf16.msra.mxu0 %v2060
    %2766 = vmatprep.subr.bf16.mxu0 %v2050
    %2767 = vmatpush1.bf16.msra.mxu0 %v2049
    %2768 = vmatprep.subr.bf16.mxu0 %v2039
    %2769 = vmatpush1.bf16.msra.mxu0 %v2038
    %2770 = vmatprep.subr.bf16.mxu0 %v2028
    %2771 = vmatpush1.bf16.msra.mxu0 %v2027
    %2772 = vmatprep.subr.bf16.mxu0 %v2017
    %2773 = vmatpush1.bf16.msra.mxu0 %v2016
    %2774 = vmatprep.subr.bf16.mxu0 %v2006
    %2775 = vmatpush1.bf16.msra.mxu0 %v2005
    %2776 = vmatprep.subr.bf16.mxu0 %v1995
    %2777 = vmatpush1.bf16.msra.mxu0 %v1994
    %2778 = vmatprep.subr.bf16.mxu0 %v1984
    %2779 = vmatpush1.bf16.msra.mxu0 %v1983
    %2780 = vmatprep.subr.bf16.mxu0 %v2149
    %2781 = vmatpush2.bf16.msra.mxu0 %v2148
    %2782 = vmatprep.subr.bf16.mxu0 %v2138
    %2783 = vmatpush2.bf16.msra.mxu0 %v2137
    %2784 = vmatprep.subr.bf16.mxu0 %v2127
    %2785 = vmatpush2.bf16.msra.mxu0 %v2126
    %2786 = vmatprep.subr.bf16.mxu0 %v2116
    %2787 = vmatpush2.bf16.msra.mxu0 %v2115
    %2788 = vmatprep.subr.bf16.mxu0 %v2105
    %2789 = vmatpush2.bf16.msra.mxu0 %v2104
    %2790 = vmatprep.subr.bf16.mxu0 %v2094
    %2791 = vmatpush2.bf16.msra.mxu0 %v2093
    %2792 = vmatprep.subr.bf16.mxu0 %v2083
    %2793 = vmatpush2.bf16.msra.mxu0 %v2082
    %2794 = vmatprep.subr.bf16.mxu0 %v2072
    %2795 = vmatpush2.bf16.msra.mxu0 %v2071
    %2796 = vmatprep.mubr.bf16.mxu0 %v1099
    %2797 = vmatmul.mubr.bf16.gmra.mxu0 %v1098
    %v2798 = vpop.f32.mrf.mxu0
    %v2799 = vadd.f32 0.0, %v2798
    %v2800 = vpop.f32.mrf.mxu0
    %v2801 = vadd.f32 0.0, %v2800
    %v2802 = vpop.f32.mrf.mxu0
    %v2803 = vadd.f32 0.0, %v2802
    %v2804 = vpop.f32.mrf.mxu0
    %v2805 = vadd.f32 0.0, %v2804
    %2806 = vdwg.mxu0
    %2807 = vmatprep.subr.bf16.mxu0 0
    %2808 = vmatpush1.bf16.msra.mxu0 0
    %2809 = vmatprep.subr.bf16.mxu0 0
    %2810 = vmatpush1.bf16.msra.mxu0 0
    %2811 = vmatprep.subr.bf16.mxu0 0
    %2812 = vmatpush1.bf16.msra.mxu0 0
    %2813 = vmatprep.subr.bf16.mxu0 0
    %2814 = vmatpush1.bf16.msra.mxu0 0
    %2815 = vmatprep.subr.bf16.mxu0 0
    %2816 = vmatpush1.bf16.msra.mxu0 0
    %2817 = vmatprep.subr.bf16.mxu0 %v2415
    %2818 = vmatpush1.bf16.msra.mxu0 %v2412
    %2819 = vmatprep.subr.bf16.mxu0 %v2171
    %2820 = vmatpush1.bf16.msra.mxu0 %v2170
    %2821 = vmatprep.subr.bf16.mxu0 %v2160
    %2822 = vmatpush1.bf16.msra.mxu0 %v2159
    %2823 = vmatprep.subr.bf16.mxu0 0
    %2824 = vmatpush2.bf16.msra.mxu0 0
    %2825 = vmatprep.subr.bf16.mxu0 0
    %2826 = vmatpush2.bf16.msra.mxu0 0
    %2827 = vmatprep.subr.bf16.mxu0 0
    %2828 = vmatpush2.bf16.msra.mxu0 0
    %2829 = vmatprep.subr.bf16.mxu0 0
    %2830 = vmatpush2.bf16.msra.mxu0 0
    %2831 = vmatprep.subr.bf16.mxu0 0
    %2832 = vmatpush2.bf16.msra.mxu0 0
    %2833 = vmatprep.subr.bf16.mxu0 0
    %2834 = vmatpush2.bf16.msra.mxu0 0
    %2835 = vmatprep.subr.bf16.mxu0 0
    %2836 = vmatpush2.bf16.msra.mxu0 0
    %2837 = vmatprep.subr.bf16.mxu0 0
    %2838 = vmatpush2.bf16.msra.mxu0 0
    %2839 = vmatprep.mubr.bf16.mxu0 0
    %2840 = vmatmul.mubr.bf16.gmra.mxu0 %v2384
    %v2841 = vpop.f32.mrf.mxu0
    %v2842 = vadd.f32 %v2799, %v2841
    %v2843 = vpop.f32.mrf.mxu0
    %v2844 = vadd.f32 %v2801, %v2843
    %v2845 = vpop.f32.mrf.mxu0
    %v2846 = vadd.f32 %v2803, %v2845
    %v2847 = vpop.f32.mrf.mxu0
    %v2848 = vadd.f32 %v2805, %v2847
    %2849 = vdwg.mxu0
    %2850 = vmatprep.subr.bf16.mxu0 0
    %2851 = vmatpush1.bf16.msra.mxu0 %v2062
    %2852 = vmatprep.subr.bf16.mxu0 0
    %2853 = vmatpush1.bf16.msra.mxu0 %v2051
    %2854 = vmatprep.subr.bf16.mxu0 0
    %2855 = vmatpush1.bf16.msra.mxu0 %v2040
    %2856 = vmatprep.subr.bf16.mxu0 0
    %2857 = vmatpush1.bf16.msra.mxu0 %v2029
    %2858 = vmatprep.subr.bf16.mxu0 0
    %2859 = vmatpush1.bf16.msra.mxu0 %v2018
    %2860 = vmatprep.subr.bf16.mxu0 0
    %2861 = vmatpush1.bf16.msra.mxu0 %v2007
    %2862 = vmatprep.subr.bf16.mxu0 0
    %2863 = vmatpush1.bf16.msra.mxu0 %v1996
    %2864 = vmatprep.subr.bf16.mxu0 0
    %2865 = vmatpush1.bf16.msra.mxu0 %v1985
    %2866 = vmatprep.subr.bf16.mxu0 0
    %2867 = vmatpush2.bf16.msra.mxu0 %v2150
    %2868 = vmatprep.subr.bf16.mxu0 0
    %2869 = vmatpush2.bf16.msra.mxu0 %v2139
    %2870 = vmatprep.subr.bf16.mxu0 0
    %2871 = vmatpush2.bf16.msra.mxu0 %v2128
    %2872 = vmatprep.subr.bf16.mxu0 0
    %2873 = vmatpush2.bf16.msra.mxu0 %v2117
    %2874 = vmatprep.subr.bf16.mxu0 0
    %2875 = vmatpush2.bf16.msra.mxu0 %v2106
    %2876 = vmatprep.subr.bf16.mxu0 0
    %2877 = vmatpush2.bf16.msra.mxu0 %v2095
    %2878 = vmatprep.subr.bf16.mxu0 0
    %2879 = vmatpush2.bf16.msra.mxu0 %v2084
    %2880 = vmatprep.subr.bf16.mxu0 0
    %2881 = vmatpush2.bf16.msra.mxu0 %v2073
    %2882 = vmatprep.mubr.bf16.mxu0 %v1099
    %2883 = vmatmul.mubr.bf16.gmra.mxu0 %v1098
    %v2884 = vpop.f32.mrf.mxu0
    %v2885 = vadd.f32 0.0, %v2884
    %v2886 = vpop.f32.mrf.mxu0
    %v2887 = vpop.f32.mrf.mxu0
    %v2888 = vadd.f32 0.0, %v2887
    %v2889 = vpop.f32.mrf.mxu0
    %2890 = vdwg.mxu0
    %2891 = vmatprep.subr.bf16.mxu0 0
    %2892 = vmatpush1.bf16.msra.mxu0 0
    %2893 = vmatprep.subr.bf16.mxu0 0
    %2894 = vmatpush1.bf16.msra.mxu0 0
    %2895 = vmatprep.subr.bf16.mxu0 0
    %2896 = vmatpush1.bf16.msra.mxu0 0
    %2897 = vmatprep.subr.bf16.mxu0 0
    %2898 = vmatpush1.bf16.msra.mxu0 0
    %2899 = vmatprep.subr.bf16.mxu0 0
    %2900 = vmatpush1.bf16.msra.mxu0 0
    %2901 = vmatprep.subr.bf16.mxu0 0
    %2902 = vmatpush1.bf16.msra.mxu0 %v2418
    %2903 = vmatprep.subr.bf16.mxu0 0
    %2904 = vmatpush1.bf16.msra.mxu0 %v2172
    %2905 = vmatprep.subr.bf16.mxu0 0
    %2906 = vmatpush1.bf16.msra.mxu0 %v2161
    %2907 = vmatprep.subr.bf16.mxu0 0
    %2908 = vmatpush2.bf16.msra.mxu0 0
    %2909 = vmatprep.subr.bf16.mxu0 0
    %2910 = vmatpush2.bf16.msra.mxu0 0
    %2911 = vmatprep.subr.bf16.mxu0 0
    %2912 = vmatpush2.bf16.msra.mxu0 0
    %2913 = vmatprep.subr.bf16.mxu0 0
    %2914 = vmatpush2.bf16.msra.mxu0 0
    %2915 = vmatprep.subr.bf16.mxu0 0
    %2916 = vmatpush2.bf16.msra.mxu0 0
    %2917 = vmatprep.subr.bf16.mxu0 0
    %2918 = vmatpush2.bf16.msra.mxu0 0
    %2919 = vmatprep.subr.bf16.mxu0 0
    %2920 = vmatpush2.bf16.msra.mxu0 0
    %2921 = vmatprep.subr.bf16.mxu0 0
    %2922 = vmatpush2.bf16.msra.mxu0 0
    %2923 = vmatprep.mubr.bf16.mxu0 0
    %2924 = vmatmul.mubr.bf16.gmra.mxu0 %v2384
    %v2925 = vpop.f32.mrf.mxu0
    %v2926 = vadd.f32 %v2885, %v2925
    %v2927 = vpop.f32.mrf.mxu0
    %v2928 = vpop.f32.mrf.mxu0
    %v2929 = vadd.f32 %v2888, %v2928
    %v2930 = vpop.f32.mrf.mxu0
    %2931 = vdwg.mxu0
    %v2932 = vrot.slane %v2670, 1
    %v2933 = vrot.slane %v2672, 1
    %v2934 = vrot.slane %v2756, 1
    %v2935 = vrot.slane %v2674, 1
    %v2936 = vrot.slane %v2676, 1
    %v2937 = vrot.slane %v2760, 1
    %v2938 = vlaneseq
    %v2939 = vshrl.u32 %v2938, 7
    %vm2940 = vcmp.lt.s32.totalorder %v2939, 7
    %v2941 = vsel %vm2940, %v2932, %v2935
    %v2942 = vsel %vm2940, %v2933, %v2936
    %v2943 = vsel %vm2940, %v2934, %v2937
    %v2944 = vsel %vm2940, %v2935, %v2932
    %v2945 = vsel %vm2940, %v2936, %v2933
    %v2946 = vsel %vm2940, %v2937, %v2934
    %v2947 = vadd.f32 %v2500, %v2941
    %v2948 = vadd.f32 %v2504, %v2944
    %v2949 = vadd.f32 %v2584, %v2942
    %v2950 = vadd.f32 %v2588, %v2945
    %v2951 = vadd.f32 %v2586, %v2943
    %v2952 = vadd.f32 %v2590, %v2946
    %v2953 = vrot.slane %v2758, 2
    %v2954 = vrot.slane %v2842, 2
    %v2955 = vrot.slane %v2762, 2
    %v2956 = vrot.slane %v2846, 2
    %vm2957 = vcmp.lt.s32.totalorder %v2939, 6
    %v2958 = vsel %vm2957, %v2953, %v2955
    %v2959 = vsel %vm2957, %v2954, %v2956
    %v2960 = vsel %vm2957, %v2955, %v2953
    %v2961 = vsel %vm2957, %v2956, %v2954
    %v2962 = vadd.f32 %v2949, %v2958
    %v2963 = vadd.f32 %v2950, %v2960
    %v2964 = vadd.f32 %v2951, %v2959
    %v2965 = vadd.f32 %v2952, %v2961
    %v2966 = vrot.slane %v2844, 3
    %v2967 = vrot.slane %v2848, 3
    %vm2968 = vcmp.lt.s32.totalorder %v2939, 5
    %v2969 = vsel %vm2968, %v2966, %v2967
    %v2970 = vsel %vm2968, %v2967, %v2966
    %v2971 = vadd.f32 %v2964, %v2969
    %v2972 = vadd.f32 %v2965, %v2970
    %v2973 = vrot.slane %v2926, 4
    %v2974 = vrot.slane %v2929, 4
    %vm2975 = vcmp.lt.s32.totalorder %v2939, 4
    %v2976 = vsel %vm2975, %v2973, %v2974
    %v2977 = vsel %vm2975, %v2974, %v2973
    %v2978 = vadd.f32 %v2971, %v2976
    %v2979 = vadd.f32 %v2972, %v2977
    %v2980 = vadd.s32 %v2939, 8
    %vm2981 = vcmp.lt.s32.totalorder %v2939, 0
    %v2982 = vsub.s32 0, %v2939
    %v2983 = vsel %vm2981, %v2982, %v2939
    %v2984 = vshrl.u32 %v2983, 3
    %v2985 = vand.u32 %v2983, 7
    %v2986 = vsub.s32 0, %v2985
    %v2987 = vsel %vm2981, %v2986, %v2985
    %vm2988 = vcmp.lt.s32.totalorder %v2980, 0
    %v2989 = vsub.s32 0, %v2980
    %v2990 = vsel %vm2988, %v2989, %v2980
    %v2991 = vshrl.u32 %v2990, 3
    %v2992 = vand.u32 %v2990, 7
    %v2993 = vsub.s32 0, %v2992
    %v2994 = vsel %vm2988, %v2993, %v2992
    %vm2995 = vcmp.ne.s32.totalorder %v2987, 0
    %vm2996 = vcmp.ne.s32.totalorder %v2994, 0
    %vm2997 = vcmp.lt.s32.totalorder %v2987, 0
    %vm2998 = vcmp.lt.s32.totalorder %v2994, 0
    %vm2999 = vmand %vm2997, %vm2995
    %vm3000 = vmand %vm2998, %vm2996
    %v3001 = vadd.s32 %v2987, 8
    %v3002 = vadd.s32 %v2994, 8
    %v3003 = vsel %vm2999, %v3001, %v2987
    %v3004 = vsel %vm3000, %v3002, %v2994
    %v3005 = vld [vmem:[%s4] sm:$0x1]
    %v3007 = vlaneseq
    %v3008 = vshrl.u32 %v3007, 7
    %v3009 = vsub.s32 0, %v3008
    %v3010 = vrot.slane %v3005, %v3009
    %v3012 = vadd.f32 %v2498, %v3010
    %v3013 = vadd.f32 %v2502, %v3010
    %v3014 = vmax.f32 %v3012, 0.0
    %v3015 = vmax.f32 %v3013, 0.0
    %vm3016 = vcmp.lt.s32.totalorder %v3003, 8
    %vm3017 = vcmp.lt.s32.totalorder %v3004, 8
    %v3018 = vsel %vm3016, 1, 0
    %v3019 = vsel %vm3017, 1, 0
    %vm3020 = vcmp.eq.s32.totalorder %v3018, 1
    %vm3021 = vcmp.eq.s32.totalorder %v3019, 1
    %v3022 = vsel %vm3020, %v3014, 0.0
    %v3023 = vsel %vm3021, %v3015, 0.0
    %v3024 = vrot.slane %v3022, 4
    %v3025 = vmax.f32 %v3022, %v3024
    %v3026 = vrot.slane %v3025, 2
    %v3027 = vmax.f32 %v3025, %v3026
    %v3028 = vrot.slane %v3027, 1
    %v3029 = vmax.f32 %v3027, %v3028
    %v3030 = vrot.slane %v3023, 4
    %v3031 = vmax.f32 %v3023, %v3030
    %v3032 = vrot.slane %v3031, 2
    %v3033 = vmax.f32 %v3031, %v3032
    %v3034 = vrot.slane %v3033, 1
    %v3035 = vmax.f32 %v3033, %v3034
    %v3036 = vld [vmem:[%s5] sm:$0xff]
    %v3037 = vld [vmem:[%s5 + $0x8] sm:$0xff]
    %v3038 = vld [vmem:[%s5 + $0x10] sm:$0xff]
    %v3039 = vld [vmem:[%s5 + $0x18] sm:$0xff]
    %v3040 = vld [vmem:[%s5 + $0x20] sm:$0xff]
    %v3041 = vld [vmem:[%s5 + $0x28] sm:$0xff]
    %v3042 = vld [vmem:[%s5 + $0x30] sm:$0xff]
    %v3043 = vld [vmem:[%s5 + $0x38] sm:$0xff]
    %v3044 = vld [vmem:[%s5 + $0x40] sm:$0xff]
    %v3045 = vld [vmem:[%s5 + $0x48] sm:$0xff]
    %v3046 = vld [vmem:[%s5 + $0x50] sm:$0xff]
    %v3047 = vld [vmem:[%s5 + $0x58] sm:$0xff]
    %v3048 = vld [vmem:[%s5 + $0x60] sm:$0xff]
    %v3049 = vld [vmem:[%s5 + $0x68] sm:$0xff]
    %v3050 = vld [vmem:[%s5 + $0x70] sm:$0xff]
    %v3051 = vld [vmem:[%s5 + $0x78] sm:$0xff]
    %v3052 = vld [vmem:[%s4 + $0x1] sm:$0x1]
    %v3054 = vlaneseq
    %v3055 = vshrl.u32 %v3054, 7
    %v3056 = vsub.s32 0, %v3055
    %v3057 = vrot.slane %v3052, %v3056
    %v3059 = vadd.f32 %v2947, %v3057
    %v3060 = vadd.f32 %v2948, %v3057
    %v3061 = vmax.f32 %v3059, 0.0
    %v3062 = vmax.f32 %v3060, 0.0
    %vm3063 = vcmp.lt.s32.totalorder %v3003, 7
    %vm3064 = vcmp.lt.s32.totalorder %v3004, 7
    %v3065 = vsel %vm3063, 1, 0
    %v3066 = vsel %vm3064, 1, 0
    %vm3067 = vcmp.eq.s32.totalorder %v3065, 1
    %vm3068 = vcmp.eq.s32.totalorder %v3066, 1
    %v3069 = vsel %vm3067, %v3061, 0.0
    %v3070 = vsel %vm3068, %v3062, 0.0
    %v3071 = vrot.slane %v3069, 4
    %v3072 = vmax.f32 %v3069, %v3071
    %v3073 = vrot.slane %v3072, 2
    %v3074 = vmax.f32 %v3072, %v3073
    %v3075 = vrot.slane %v3074, 1
    %v3076 = vmax.f32 %v3074, %v3075
    %v3077 = vrot.slane %v3070, 4
    %v3078 = vmax.f32 %v3070, %v3077
    %v3079 = vrot.slane %v3078, 2
    %v3080 = vmax.f32 %v3078, %v3079
    %v3081 = vrot.slane %v3080, 1
    %v3082 = vmax.f32 %v3080, %v3081
    %s3083 = scalar_lea.vmem %s5, 128
    %v3084 = vld [vmem:[%s3083] sm:$0xff]
    %v3085 = vld [vmem:[%s3083 + $0x8] sm:$0xff]
    %v3086 = vld [vmem:[%s3083 + $0x10] sm:$0xff]
    %v3087 = vld [vmem:[%s3083 + $0x18] sm:$0xff]
    %v3088 = vld [vmem:[%s3083 + $0x20] sm:$0xff]
    %v3089 = vld [vmem:[%s3083 + $0x28] sm:$0xff]
    %v3090 = vld [vmem:[%s3083 + $0x30] sm:$0xff]
    %v3091 = vld [vmem:[%s3083 + $0x38] sm:$0xff]
    %v3092 = vld [vmem:[%s3083 + $0x40] sm:$0xff]
    %v3093 = vld [vmem:[%s3083 + $0x48] sm:$0xff]
    %v3094 = vld [vmem:[%s3083 + $0x50] sm:$0xff]
    %v3095 = vld [vmem:[%s3083 + $0x58] sm:$0xff]
    %v3096 = vld [vmem:[%s3083 + $0x60] sm:$0xff]
    %v3097 = vld [vmem:[%s3083 + $0x68] sm:$0xff]
    %v3098 = vld [vmem:[%s3083 + $0x70] sm:$0xff]
    %v3099 = vld [vmem:[%s3083 + $0x78] sm:$0xff]
    %vm3102 = vcmask 1041409
    %v3103 = vsel %vm3102, %v3082, %v3076
    %3105 = vmatprep.subr.mxu0 0.0
    %3106 = vmatpush1.msra.mxu0 %v3099
    %3107 = vmatprep.subr.mxu0 0.0
    %3108 = vmatpush1.msra.mxu0 %v3098
    %3109 = vmatprep.subr.mxu0 0.0
    %3110 = vmatpush1.msra.mxu0 %v3097
    %3111 = vmatprep.subr.mxu0 0.0
    %3112 = vmatpush1.msra.mxu0 %v3096
    %3113 = vmatprep.subr.mxu0 0.0
    %3114 = vmatpush1.msra.mxu0 %v3095
    %3115 = vmatprep.subr.mxu0 0.0
    %3116 = vmatpush1.msra.mxu0 %v3094
    %3117 = vmatprep.subr.mxu0 0.0
    %3118 = vmatpush1.msra.mxu0 %v3093
    %3119 = vmatprep.subr.mxu0 0.0
    %3120 = vmatpush1.msra.mxu0 %v3092
    %3121 = vmatprep.subr.mxu0 0.0
    %3122 = vmatpush1.msra.mxu0 %v3091
    %3123 = vmatprep.subr.mxu0 0.0
    %3124 = vmatpush1.msra.mxu0 %v3090
    %3125 = vmatprep.subr.mxu0 0.0
    %3126 = vmatpush1.msra.mxu0 %v3089
    %3127 = vmatprep.subr.mxu0 0.0
    %3128 = vmatpush1.msra.mxu0 %v3088
    %3129 = vmatprep.subr.mxu0 0.0
    %3130 = vmatpush1.msra.mxu0 %v3087
    %3131 = vmatprep.subr.mxu0 0.0
    %3132 = vmatpush1.msra.mxu0 %v3086
    %3133 = vmatprep.subr.mxu0 0.0
    %3134 = vmatpush1.msra.mxu0 %v3085
    %3135 = vmatprep.subr.mxu0 0.0
    %3136 = vmatpush1.msra.mxu0 %v3084
    %3137 = vmatprep.subr.mxu0 0.0
    %3138 = vmatpush2.msra.mxu0 0.0
    %3139 = vmatprep.subr.mxu0 0.0
    %3140 = vmatpush2.msra.mxu0 0.0
    %3141 = vmatprep.subr.mxu0 0.0
    %3142 = vmatpush2.msra.mxu0 0.0
    %3143 = vmatprep.subr.mxu0 0.0
    %3144 = vmatpush2.msra.mxu0 0.0
    %3145 = vmatprep.subr.mxu0 0.0
    %3146 = vmatpush2.msra.mxu0 0.0
    %3147 = vmatprep.subr.mxu0 0.0
    %3148 = vmatpush2.msra.mxu0 0.0
    %3149 = vmatprep.subr.mxu0 0.0
    %3150 = vmatpush2.msra.mxu0 0.0
    %3151 = vmatprep.subr.mxu0 0.0
    %3152 = vmatpush2.msra.mxu0 0.0
    %3153 = vmatprep.subr.mxu0 0.0
    %3154 = vmatpush2.msra.mxu0 0.0
    %3155 = vmatprep.subr.mxu0 0.0
    %3156 = vmatpush2.msra.mxu0 0.0
    %3157 = vmatprep.subr.mxu0 0.0
    %3158 = vmatpush2.msra.mxu0 0.0
    %3159 = vmatprep.subr.mxu0 0.0
    %3160 = vmatpush2.msra.mxu0 0.0
    %3161 = vmatprep.subr.mxu0 0.0
    %3162 = vmatpush2.msra.mxu0 0.0
    %3163 = vmatprep.subr.mxu0 0.0
    %3164 = vmatpush2.msra.mxu0 0.0
    %3165 = vmatprep.subr.mxu0 0.0
    %3166 = vmatpush2.msra.mxu0 0.0
    %3167 = vmatprep.subr.mxu0 0.0
    %3168 = vmatpush2.msra.mxu0 0.0
    %3169 = vmatprep.mubr.f32.mxu0 0.0
    %3170 = vmatmul.mubr.f32.gmra.mxu0 %v3103
    %v3171 = vpop.f32.mrf.mxu0
    %v3172 = vadd.f32 0.0, %v3171
    %v3173 = vpop.f32.mrf.mxu0
    %3174 = vdwg.mxu0
    %v3177 = vsel %vm3102, %v3035, %v3029
    %3179 = vmatprep.subr.mxu0 0.0
    %3180 = vmatpush1.msra.mxu0 %v3051
    %3181 = vmatprep.subr.mxu0 0.0
    %3182 = vmatpush1.msra.mxu0 %v3050
    %3183 = vmatprep.subr.mxu0 0.0
    %3184 = vmatpush1.msra.mxu0 %v3049
    %3185 = vmatprep.subr.mxu0 0.0
    %3186 = vmatpush1.msra.mxu0 %v3048
    %3187 = vmatprep.subr.mxu0 0.0
    %3188 = vmatpush1.msra.mxu0 %v3047
    %3189 = vmatprep.subr.mxu0 0.0
    %3190 = vmatpush1.msra.mxu0 %v3046
    %3191 = vmatprep.subr.mxu0 0.0
    %3192 = vmatpush1.msra.mxu0 %v3045
    %3193 = vmatprep.subr.mxu0 0.0
    %3194 = vmatpush1.msra.mxu0 %v3044
    %3195 = vmatprep.subr.mxu0 0.0
    %3196 = vmatpush1.msra.mxu0 %v3043
    %3197 = vmatprep.subr.mxu0 0.0
    %3198 = vmatpush1.msra.mxu0 %v3042
    %3199 = vmatprep.subr.mxu0 0.0
    %3200 = vmatpush1.msra.mxu0 %v3041
    %3201 = vmatprep.subr.mxu0 0.0
    %3202 = vmatpush1.msra.mxu0 %v3040
    %3203 = vmatprep.subr.mxu0 0.0
    %3204 = vmatpush1.msra.mxu0 %v3039
    %3205 = vmatprep.subr.mxu0 0.0
    %3206 = vmatpush1.msra.mxu0 %v3038
    %3207 = vmatprep.subr.mxu0 0.0
    %3208 = vmatpush1.msra.mxu0 %v3037
    %3209 = vmatprep.subr.mxu0 0.0
    %3210 = vmatpush1.msra.mxu0 %v3036
    %3211 = vmatprep.subr.mxu0 0.0
    %3212 = vmatpush2.msra.mxu0 0.0
    %3213 = vmatprep.subr.mxu0 0.0
    %3214 = vmatpush2.msra.mxu0 0.0
    %3215 = vmatprep.subr.mxu0 0.0
    %3216 = vmatpush2.msra.mxu0 0.0
    %3217 = vmatprep.subr.mxu0 0.0
    %3218 = vmatpush2.msra.mxu0 0.0
    %3219 = vmatprep.subr.mxu0 0.0
    %3220 = vmatpush2.msra.mxu0 0.0
    %3221 = vmatprep.subr.mxu0 0.0
    %3222 = vmatpush2.msra.mxu0 0.0
    %3223 = vmatprep.subr.mxu0 0.0
    %3224 = vmatpush2.msra.mxu0 0.0
    %3225 = vmatprep.subr.mxu0 0.0
    %3226 = vmatpush2.msra.mxu0 0.0
    %3227 = vmatprep.subr.mxu0 0.0
    %3228 = vmatpush2.msra.mxu0 0.0
    %3229 = vmatprep.subr.mxu0 0.0
    %3230 = vmatpush2.msra.mxu0 0.0
    %3231 = vmatprep.subr.mxu0 0.0
    %3232 = vmatpush2.msra.mxu0 0.0
    %3233 = vmatprep.subr.mxu0 0.0
    %3234 = vmatpush2.msra.mxu0 0.0
    %3235 = vmatprep.subr.mxu0 0.0
    %3236 = vmatpush2.msra.mxu0 0.0
    %3237 = vmatprep.subr.mxu0 0.0
    %3238 = vmatpush2.msra.mxu0 0.0
    %3239 = vmatprep.subr.mxu0 0.0
    %3240 = vmatpush2.msra.mxu0 0.0
    %3241 = vmatprep.subr.mxu0 0.0
    %3242 = vmatpush2.msra.mxu0 0.0
    %3243 = vmatprep.mubr.f32.mxu0 0.0
    %3244 = vmatmul.mubr.f32.gmra.mxu0 %v3177
    %v3245 = vpop.f32.mrf.mxu0
    %v3246 = vadd.f32 %v3172, %v3245
    %v3247 = vpop.f32.mrf.mxu0
    %3248 = vdwg.mxu0
    %v3249 = vld [vmem:[%s4 + $0x2] sm:$0x1]
    %v3251 = vlaneseq
    %v3252 = vshrl.u32 %v3251, 7
    %v3253 = vsub.s32 0, %v3252
    %v3254 = vrot.slane %v3249, %v3253
    %v3256 = vadd.f32 %v2962, %v3254
    %v3257 = vadd.f32 %v2963, %v3254
    %v3258 = vmax.f32 %v3256, 0.0
    %v3259 = vmax.f32 %v3257, 0.0
    %vm3260 = vcmp.lt.s32.totalorder %v3003, 6
    %vm3261 = vcmp.lt.s32.totalorder %v3004, 6
    %v3262 = vsel %vm3260, 1, 0
    %v3263 = vsel %vm3261, 1, 0
    %vm3264 = vcmp.eq.s32.totalorder %v3262, 1
    %vm3265 = vcmp.eq.s32.totalorder %v3263, 1
    %v3266 = vsel %vm3264, %v3258, 0.0
    %v3267 = vsel %vm3265, %v3259, 0.0
    %v3268 = vrot.slane %v3266, 4
    %v3269 = vmax.f32 %v3266, %v3268
    %v3270 = vrot.slane %v3269, 2
    %v3271 = vmax.f32 %v3269, %v3270
    %v3272 = vrot.slane %v3271, 1
    %v3273 = vmax.f32 %v3271, %v3272
    %v3274 = vrot.slane %v3267, 4
    %v3275 = vmax.f32 %v3267, %v3274
    %v3276 = vrot.slane %v3275, 2
    %v3277 = vmax.f32 %v3275, %v3276
    %v3278 = vrot.slane %v3277, 1
    %v3279 = vmax.f32 %v3277, %v3278
    %s3280 = scalar_lea.vmem %s5, 256
    %v3281 = vld [vmem:[%s3280] sm:$0xff]
    %v3282 = vld [vmem:[%s3280 + $0x8] sm:$0xff]
    %v3283 = vld [vmem:[%s3280 + $0x10] sm:$0xff]
    %v3284 = vld [vmem:[%s3280 + $0x18] sm:$0xff]
    %v3285 = vld [vmem:[%s3280 + $0x20] sm:$0xff]
    %v3286 = vld [vmem:[%s3280 + $0x28] sm:$0xff]
    %v3287 = vld [vmem:[%s3280 + $0x30] sm:$0xff]
    %v3288 = vld [vmem:[%s3280 + $0x38] sm:$0xff]
    %v3289 = vld [vmem:[%s3280 + $0x40] sm:$0xff]
    %v3290 = vld [vmem:[%s3280 + $0x48] sm:$0xff]
    %v3291 = vld [vmem:[%s3280 + $0x50] sm:$0xff]
    %v3292 = vld [vmem:[%s3280 + $0x58] sm:$0xff]
    %v3293 = vld [vmem:[%s3280 + $0x60] sm:$0xff]
    %v3294 = vld [vmem:[%s3280 + $0x68] sm:$0xff]
    %v3295 = vld [vmem:[%s3280 + $0x70] sm:$0xff]
    %v3296 = vld [vmem:[%s3280 + $0x78] sm:$0xff]
    %v3299 = vsel %vm3102, %v3279, %v3273
    %3301 = vmatprep.subr.mxu0 0.0
    %3302 = vmatpush1.msra.mxu0 %v3296
    %3303 = vmatprep.subr.mxu0 0.0
    %3304 = vmatpush1.msra.mxu0 %v3295
    %3305 = vmatprep.subr.mxu0 0.0
    %3306 = vmatpush1.msra.mxu0 %v3294
    %3307 = vmatprep.subr.mxu0 0.0
    %3308 = vmatpush1.msra.mxu0 %v3293
    %3309 = vmatprep.subr.mxu0 0.0
    %3310 = vmatpush1.msra.mxu0 %v3292
    %3311 = vmatprep.subr.mxu0 0.0
    %3312 = vmatpush1.msra.mxu0 %v3291
    %3313 = vmatprep.subr.mxu0 0.0
    %3314 = vmatpush1.msra.mxu0 %v3290
    %3315 = vmatprep.subr.mxu0 0.0
    %3316 = vmatpush1.msra.mxu0 %v3289
    %3317 = vmatprep.subr.mxu0 0.0
    %3318 = vmatpush1.msra.mxu0 %v3288
    %3319 = vmatprep.subr.mxu0 0.0
    %3320 = vmatpush1.msra.mxu0 %v3287
    %3321 = vmatprep.subr.mxu0 0.0
    %3322 = vmatpush1.msra.mxu0 %v3286
    %3323 = vmatprep.subr.mxu0 0.0
    %3324 = vmatpush1.msra.mxu0 %v3285
    %3325 = vmatprep.subr.mxu0 0.0
    %3326 = vmatpush1.msra.mxu0 %v3284
    %3327 = vmatprep.subr.mxu0 0.0
    %3328 = vmatpush1.msra.mxu0 %v3283
    %3329 = vmatprep.subr.mxu0 0.0
    %3330 = vmatpush1.msra.mxu0 %v3282
    %3331 = vmatprep.subr.mxu0 0.0
    %3332 = vmatpush1.msra.mxu0 %v3281
    %3333 = vmatprep.subr.mxu0 0.0
    %3334 = vmatpush2.msra.mxu0 0.0
    %3335 = vmatprep.subr.mxu0 0.0
    %3336 = vmatpush2.msra.mxu0 0.0
    %3337 = vmatprep.subr.mxu0 0.0
    %3338 = vmatpush2.msra.mxu0 0.0
    %3339 = vmatprep.subr.mxu0 0.0
    %3340 = vmatpush2.msra.mxu0 0.0
    %3341 = vmatprep.subr.mxu0 0.0
    %3342 = vmatpush2.msra.mxu0 0.0
    %3343 = vmatprep.subr.mxu0 0.0
    %3344 = vmatpush2.msra.mxu0 0.0
    %3345 = vmatprep.subr.mxu0 0.0
    %3346 = vmatpush2.msra.mxu0 0.0
    %3347 = vmatprep.subr.mxu0 0.0
    %3348 = vmatpush2.msra.mxu0 0.0
    %3349 = vmatprep.subr.mxu0 0.0
    %3350 = vmatpush2.msra.mxu0 0.0
    %3351 = vmatprep.subr.mxu0 0.0
    %3352 = vmatpush2.msra.mxu0 0.0
    %3353 = vmatprep.subr.mxu0 0.0
    %3354 = vmatpush2.msra.mxu0 0.0
    %3355 = vmatprep.subr.mxu0 0.0
    %3356 = vmatpush2.msra.mxu0 0.0
    %3357 = vmatprep.subr.mxu0 0.0
    %3358 = vmatpush2.msra.mxu0 0.0
    %3359 = vmatprep.subr.mxu0 0.0
    %3360 = vmatpush2.msra.mxu0 0.0
    %3361 = vmatprep.subr.mxu0 0.0
    %3362 = vmatpush2.msra.mxu0 0.0
    %3363 = vmatprep.subr.mxu0 0.0
    %3364 = vmatpush2.msra.mxu0 0.0
    %3365 = vmatprep.mubr.f32.mxu0 0.0
    %3366 = vmatmul.mubr.f32.gmra.mxu0 %v3299
    %v3367 = vpop.f32.mrf.mxu0
    %v3368 = vadd.f32 0.0, %v3367
    %v3369 = vpop.f32.mrf.mxu0
    %3370 = vdwg.mxu0
    %v3371 = vadd.f32 %v3246, %v3368
    %v3372 = vld [vmem:[%s4 + $0x3] sm:$0x1]
    %v3374 = vlaneseq
    %v3375 = vshrl.u32 %v3374, 7
    %v3376 = vsub.s32 0, %v3375
    %v3377 = vrot.slane %v3372, %v3376
    %v3379 = vadd.f32 %v2978, %v3377
    %v3380 = vadd.f32 %v2979, %v3377
    %v3381 = vmax.f32 %v3379, 0.0
    %v3382 = vmax.f32 %v3380, 0.0
    %vm3383 = vcmp.lt.s32.totalorder %v3003, 4
    %vm3384 = vcmp.lt.s32.totalorder %v3004, 4
    %v3385 = vsel %vm3383, 1, 0
    %v3386 = vsel %vm3384, 1, 0
    %vm3387 = vcmp.eq.s32.totalorder %v3385, 1
    %vm3388 = vcmp.eq.s32.totalorder %v3386, 1
    %v3389 = vsel %vm3387, %v3381, 0.0
    %v3390 = vsel %vm3388, %v3382, 0.0
    %v3391 = vrot.slane %v3389, 4
    %v3392 = vmax.f32 %v3389, %v3391
    %v3393 = vrot.slane %v3392, 2
    %v3394 = vmax.f32 %v3392, %v3393
    %v3395 = vrot.slane %v3394, 1
    %v3396 = vmax.f32 %v3394, %v3395
    %v3397 = vrot.slane %v3390, 4
    %v3398 = vmax.f32 %v3390, %v3397
    %v3399 = vrot.slane %v3398, 2
    %v3400 = vmax.f32 %v3398, %v3399
    %v3401 = vrot.slane %v3400, 1
    %v3402 = vmax.f32 %v3400, %v3401
    %s3403 = scalar_lea.vmem %s5, 384
    %v3404 = vld [vmem:[%s3403] sm:$0xff]
    %v3405 = vld [vmem:[%s3403 + $0x8] sm:$0xff]
    %v3406 = vld [vmem:[%s3403 + $0x10] sm:$0xff]
    %v3407 = vld [vmem:[%s3403 + $0x18] sm:$0xff]
    %v3408 = vld [vmem:[%s3403 + $0x20] sm:$0xff]
    %v3409 = vld [vmem:[%s3403 + $0x28] sm:$0xff]
    %v3410 = vld [vmem:[%s3403 + $0x30] sm:$0xff]
    %v3411 = vld [vmem:[%s3403 + $0x38] sm:$0xff]
    %v3412 = vld [vmem:[%s3403 + $0x40] sm:$0xff]
    %v3413 = vld [vmem:[%s3403 + $0x48] sm:$0xff]
    %v3414 = vld [vmem:[%s3403 + $0x50] sm:$0xff]
    %v3415 = vld [vmem:[%s3403 + $0x58] sm:$0xff]
    %v3416 = vld [vmem:[%s3403 + $0x60] sm:$0xff]
    %v3417 = vld [vmem:[%s3403 + $0x68] sm:$0xff]
    %v3418 = vld [vmem:[%s3403 + $0x70] sm:$0xff]
    %v3419 = vld [vmem:[%s3403 + $0x78] sm:$0xff]
    %v3422 = vsel %vm3102, %v3402, %v3396
    %3424 = vmatprep.subr.mxu0 0.0
    %3425 = vmatpush1.msra.mxu0 %v3419
    %3426 = vmatprep.subr.mxu0 0.0
    %3427 = vmatpush1.msra.mxu0 %v3418
    %3428 = vmatprep.subr.mxu0 0.0
    %3429 = vmatpush1.msra.mxu0 %v3417
    %3430 = vmatprep.subr.mxu0 0.0
    %3431 = vmatpush1.msra.mxu0 %v3416
    %3432 = vmatprep.subr.mxu0 0.0
    %3433 = vmatpush1.msra.mxu0 %v3415
    %3434 = vmatprep.subr.mxu0 0.0
    %3435 = vmatpush1.msra.mxu0 %v3414
    %3436 = vmatprep.subr.mxu0 0.0
    %3437 = vmatpush1.msra.mxu0 %v3413
    %3438 = vmatprep.subr.mxu0 0.0
    %3439 = vmatpush1.msra.mxu0 %v3412
    %3440 = vmatprep.subr.mxu0 0.0
    %3441 = vmatpush1.msra.mxu0 %v3411
    %3442 = vmatprep.subr.mxu0 0.0
    %3443 = vmatpush1.msra.mxu0 %v3410
    %3444 = vmatprep.subr.mxu0 0.0
    %3445 = vmatpush1.msra.mxu0 %v3409
    %3446 = vmatprep.subr.mxu0 0.0
    %3447 = vmatpush1.msra.mxu0 %v3408
    %3448 = vmatprep.subr.mxu0 0.0
    %3449 = vmatpush1.msra.mxu0 %v3407
    %3450 = vmatprep.subr.mxu0 0.0
    %3451 = vmatpush1.msra.mxu0 %v3406
    %3452 = vmatprep.subr.mxu0 0.0
    %3453 = vmatpush1.msra.mxu0 %v3405
    %3454 = vmatprep.subr.mxu0 0.0
    %3455 = vmatpush1.msra.mxu0 %v3404
    %3456 = vmatprep.subr.mxu0 0.0
    %3457 = vmatpush2.msra.mxu0 0.0
    %3458 = vmatprep.subr.mxu0 0.0
    %3459 = vmatpush2.msra.mxu0 0.0
    %3460 = vmatprep.subr.mxu0 0.0
    %3461 = vmatpush2.msra.mxu0 0.0
    %3462 = vmatprep.subr.mxu0 0.0
    %3463 = vmatpush2.msra.mxu0 0.0
    %3464 = vmatprep.subr.mxu0 0.0
    %3465 = vmatpush2.msra.mxu0 0.0
    %3466 = vmatprep.subr.mxu0 0.0
    %3467 = vmatpush2.msra.mxu0 0.0
    %3468 = vmatprep.subr.mxu0 0.0
    %3469 = vmatpush2.msra.mxu0 0.0
    %3470 = vmatprep.subr.mxu0 0.0
    %3471 = vmatpush2.msra.mxu0 0.0
    %3472 = vmatprep.subr.mxu0 0.0
    %3473 = vmatpush2.msra.mxu0 0.0
    %3474 = vmatprep.subr.mxu0 0.0
    %3475 = vmatpush2.msra.mxu0 0.0
    %3476 = vmatprep.subr.mxu0 0.0
    %3477 = vmatpush2.msra.mxu0 0.0
    %3478 = vmatprep.subr.mxu0 0.0
    %3479 = vmatpush2.msra.mxu0 0.0
    %3480 = vmatprep.subr.mxu0 0.0
    %3481 = vmatpush2.msra.mxu0 0.0
    %3482 = vmatprep.subr.mxu0 0.0
    %3483 = vmatpush2.msra.mxu0 0.0
    %3484 = vmatprep.subr.mxu0 0.0
    %3485 = vmatpush2.msra.mxu0 0.0
    %3486 = vmatprep.subr.mxu0 0.0
    %3487 = vmatpush2.msra.mxu0 0.0
    %3488 = vmatprep.mubr.f32.mxu0 0.0
    %3489 = vmatmul.mubr.f32.gmra.mxu0 %v3422
    %v3490 = vpop.f32.mrf.mxu0
    %v3491 = vadd.f32 0.0, %v3490
    %v3492 = vpop.f32.mrf.mxu0
    %3493 = vdwg.mxu0
    %v3494 = vadd.f32 %v3371, %v3491
    %v3495 = vld [vmem:[%s6] sm:$0x1]
    %v3497 = vlaneseq
    %v3498 = vshrl.u32 %v3497, 7
    %v3499 = vsub.s32 0, %v3498
    %v3500 = vrot.slane %v3495, %v3499
    %v3502 = vadd.f32 %v3494, %v3500
    %v3503 = vxor.u32 %v3502, 2147483648
    %v3504 = vmul.f32 %v3503, 1.442695
    %v3505 = vpow.pop %v3504
    %v3506 = vadd.f32 %v3505, 1.0
    %v3507 = vrcp.pop %v3506
    %v3508 = vmul.f32 1.0, %v3507
    %vm3509 = vcmask 41984
    %3510 = vst.msk [vmem:[#allocation2] sm:$0x3] %vm3509, %v3508
    // Predicated region
    $region30: #{tpu_custom_call.1} parent=1 // pred_check
      _
    $region31: #{tpu_custom_call.1} parent=1 // pred_check_branch
      %3512 = sbr.rel (0) target = $region33
    $region32: #{tpu_custom_call.1} parent=1 // pred_region
      %s3514 = ssub.s32 32, 32
      %3515 = vsyncadd [#allocation3], %s3514
      %s3517 = sshll.u32 [#allocation2], 4
      %s3518 = int_to_ptr.vmem [resolvable:$true] %s3517
      %3520 = dma.vmem_to_hbm [thread:$0]  %s3518, 32, %s7, [#allocation3]
    $region33: #{tpu_custom_call.1} parent=1 // pred_fallthru
      _
    // Predicated region
    $region34: #{tpu_custom_call.1} parent=1 // pred_check
      _
    $region35: #{tpu_custom_call.1} parent=1 // pred_check_branch
      %3522 = sbr.rel (0) target = $region37
    $region36: #{tpu_custom_call.1} parent=1 // pred_region
      %3523 = dma.done [#allocation3], 32
    $region37: #{tpu_custom_call.1} parent=1 // pred_fallthru
      _
    %3524 = vsyncpa [#allocation3], 1

</llo_original>
